<compile_context>
chip_gen: v6e
topology: v6e:2x2x1
jax: 0.10.0
libtpu: 0.0.40
codegen_flags: <defaults>
</compile_context>

<pallas_src>
import jax
import jax.numpy as jnp
from jax.experimental import pallas as pl
from jax.experimental.pallas import tpu as pltpu

EPS = 1e-5                       # nn.BatchNorm2d default eps
LANE = 128                       # TPU lane width: keep channel dims dense multiples
VMEM_LIMIT = 32 * 1024 * 1024    # explicit scoped-VMEM budget (safe on v5e/v6e/v7x)


def _round_up(n, m):
    return (n + m - 1) // m * m


def _largest_divisor_at_most(n, cap, mult=1):
    """Largest d <= cap with n % d == 0 and (d % mult == 0 or d == n)."""
    cap = max(1, min(n, cap))
    for d in range(cap, 0, -1):
        if n % d == 0 and (d % mult == 0 or d == n):
            return d
    return n


def _conv3x3_stats_kernel(xt_ref, w_ref, y_ref, s_ref, ss_ref):
    """One (batch, row-tile) block: 3x3 conv as 9 MXU matmuls + channel stats.

    xt_ref: (1, 1, th+2, W+2, Cin_p)  bf16   halo'd input row block
    w_ref : (9, Cin_p, Cout_p)        bf16   resident weights, index kh*3 + kw
    y_ref : (1, th, W, Cout_p)        f32    pre-BN conv output
    s_ref : (1, 1, 1, Cout_p)         f32    per-tile channel sum
    ss_ref: (1, 1, 1, Cout_p)         f32    per-tile channel sum of squares
    """
    th = xt_ref.shape[2] - 2
    w_out = xt_ref.shape[3] - 2
    cin_p = xt_ref.shape[4]
    cout_p = w_ref.shape[2]

    x = xt_ref[0, 0]                                     # (th+2, W+2, Cin_p) bf16
    acc = jnp.zeros((th * w_out, cout_p), jnp.float32)
    for kh in range(3):
        xh = x[kh:kh + th]                               # (th, W+2, Cin_p)
        for kw in range(3):
            xs = xh[:, kw:kw + w_out, :].reshape(th * w_out, cin_p)
            acc = acc + jnp.dot(xs, w_ref[kh * 3 + kw],
                                preferred_element_type=jnp.float32)

    y_ref[0] = acc.reshape(th, w_out, cout_p)
    s_ref[0, 0] = jnp.sum(acc, axis=0, keepdims=True)
    ss_ref[0, 0] = jnp.sum(acc * acc, axis=0, keepdims=True)


def _bn_relu_kernel(y_ref, sc_ref, sh_ref, o_ref):
    """Lane-dense normalize (folded BN affine) + ReLU: one FMA + max per element."""
    o_ref[...] = jnp.maximum(
        y_ref[...] * sc_ref[...] + sh_ref[...], 0.0).astype(o_ref.dtype)


def _conv_bn_relu_layer(a, w, gamma, beta, out_dtype):
    """a: (B, H, W, Cin_p) bf16 NHWC, channels already zero-padded to LANE.
    w: (Cout, Cin, 3, 3) f32 (PyTorch layout). Returns (B, H, W, Cout_p)."""
    B, H, W, cin_p = a.shape
    Cout, Cin = int(w.shape[0]), int(w.shape[1])
    cout_p = _round_up(Cout, LANE)

    # Weights: (Cout, Cin, 3, 3) -> zero-pad channels -> (kh*3+kw, Cin_p, Cout_p) bf16
    wp = jnp.pad(w, ((0, cout_p - Cout), (0, cin_p - Cin), (0, 0), (0, 0)))
    wk = jnp.transpose(wp, (2, 3, 1, 0)).reshape(9, cin_p, cout_p).astype(jnp.bfloat16)

    # Row tiling with a 1-row halo (pure BlockSpec pipelining, no 9x im2col slab).
    th = _largest_divisor_at_most(H, max(1, 2048 // max(W, 1)))
    n_h = H // th
    xp = jnp.pad(a, ((0, 0), (1, 1), (1, 1), (0, 0)))          # spatial zero pad
    x_tiles = jnp.stack(
        [xp[:, i * th: i * th + th + 2] for i in range(n_h)], axis=1)
    # x_tiles: (B, n_h, th+2, W+2, Cin_p) bf16

    y, psum, psumsq = pl.pallas_call(
        _conv3x3_stats_kernel,
        out_shape=(
            jax.ShapeDtypeStruct((B, H, W, cout_p), jnp.float32),
            jax.ShapeDtypeStruct((B, n_h, 1, cout_p), jnp.float32),
            jax.ShapeDtypeStruct((B, n_h, 1, cout_p), jnp.float32),
        ),
        grid=(B, n_h),
        in_specs=[
            pl.BlockSpec((1, 1, th + 2, W + 2, cin_p),
                         lambda b, i: (b, i, 0, 0, 0)),
            pl.BlockSpec((9, cin_p, cout_p), lambda b, i: (0, 0, 0)),
        ],
        out_specs=[
            pl.BlockSpec((1, th, W, cout_p), lambda b, i: (b, i, 0, 0)),
            pl.BlockSpec((1, 1, 1, cout_p), lambda b, i: (b, i, 0, 0)),
            pl.BlockSpec((1, 1, 1, cout_p), lambda b, i: (b, i, 0, 0)),
        ],
        compiler_params=pltpu.CompilerParams(
            dimension_semantics=("parallel", "parallel"),
            vmem_limit_bytes=VMEM_LIMIT),
    )(x_tiles, wk)

    # Training-mode BatchNorm: global (N,H,W) stats from per-tile partials, folded
    # into a single per-channel scale/shift.  (Conv bias is dropped: it cancels.)
    cnt = float(B * H * W)
    mean = jnp.sum(psum, axis=(0, 1, 2)) / cnt
    var = jnp.maximum(jnp.sum(psumsq, axis=(0, 1, 2)) / cnt - mean * mean, 0.0)
    g_p = jnp.pad(gamma, (0, cout_p - Cout)).astype(jnp.float32)
    b_p = jnp.pad(beta, (0, cout_p - Cout)).astype(jnp.float32)
    scale = g_p * jax.lax.rsqrt(var + EPS)
    shift = b_p - mean * scale

    # Phase 2: tiled, lane-dense normalize + ReLU over (B*H*W, Cout_p).
    m_rows = B * H * W
    tm = _largest_divisor_at_most(m_rows, 1024, mult=8)
    out = pl.pallas_call(
        _bn_relu_kernel,
        out_shape=jax.ShapeDtypeStruct((m_rows, cout_p), out_dtype),
        grid=(m_rows // tm,),
        in_specs=[
            pl.BlockSpec((tm, cout_p), lambda i: (i, 0)),
            pl.BlockSpec((1, cout_p), lambda i: (0, 0)),
            pl.BlockSpec((1, cout_p), lambda i: (0, 0)),
        ],
        out_specs=pl.BlockSpec((tm, cout_p), lambda i: (i, 0)),
        compiler_params=pltpu.CompilerParams(
            dimension_semantics=("parallel",),
            vmem_limit_bytes=VMEM_LIMIT),
    )(y.reshape(m_rows, cout_p), scale.reshape(1, cout_p),
      shift.reshape(1, cout_p))
    return out.reshape(B, H, W, cout_p)


def double_conv(x_nchw, w1, b1, g1, bt1, w2, b2, g2, bt2):
    """Forward pass of DoubleConv.  x_nchw: (B, Cin, H, W) -> (B, Cout, H, W).

    b1/b2 (conv biases) are accepted for interface parity but unused: a bias
    added before training-mode BatchNorm is cancelled by the mean subtraction.
    """
    del b1, b2
    B, Cin, H, W = x_nchw.shape
    Cout = int(w1.shape[0])
    cin_p = _round_up(Cin, LANE)

    # TODO(synk): accept NHWC at the module boundary and fuse layer-1's
    # normalize+ReLU into layer-2's conv kernel (masked halo) to drop the
    # remaining full-tensor layout/intermediate passes over HBM.
    x = jnp.transpose(x_nchw, (0, 2, 3, 1))                       # NCHW -> NHWC
    x = jnp.pad(x, ((0, 0), (0, 0), (0, 0), (0, cin_p - Cin))).astype(jnp.bfloat16)

    h = _conv_bn_relu_layer(x, w1, g1, bt1, out_dtype=jnp.bfloat16)
    h = _conv_bn_relu_layer(h, w2, g2, bt2, out_dtype=jnp.float32)
    out = h[..., :Cout]
    return jnp.transpose(out, (0, 3, 1, 2))                       # NHWC -> NCHW


def reference(x, w1, b1, g1, bt1, w2, b2, g2, bt2):
    """Pure-JAX reference matching PyTorch semantics (training-mode BN, with bias)."""
    def conv(h, w, b):
        y = jax.lax.conv_general_dilated(
            h, w, window_strides=(1, 1), padding=((1, 1), (1, 1)),
            dimension_numbers=("NCHW", "OIHW", "NCHW"),
            precision=jax.lax.Precision.HIGHEST)
        return y + b[None, :, None, None]

    def bn(h, g, bt):
        mean = jnp.mean(h, axis=(0, 2, 3), keepdims=True)
        var = jnp.mean(jnp.square(h - mean), axis=(0, 2, 3), keepdims=True)
        return ((h - mean) * jax.lax.rsqrt(var + EPS)
                * g[None, :, None, None] + bt[None, :, None, None])

    h = jax.nn.relu(bn(conv(x, w1, b1), g1, bt1))
    return jax.nn.relu(bn(conv(h, w2, b2), g2, bt2))


if __name__ == "__main__":
    B, Cin, Cout, H, W = 2, 4, 8, 16, 16

    key = jax.random.PRNGKey(0)
    ks = jax.random.split(key, 9)
    x = jax.random.normal(ks[0], (B, Cin, H, W), jnp.float32)
    w1 = 0.1 * jax.random.normal(ks[1], (Cout, Cin, 3, 3), jnp.float32)
    b1 = 0.1 * jax.random.normal(ks[2], (Cout,), jnp.float32)
    g1 = 1.0 + 0.1 * jax.random.normal(ks[3], (Cout,), jnp.float32)
    bt1 = 0.1 * jax.random.normal(ks[4], (Cout,), jnp.float32)
    w2 = 0.1 * jax.random.normal(ks[5], (Cout, Cout, 3, 3), jnp.float32)
    b2 = 0.1 * jax.random.normal(ks[6], (Cout,), jnp.float32)
    g2 = 1.0 + 0.1 * jax.random.normal(ks[7], (Cout,), jnp.float32)
    bt2 = 0.1 * jax.random.normal(ks[8], (Cout,), jnp.float32)

    out = jax.jit(double_conv)(x, w1, b1, g1, bt1, w2, b2, g2, bt2)
    out = jax.block_until_ready(out)

    ref = reference(x, w1, b1, g1, bt1, w2, b2, g2, bt2)
    assert out.shape == (B, Cout, H, W), out.shape
    assert bool(jnp.all(jnp.isfinite(out)))
    # bf16 MXU operands -> loose tolerance.
    err = float(jnp.max(jnp.abs(out - ref)))
    assert bool(jnp.allclose(out, ref, atol=3e-2, rtol=3e-2)), err

    print("KERNEL_OK")
</pallas_src>

<mosaic_0001>
module attributes {stable_mosaic.version = 11 : i64} {
  func.func @_conv3x3_stats_kernel(%arg0: i32, %arg1: i32, %arg2: memref<1x1x18x18x128xbf16, #tpu.memory_space<vmem>>, %arg3: memref<9x128x128xbf16, #tpu.memory_space<vmem>>, %arg4: memref<1x16x16x128xf32, #tpu.memory_space<vmem>>, %arg5: memref<1x1x1x128xf32, #tpu.memory_space<vmem>>, %arg6: memref<1x1x1x128xf32, #tpu.memory_space<vmem>>) attributes {dimension_semantics = [#tpu.dimension_semantics<parallel>, #tpu.dimension_semantics<parallel>], iteration_bounds = array<i64: 2, 1>, scalar_prefetch = 0 : i64, scratch_operands = 0 : i64, tpu.core_type = #tpu.core_type<tc>, window_params = [{transform_indices = @transform_0, window_bounds = array<i64: 1, 1, 18, 18, 128>}, {pipeline_mode = #tpu.pipeline_mode<synchronous>, transform_indices = @transform_1, window_bounds = array<i64: 9, 128, 128>}, {transform_indices = @transform_2, window_bounds = array<i64: 1, 16, 16, 128>}, {transform_indices = @transform_3, window_bounds = array<i64: 1, 1, 1, 128>}, {transform_indices = @transform_4, window_bounds = array<i64: 1, 1, 1, 128>}]} {
    %c0 = arith.constant 0 : index
    %c0_0 = arith.constant 0 : index
    %c0_1 = arith.constant 0 : index
    %c0_2 = arith.constant 0 : index
    %c0_3 = arith.constant 0 : index
    %0 = vector.load %arg2[%c0, %c0_0, %c0_1, %c0_2, %c0_3] : memref<1x1x18x18x128xbf16, #tpu.memory_space<vmem>>, vector<1x1x18x18x128xbf16>
    %1 = vector.shape_cast %0 : vector<1x1x18x18x128xbf16> to vector<18x18x128xbf16>
    %cst = arith.constant 0.000000e+00 : f32
    %2 = vector.broadcast %cst : f32 to vector<256x128xf32>
    %3 = vector.extract_strided_slice %1 {offsets = [0, 0, 0], sizes = [16, 18, 128], strides = [1, 1, 1]} : vector<18x18x128xbf16> to vector<16x18x128xbf16>
    %4 = vector.extract_strided_slice %3 {offsets = [0, 0, 0], sizes = [16, 16, 128], strides = [1, 1, 1]} : vector<16x18x128xbf16> to vector<16x16x128xbf16>
    %5 = vector.shape_cast %4 : vector<16x16x128xbf16> to vector<256x128xbf16>
    %c0_4 = arith.constant 0 : index
    %c0_5 = arith.constant 0 : index
    %c0_6 = arith.constant 0 : index
    %6 = vector.load %arg3[%c0_4, %c0_5, %c0_6] : memref<9x128x128xbf16, #tpu.memory_space<vmem>>, vector<1x128x128xbf16>
    %7 = vector.shape_cast %6 : vector<1x128x128xbf16> to vector<128x128xbf16>
    %cst_7 = arith.constant dense<0.000000e+00> : vector<256x128xf32>
    %8 = tpu.matmul %5, %7, %cst_7 {dimension_numbers = #tpu.dot_dimension_numbers<[1], [0], [0], [1], [0, 0, 1, 1], [], []>} : vector<256x128xbf16>, vector<128x128xbf16>, vector<256x128xf32> -> vector<256x128xf32>
    %9 = arith.addf %2, %8 : vector<256x128xf32>
    %10 = vector.extract_strided_slice %3 {offsets = [0, 1, 0], sizes = [16, 16, 128], strides = [1, 1, 1]} : vector<16x18x128xbf16> to vector<16x16x128xbf16>
    %11 = vector.shape_cast %10 : vector<16x16x128xbf16> to vector<256x128xbf16>
    %c1 = arith.constant 1 : index
    %c0_8 = arith.constant 0 : index
    %c0_9 = arith.constant 0 : index
    %12 = vector.load %arg3[%c1, %c0_8, %c0_9] : memref<9x128x128xbf16, #tpu.memory_space<vmem>>, vector<1x128x128xbf16>
    %13 = vector.shape_cast %12 : vector<1x128x128xbf16> to vector<128x128xbf16>
    %cst_10 = arith.constant dense<0.000000e+00> : vector<256x128xf32>
    %14 = tpu.matmul %11, %13, %cst_10 {dimension_numbers = #tpu.dot_dimension_numbers<[1], [0], [0], [1], [0, 0, 1, 1], [], []>} : vector<256x128xbf16>, vector<128x128xbf16>, vector<256x128xf32> -> vector<256x128xf32>
    %15 = arith.addf %9, %14 : vector<256x128xf32>
    %16 = vector.extract_strided_slice %3 {offsets = [0, 2, 0], sizes = [16, 16, 128], strides = [1, 1, 1]} : vector<16x18x128xbf16> to vector<16x16x128xbf16>
    %17 = vector.shape_cast %16 : vector<16x16x128xbf16> to vector<256x128xbf16>
    %c2 = arith.constant 2 : index
    %c0_11 = arith.constant 0 : index
    %c0_12 = arith.constant 0 : index
    %18 = vector.load %arg3[%c2, %c0_11, %c0_12] : memref<9x128x128xbf16, #tpu.memory_space<vmem>>, vector<1x128x128xbf16>
    %19 = vector.shape_cast %18 : vector<1x128x128xbf16> to vector<128x128xbf16>
    %cst_13 = arith.constant dense<0.000000e+00> : vector<256x128xf32>
    %20 = tpu.matmul %17, %19, %cst_13 {dimension_numbers = #tpu.dot_dimension_numbers<[1], [0], [0], [1], [0, 0, 1, 1], [], []>} : vector<256x128xbf16>, vector<128x128xbf16>, vector<256x128xf32> -> vector<256x128xf32>
    %21 = arith.addf %15, %20 : vector<256x128xf32>
    %22 = vector.extract_strided_slice %1 {offsets = [1, 0, 0], sizes = [16, 18, 128], strides = [1, 1, 1]} : vector<18x18x128xbf16> to vector<16x18x128xbf16>
    %23 = vector.extract_strided_slice %22 {offsets = [0, 0, 0], sizes = [16, 16, 128], strides = [1, 1, 1]} : vector<16x18x128xbf16> to vector<16x16x128xbf16>
    %24 = vector.shape_cast %23 : vector<16x16x128xbf16> to vector<256x128xbf16>
    %c3 = arith.constant 3 : index
    %c0_14 = arith.constant 0 : index
    %c0_15 = arith.constant 0 : index
    %25 = vector.load %arg3[%c3, %c0_14, %c0_15] : memref<9x128x128xbf16, #tpu.memory_space<vmem>>, vector<1x128x128xbf16>
    %26 = vector.shape_cast %25 : vector<1x128x128xbf16> to vector<128x128xbf16>
    %cst_16 = arith.constant dense<0.000000e+00> : vector<256x128xf32>
    %27 = tpu.matmul %24, %26, %cst_16 {dimension_numbers = #tpu.dot_dimension_numbers<[1], [0], [0], [1], [0, 0, 1, 1], [], []>} : vector<256x128xbf16>, vector<128x128xbf16>, vector<256x128xf32> -> vector<256x128xf32>
    %28 = arith.addf %21, %27 : vector<256x128xf32>
    %29 = vector.extract_strided_slice %22 {offsets = [0, 1, 0], sizes = [16, 16, 128], strides = [1, 1, 1]} : vector<16x18x128xbf16> to vector<16x16x128xbf16>
    %30 = vector.shape_cast %29 : vector<16x16x128xbf16> to vector<256x128xbf16>
    %c4 = arith.constant 4 : index
    %c0_17 = arith.constant 0 : index
    %c0_18 = arith.constant 0 : index
    %31 = vector.load %arg3[%c4, %c0_17, %c0_18] : memref<9x128x128xbf16, #tpu.memory_space<vmem>>, vector<1x128x128xbf16>
    %32 = vector.shape_cast %31 : vector<1x128x128xbf16> to vector<128x128xbf16>
    %cst_19 = arith.constant dense<0.000000e+00> : vector<256x128xf32>
    %33 = tpu.matmul %30, %32, %cst_19 {dimension_numbers = #tpu.dot_dimension_numbers<[1], [0], [0], [1], [0, 0, 1, 1], [], []>} : vector<256x128xbf16>, vector<128x128xbf16>, vector<256x128xf32> -> vector<256x128xf32>
    %34 = arith.addf %28, %33 : vector<256x128xf32>
    %35 = vector.extract_strided_slice %22 {offsets = [0, 2, 0], sizes = [16, 16, 128], strides = [1, 1, 1]} : vector<16x18x128xbf16> to vector<16x16x128xbf16>
    %36 = vector.shape_cast %35 : vector<16x16x128xbf16> to vector<256x128xbf16>
    %c5 = arith.constant 5 : index
    %c0_20 = arith.constant 0 : index
    %c0_21 = arith.constant 0 : index
    %37 = vector.load %arg3[%c5, %c0_20, %c0_21] : memref<9x128x128xbf16, #tpu.memory_space<vmem>>, vector<1x128x128xbf16>
    %38 = vector.shape_cast %37 : vector<1x128x128xbf16> to vector<128x128xbf16>
    %cst_22 = arith.constant dense<0.000000e+00> : vector<256x128xf32>
    %39 = tpu.matmul %36, %38, %cst_22 {dimension_numbers = #tpu.dot_dimension_numbers<[1], [0], [0], [1], [0, 0, 1, 1], [], []>} : vector<256x128xbf16>, vector<128x128xbf16>, vector<256x128xf32> -> vector<256x128xf32>
    %40 = arith.addf %34, %39 : vector<256x128xf32>
    %41 = vector.extract_strided_slice %1 {offsets = [2, 0, 0], sizes = [16, 18, 128], strides = [1, 1, 1]} : vector<18x18x128xbf16> to vector<16x18x128xbf16>
    %42 = vector.extract_strided_slice %41 {offsets = [0, 0, 0], sizes = [16, 16, 128], strides = [1, 1, 1]} : vector<16x18x128xbf16> to vector<16x16x128xbf16>
    %43 = vector.shape_cast %42 : vector<16x16x128xbf16> to vector<256x128xbf16>
    %c6 = arith.constant 6 : index
    %c0_23 = arith.constant 0 : index
    %c0_24 = arith.constant 0 : index
    %44 = vector.load %arg3[%c6, %c0_23, %c0_24] : memref<9x128x128xbf16, #tpu.memory_space<vmem>>, vector<1x128x128xbf16>
    %45 = vector.shape_cast %44 : vector<1x128x128xbf16> to vector<128x128xbf16>
    %cst_25 = arith.constant dense<0.000000e+00> : vector<256x128xf32>
    %46 = tpu.matmul %43, %45, %cst_25 {dimension_numbers = #tpu.dot_dimension_numbers<[1], [0], [0], [1], [0, 0, 1, 1], [], []>} : vector<256x128xbf16>, vector<128x128xbf16>, vector<256x128xf32> -> vector<256x128xf32>
    %47 = arith.addf %40, %46 : vector<256x128xf32>
    %48 = vector.extract_strided_slice %41 {offsets = [0, 1, 0], sizes = [16, 16, 128], strides = [1, 1, 1]} : vector<16x18x128xbf16> to vector<16x16x128xbf16>
    %49 = vector.shape_cast %48 : vector<16x16x128xbf16> to vector<256x128xbf16>
    %c7 = arith.constant 7 : index
    %c0_26 = arith.constant 0 : index
    %c0_27 = arith.constant 0 : index
    %50 = vector.load %arg3[%c7, %c0_26, %c0_27] : memref<9x128x128xbf16, #tpu.memory_space<vmem>>, vector<1x128x128xbf16>
    %51 = vector.shape_cast %50 : vector<1x128x128xbf16> to vector<128x128xbf16>
    %cst_28 = arith.constant dense<0.000000e+00> : vector<256x128xf32>
    %52 = tpu.matmul %49, %51, %cst_28 {dimension_numbers = #tpu.dot_dimension_numbers<[1], [0], [0], [1], [0, 0, 1, 1], [], []>} : vector<256x128xbf16>, vector<128x128xbf16>, vector<256x128xf32> -> vector<256x128xf32>
    %53 = arith.addf %47, %52 : vector<256x128xf32>
    %54 = vector.extract_strided_slice %41 {offsets = [0, 2, 0], sizes = [16, 16, 128], strides = [1, 1, 1]} : vector<16x18x128xbf16> to vector<16x16x128xbf16>
    %55 = vector.shape_cast %54 : vector<16x16x128xbf16> to vector<256x128xbf16>
    %c8 = arith.constant 8 : index
    %c0_29 = arith.constant 0 : index
    %c0_30 = arith.constant 0 : index
    %56 = vector.load %arg3[%c8, %c0_29, %c0_30] : memref<9x128x128xbf16, #tpu.memory_space<vmem>>, vector<1x128x128xbf16>
    %57 = vector.shape_cast %56 : vector<1x128x128xbf16> to vector<128x128xbf16>
    %cst_31 = arith.constant dense<0.000000e+00> : vector<256x128xf32>
    %58 = tpu.matmul %55, %57, %cst_31 {dimension_numbers = #tpu.dot_dimension_numbers<[1], [0], [0], [1], [0, 0, 1, 1], [], []>} : vector<256x128xbf16>, vector<128x128xbf16>, vector<256x128xf32> -> vector<256x128xf32>
    %59 = arith.addf %53, %58 : vector<256x128xf32>
    %60 = vector.shape_cast %59 : vector<256x128xf32> to vector<16x16x128xf32>
    %c0_32 = arith.constant 0 : index
    %c0_33 = arith.constant 0 : index
    %c0_34 = arith.constant 0 : index
    %c0_35 = arith.constant 0 : index
    %61 = vector.load %arg4[%c0_32, %c0_33, %c0_34, %c0_35] : memref<1x16x16x128xf32, #tpu.memory_space<vmem>>, vector<1x16x16x128xf32>
    %62 = vector.shape_cast %61 : vector<1x16x16x128xf32> to vector<16x16x128xf32>
    %63 = vector.shape_cast %60 : vector<16x16x128xf32> to vector<1x16x16x128xf32>
    tpu.vector_store %arg4[%c0_32, %c0_33, %c0_34, %c0_35], %63 {strides = array<i32>} : memref<1x16x16x128xf32, #tpu.memory_space<vmem>>, vector<1x16x16x128xf32>,
    %cst_36 = arith.constant dense<0.000000e+00> : vector<128xf32>
    %64 = vector.multi_reduction <add>, %59, %cst_36 [0] : vector<256x128xf32> to vector<128xf32>
    %65 = vector.shape_cast %64 : vector<128xf32> to vector<1x128xf32>
    %c0_37 = arith.constant 0 : index
    %c0_38 = arith.constant 0 : index
    %c0_39 = arith.constant 0 : index
    %c0_40 = arith.constant 0 : index
    %66 = vector.load %arg5[%c0_37, %c0_38, %c0_39, %c0_40] : memref<1x1x1x128xf32, #tpu.memory_space<vmem>>, vector<1x1x1x128xf32>
    %67 = vector.shape_cast %66 : vector<1x1x1x128xf32> to vector<1x128xf32>
    %68 = vector.shape_cast %65 : vector<1x128xf32> to vector<1x1x1x128xf32>
    tpu.vector_store %arg5[%c0_37, %c0_38, %c0_39, %c0_40], %68 {strides = array<i32>} : memref<1x1x1x128xf32, #tpu.memory_space<vmem>>, vector<1x1x1x128xf32>,
    %69 = arith.mulf %59, %59 : vector<256x128xf32>
    %cst_41 = arith.constant dense<0.000000e+00> : vector<128xf32>
    %70 = vector.multi_reduction <add>, %69, %cst_41 [0] : vector<256x128xf32> to vector<128xf32>
    %71 = vector.shape_cast %70 : vector<128xf32> to vector<1x128xf32>
    %c0_42 = arith.constant 0 : index
    %c0_43 = arith.constant 0 : index
    %c0_44 = arith.constant 0 : index
    %c0_45 = arith.constant 0 : index
    %72 = vector.load %arg6[%c0_42, %c0_43, %c0_44, %c0_45] : memref<1x1x1x128xf32, #tpu.memory_space<vmem>>, vector<1x1x1x128xf32>
    %73 = vector.shape_cast %72 : vector<1x1x1x128xf32> to vector<1x128xf32>
    %74 = vector.shape_cast %71 : vector<1x128xf32> to vector<1x1x1x128xf32>
    tpu.vector_store %arg6[%c0_42, %c0_43, %c0_44, %c0_45], %74 {strides = array<i32>} : memref<1x1x1x128xf32, #tpu.memory_space<vmem>>, vector<1x1x1x128xf32>,
    return
  }
  func.func @transform_0(%arg0: i32, %arg1: i32) -> (i32, i32, i32, i32, i32) {
    %c0_i32 = arith.constant 0 : i32
    %c0_i32_0 = arith.constant 0 : i32
    %c0_i32_1 = arith.constant 0 : i32
    %c0_i32_2 = arith.constant 0 : i32
    return %arg0, %arg1, %c0_i32, %c0_i32_0, %c0_i32_1 : i32, i32, i32, i32, i32
  }
  func.func @transform_1(%arg0: i32, %arg1: i32) -> (i32, i32, i32) {
    %c0_i32 = arith.constant 0 : i32
    %c0_i32_0 = arith.constant 0 : i32
    %c0_i32_1 = arith.constant 0 : i32
    %c0_i32_2 = arith.constant 0 : i32
    return %c0_i32, %c0_i32_0, %c0_i32_1 : i32, i32, i32
  }
  func.func @transform_2(%arg0: i32, %arg1: i32) -> (i32, i32, i32, i32) {
    %c0_i32 = arith.constant 0 : i32
    %c0_i32_0 = arith.constant 0 : i32
    %c0_i32_1 = arith.constant 0 : i32
    return %arg0, %arg1, %c0_i32, %c0_i32_0 : i32, i32, i32, i32
  }
  func.func @transform_3(%arg0: i32, %arg1: i32) -> (i32, i32, i32, i32) {
    %c0_i32 = arith.constant 0 : i32
    %c0_i32_0 = arith.constant 0 : i32
    %c0_i32_1 = arith.constant 0 : i32
    return %arg0, %arg1, %c0_i32, %c0_i32_0 : i32, i32, i32, i32
  }
  func.func @transform_4(%arg0: i32, %arg1: i32) -> (i32, i32, i32, i32) {
    %c0_i32 = arith.constant 0 : i32
    %c0_i32_0 = arith.constant 0 : i32
    %c0_i32_1 = arith.constant 0 : i32
    return %arg0, %arg1, %c0_i32, %c0_i32_0 : i32, i32, i32, i32
  }
}

module attributes {stable_mosaic.version = 11 : i64} {
  func.func @_bn_relu_kernel(%arg0: i32, %arg1: memref<512x128xf32, #tpu.memory_space<vmem>>, %arg2: memref<1x128xf32, #tpu.memory_space<vmem>>, %arg3: memref<1x128xf32, #tpu.memory_space<vmem>>, %arg4: memref<512x128xbf16, #tpu.memory_space<vmem>>) attributes {dimension_semantics = [#tpu.dimension_semantics<parallel>], iteration_bounds = array<i64: 1>, scalar_prefetch = 0 : i64, scratch_operands = 0 : i64, tpu.core_type = #tpu.core_type<tc>, window_params = [{transform_indices = @transform_0, window_bounds = array<i64: 512, 128>}, {pipeline_mode = #tpu.pipeline_mode<synchronous>, transform_indices = @transform_1, window_bounds = array<i64: 1, 128>}, {pipeline_mode = #tpu.pipeline_mode<synchronous>, transform_indices = @transform_2, window_bounds = array<i64: 1, 128>}, {transform_indices = @transform_3, window_bounds = array<i64: 512, 128>}]} {
    %c0 = arith.constant 0 : index
    %c0_0 = arith.constant 0 : index
    %0 = vector.load %arg1[%c0, %c0_0] : memref<512x128xf32, #tpu.memory_space<vmem>>, vector<512x128xf32>
    %c0_1 = arith.constant 0 : index
    %c0_2 = arith.constant 0 : index
    %1 = vector.load %arg2[%c0_1, %c0_2] : memref<1x128xf32, #tpu.memory_space<vmem>>, vector<1x128xf32>
    %2 = vector.broadcast %1 : vector<1x128xf32> to vector<512x128xf32>
    %3 = arith.mulf %0, %2 : vector<512x128xf32>
    %c0_3 = arith.constant 0 : index
    %c0_4 = arith.constant 0 : index
    %4 = vector.load %arg3[%c0_3, %c0_4] : memref<1x128xf32, #tpu.memory_space<vmem>>, vector<1x128xf32>
    %5 = vector.broadcast %4 : vector<1x128xf32> to vector<512x128xf32>
    %6 = arith.addf %3, %5 : vector<512x128xf32>
    %cst = arith.constant 0.000000e+00 : f32
    %7 = vector.broadcast %cst : f32 to vector<512x128xf32>
    %8 = arith.maximumf %6, %7 : vector<512x128xf32>
    %9 = arith.truncf %8 : vector<512x128xf32> to vector<512x128xbf16>
    %c0_5 = arith.constant 0 : index
    %c0_6 = arith.constant 0 : index
    %10 = vector.load %arg4[%c0_5, %c0_6] : memref<512x128xbf16, #tpu.memory_space<vmem>>, vector<512x128xbf16>
    tpu.vector_store %arg4[%c0_5, %c0_6], %9 {strides = array<i32>} : memref<512x128xbf16, #tpu.memory_space<vmem>>, vector<512x128xbf16>,
    return
  }
  func.func @transform_0(%arg0: i32) -> (i32, i32) {
    %c0_i32 = arith.constant 0 : i32
    %c0_i32_0 = arith.constant 0 : i32
    return %arg0, %c0_i32 : i32, i32
  }
  func.func @transform_1(%arg0: i32) -> (i32, i32) {
    %c0_i32 = arith.constant 0 : i32
    %c0_i32_0 = arith.constant 0 : i32
    %c0_i32_1 = arith.constant 0 : i32
    return %c0_i32, %c0_i32_0 : i32, i32
  }
  func.func @transform_2(%arg0: i32) -> (i32, i32) {
    %c0_i32 = arith.constant 0 : i32
    %c0_i32_0 = arith.constant 0 : i32
    %c0_i32_1 = arith.constant 0 : i32
    return %c0_i32, %c0_i32_0 : i32, i32
  }
  func.func @transform_3(%arg0: i32) -> (i32, i32) {
    %c0_i32 = arith.constant 0 : i32
    %c0_i32_0 = arith.constant 0 : i32
    return %arg0, %c0_i32 : i32, i32
  }
}

module attributes {stable_mosaic.version = 11 : i64} {
  func.func @_bn_relu_kernel(%arg0: i32, %arg1: memref<512x128xf32, #tpu.memory_space<vmem>>, %arg2: memref<1x128xf32, #tpu.memory_space<vmem>>, %arg3: memref<1x128xf32, #tpu.memory_space<vmem>>, %arg4: memref<512x128xf32, #tpu.memory_space<vmem>>) attributes {dimension_semantics = [#tpu.dimension_semantics<parallel>], iteration_bounds = array<i64: 1>, scalar_prefetch = 0 : i64, scratch_operands = 0 : i64, tpu.core_type = #tpu.core_type<tc>, window_params = [{transform_indices = @transform_0, window_bounds = array<i64: 512, 128>}, {pipeline_mode = #tpu.pipeline_mode<synchronous>, transform_indices = @transform_1, window_bounds = array<i64: 1, 128>}, {pipeline_mode = #tpu.pipeline_mode<synchronous>, transform_indices = @transform_2, window_bounds = array<i64: 1, 128>}, {transform_indices = @transform_3, window_bounds = array<i64: 512, 128>}]} {
    %c0 = arith.constant 0 : index
    %c0_0 = arith.constant 0 : index
    %0 = vector.load %arg1[%c0, %c0_0] : memref<512x128xf32, #tpu.memory_space<vmem>>, vector<512x128xf32>
    %c0_1 = arith.constant 0 : index
    %c0_2 = arith.constant 0 : index
    %1 = vector.load %arg2[%c0_1, %c0_2] : memref<1x128xf32, #tpu.memory_space<vmem>>, vector<1x128xf32>
    %2 = vector.broadcast %1 : vector<1x128xf32> to vector<512x128xf32>
    %3 = arith.mulf %0, %2 : vector<512x128xf32>
    %c0_3 = arith.constant 0 : index
    %c0_4 = arith.constant 0 : index
    %4 = vector.load %arg3[%c0_3, %c0_4] : memref<1x128xf32, #tpu.memory_space<vmem>>, vector<1x128xf32>
    %5 = vector.broadcast %4 : vector<1x128xf32> to vector<512x128xf32>
    %6 = arith.addf %3, %5 : vector<512x128xf32>
    %cst = arith.constant 0.000000e+00 : f32
    %7 = vector.broadcast %cst : f32 to vector<512x128xf32>
    %8 = arith.maximumf %6, %7 : vector<512x128xf32>
    %c0_5 = arith.constant 0 : index
    %c0_6 = arith.constant 0 : index
    %9 = vector.load %arg4[%c0_5, %c0_6] : memref<512x128xf32, #tpu.memory_space<vmem>>, vector<512x128xf32>
    tpu.vector_store %arg4[%c0_5, %c0_6], %8 {strides = array<i32>} : memref<512x128xf32, #tpu.memory_space<vmem>>, vector<512x128xf32>,
    return
  }
  func.func @transform_0(%arg0: i32) -> (i32, i32) {
    %c0_i32 = arith.constant 0 : i32
    %c0_i32_0 = arith.constant 0 : i32
    return %arg0, %c0_i32 : i32, i32
  }
  func.func @transform_1(%arg0: i32) -> (i32, i32) {
    %c0_i32 = arith.constant 0 : i32
    %c0_i32_0 = arith.constant 0 : i32
    %c0_i32_1 = arith.constant 0 : i32
    return %c0_i32, %c0_i32_0 : i32, i32
  }
  func.func @transform_2(%arg0: i32) -> (i32, i32) {
    %c0_i32 = arith.constant 0 : i32
    %c0_i32_0 = arith.constant 0 : i32
    %c0_i32_1 = arith.constant 0 : i32
    return %c0_i32, %c0_i32_0 : i32, i32
  }
  func.func @transform_3(%arg0: i32) -> (i32, i32) {
    %c0_i32 = arith.constant 0 : i32
    %c0_i32_0 = arith.constant 0 : i32
    return %arg0, %c0_i32 : i32, i32
  }
}

</mosaic_0001>

<llo_original>
// kernel: double_conv.5
$region0: #{double_conv.5}
  #allocation0 [shape = 'u32[]', space=smem, size = 0x4, offset = 0x4, fixed_abs, tag = 'smem constant byte address 0x4 - core index']
  #allocation1 [shape = 'u32[144,128]{1,0:T(1,128)}', space=vmem, size = 0x12000, scoped, tag = 'internal scratch']
  %s0 = inlined_call_operand.vmem [shape: f32[512,128], index: 0, kind: input, shape index: {}]
  %s1 = inlined_call_operand.vmem [shape: f32[1,128], index: 1, kind: input, shape index: {}]
  %s2 = inlined_call_operand.vmem [shape: f32[1,128], index: 2, kind: input, shape index: {}]
  %s3 = inlined_call_operand.vmem [shape: bf16[512,128], index: 3, kind: output, shape index: {}]
  %s4 = sld [smem:[#allocation0]]
  $region22: #{double_conv.5} parent=0
    _
  %s6 = ssub.s32 1, %s4
  %s7 = scalar_select 0, %s6, %s4
  // Predicated region
  $region2: #{double_conv.5} parent=0 // pred_check
    _
  $region3: #{double_conv.5} parent=0 // pred_check_branch
    %9 = sbr.rel (0) target = $region5
  $region4: #{double_conv.5} parent=0 // pred_region
    _
  $region5: #{double_conv.5} parent=0 // pred_fallthru
    _
  // Predicated region
  $region6: #{double_conv.5} parent=0 // pred_check
    _
  $region7: #{double_conv.5} parent=0 // pred_check_branch
    %11 = sbr.rel (0) target = $region9
  $region8: #{double_conv.5} parent=0 // pred_region
    _
  $region9: #{double_conv.5} parent=0 // pred_fallthru
    _
  // Predicated region
  $region10: #{double_conv.5} parent=0 // pred_check
    _
  $region11: #{double_conv.5} parent=0 // pred_check_branch
    %13 = sbr.rel (0) target = $region13
  $region12: #{double_conv.5} parent=0 // pred_region
    _
  $region13: #{double_conv.5} parent=0 // pred_fallthru
    _
  %v14 = vld [vmem:[%s0] sm:$0xff]
  %v15 = vld [vmem:[%s0 + $0x8] sm:$0xff]
  %v16 = vld [vmem:[%s0 + $0x10] sm:$0xff]
  %v17 = vld [vmem:[%s0 + $0x18] sm:$0xff]
  %v18 = vld [vmem:[%s0 + $0x20] sm:$0xff]
  %v19 = vld [vmem:[%s0 + $0x28] sm:$0xff]
  %v20 = vld [vmem:[%s0 + $0x30] sm:$0xff]
  %v21 = vld [vmem:[%s0 + $0x38] sm:$0xff]
  %v22 = vld [vmem:[%s0 + $0x40] sm:$0xff]
  %v23 = vld [vmem:[%s0 + $0x48] sm:$0xff]
  %v24 = vld [vmem:[%s0 + $0x50] sm:$0xff]
  %v25 = vld [vmem:[%s0 + $0x58] sm:$0xff]
  %v26 = vld [vmem:[%s0 + $0x60] sm:$0xff]
  %v27 = vld [vmem:[%s0 + $0x68] sm:$0xff]
  %v28 = vld [vmem:[%s0 + $0x70] sm:$0xff]
  %v29 = vld [vmem:[%s0 + $0x78] sm:$0xff]
  %v30 = vld [vmem:[%s0 + $0x80] sm:$0xff]
  %v31 = vld [vmem:[%s0 + $0x88] sm:$0xff]
  %v32 = vld [vmem:[%s0 + $0x90] sm:$0xff]
  %v33 = vld [vmem:[%s0 + $0x98] sm:$0xff]
  %v34 = vld [vmem:[%s0 + $0xa0] sm:$0xff]
  %v35 = vld [vmem:[%s0 + $0xa8] sm:$0xff]
  %v36 = vld [vmem:[%s0 + $0xb0] sm:$0xff]
  %v37 = vld [vmem:[%s0 + $0xb8] sm:$0xff]
  %v38 = vld [vmem:[%s0 + $0xc0] sm:$0xff]
  %v39 = vld [vmem:[%s0 + $0xc8] sm:$0xff]
  %v40 = vld [vmem:[%s0 + $0xd0] sm:$0xff]
  %v41 = vld [vmem:[%s0 + $0xd8] sm:$0xff]
  %v42 = vld [vmem:[%s0 + $0xe0] sm:$0xff]
  %v43 = vld [vmem:[%s0 + $0xe8] sm:$0xff]
  %v44 = vld [vmem:[%s0 + $0xf0] sm:$0xff]
  %v45 = vld [vmem:[%s0 + $0xf8] sm:$0xff]
  %v46 = vld [vmem:[%s0 + $0x100] sm:$0xff]
  %v47 = vld [vmem:[%s0 + $0x108] sm:$0xff]
  %v48 = vld [vmem:[%s0 + $0x110] sm:$0xff]
  %v49 = vld [vmem:[%s0 + $0x118] sm:$0xff]
  %v50 = vld [vmem:[%s0 + $0x120] sm:$0xff]
  %v51 = vld [vmem:[%s0 + $0x128] sm:$0xff]
  %v52 = vld [vmem:[%s0 + $0x130] sm:$0xff]
  %v53 = vld [vmem:[%s0 + $0x138] sm:$0xff]
  %v54 = vld [vmem:[%s0 + $0x140] sm:$0xff]
  %v55 = vld [vmem:[%s0 + $0x148] sm:$0xff]
  %v56 = vld [vmem:[%s0 + $0x150] sm:$0xff]
  %v57 = vld [vmem:[%s0 + $0x158] sm:$0xff]
  %v58 = vld [vmem:[%s0 + $0x160] sm:$0xff]
  %v59 = vld [vmem:[%s0 + $0x168] sm:$0xff]
  %v60 = vld [vmem:[%s0 + $0x170] sm:$0xff]
  %v61 = vld [vmem:[%s0 + $0x178] sm:$0xff]
  %v62 = vld [vmem:[%s0 + $0x180] sm:$0xff]
  %v63 = vld [vmem:[%s0 + $0x188] sm:$0xff]
  %v64 = vld [vmem:[%s0 + $0x190] sm:$0xff]
  %v65 = vld [vmem:[%s0 + $0x198] sm:$0xff]
  %v66 = vld [vmem:[%s0 + $0x1a0] sm:$0xff]
  %v67 = vld [vmem:[%s0 + $0x1a8] sm:$0xff]
  %v68 = vld [vmem:[%s0 + $0x1b0] sm:$0xff]
  %v69 = vld [vmem:[%s0 + $0x1b8] sm:$0xff]
  %v70 = vld [vmem:[%s0 + $0x1c0] sm:$0xff]
  %v71 = vld [vmem:[%s0 + $0x1c8] sm:$0xff]
  %v72 = vld [vmem:[%s0 + $0x1d0] sm:$0xff]
  %v73 = vld [vmem:[%s0 + $0x1d8] sm:$0xff]
  %v74 = vld [vmem:[%s0 + $0x1e0] sm:$0xff]
  %v75 = vld [vmem:[%s0 + $0x1e8] sm:$0xff]
  %v76 = vld [vmem:[%s0 + $0x1f0] sm:$0xff]
  %v77 = vld [vmem:[%s0 + $0x1f8] sm:$0xff]
  %v78 = vld [vmem:[%s1] sm:$0x1]
  %v80 = vlaneseq
  %v81 = vshrl.u32 %v80, 7
  %v82 = vsub.s32 0, %v81
  %v83 = vrot.slane %v78, %v82
  %v85 = vmul.f32 %v14, %v83
  %v86 = vmul.f32 %v15, %v83
  %v87 = vmul.f32 %v16, %v83
  %v88 = vmul.f32 %v17, %v83
  %v89 = vmul.f32 %v18, %v83
  %v90 = vmul.f32 %v19, %v83
  %v91 = vmul.f32 %v20, %v83
  %v92 = vmul.f32 %v21, %v83
  %v93 = vmul.f32 %v22, %v83
  %v94 = vmul.f32 %v23, %v83
  %v95 = vmul.f32 %v24, %v83
  %v96 = vmul.f32 %v25, %v83
  %v97 = vmul.f32 %v26, %v83
  %v98 = vmul.f32 %v27, %v83
  %v99 = vmul.f32 %v28, %v83
  %v100 = vmul.f32 %v29, %v83
  %v101 = vmul.f32 %v30, %v83
  %v102 = vmul.f32 %v31, %v83
  %v103 = vmul.f32 %v32, %v83
  %v104 = vmul.f32 %v33, %v83
  %v105 = vmul.f32 %v34, %v83
  %v106 = vmul.f32 %v35, %v83
  %v107 = vmul.f32 %v36, %v83
  %v108 = vmul.f32 %v37, %v83
  %v109 = vmul.f32 %v38, %v83
  %v110 = vmul.f32 %v39, %v83
  %v111 = vmul.f32 %v40, %v83
  %v112 = vmul.f32 %v41, %v83
  %v113 = vmul.f32 %v42, %v83
  %v114 = vmul.f32 %v43, %v83
  %v115 = vmul.f32 %v44, %v83
  %v116 = vmul.f32 %v45, %v83
  %v117 = vmul.f32 %v46, %v83
  %v118 = vmul.f32 %v47, %v83
  %v119 = vmul.f32 %v48, %v83
  %v120 = vmul.f32 %v49, %v83
  %v121 = vmul.f32 %v50, %v83
  %v122 = vmul.f32 %v51, %v83
  %v123 = vmul.f32 %v52, %v83
  %v124 = vmul.f32 %v53, %v83
  %v125 = vmul.f32 %v54, %v83
  %v126 = vmul.f32 %v55, %v83
  %v127 = vmul.f32 %v56, %v83
  %v128 = vmul.f32 %v57, %v83
  %v129 = vmul.f32 %v58, %v83
  %v130 = vmul.f32 %v59, %v83
  %v131 = vmul.f32 %v60, %v83
  %v132 = vmul.f32 %v61, %v83
  %v133 = vmul.f32 %v62, %v83
  %v134 = vmul.f32 %v63, %v83
  %v135 = vmul.f32 %v64, %v83
  %v136 = vmul.f32 %v65, %v83
  %v137 = vmul.f32 %v66, %v83
  %v138 = vmul.f32 %v67, %v83
  %v139 = vmul.f32 %v68, %v83
  %v140 = vmul.f32 %v69, %v83
  %v141 = vmul.f32 %v70, %v83
  %v142 = vmul.f32 %v71, %v83
  %v143 = vmul.f32 %v72, %v83
  %v144 = vmul.f32 %v73, %v83
  %v145 = vmul.f32 %v74, %v83
  %v146 = vmul.f32 %v75, %v83
  %v147 = vmul.f32 %v76, %v83
  %v148 = vmul.f32 %v77, %v83
  %v149 = vld [vmem:[%s2] sm:$0x1]
  %v151 = vlaneseq
  %v152 = vshrl.u32 %v151, 7
  %v153 = vsub.s32 0, %v152
  %v154 = vrot.slane %v149, %v153
  %v156 = vadd.f32 %v85, %v154
  %v157 = vadd.f32 %v86, %v154
  %v158 = vadd.f32 %v87, %v154
  %v159 = vadd.f32 %v88, %v154
  %v160 = vadd.f32 %v89, %v154
  %v161 = vadd.f32 %v90, %v154
  %v162 = vadd.f32 %v91, %v154
  %v163 = vadd.f32 %v92, %v154
  %v164 = vadd.f32 %v93, %v154
  %v165 = vadd.f32 %v94, %v154
  %v166 = vadd.f32 %v95, %v154
  %v167 = vadd.f32 %v96, %v154
  %v168 = vadd.f32 %v97, %v154
  %v169 = vadd.f32 %v98, %v154
  %v170 = vadd.f32 %v99, %v154
  %v171 = vadd.f32 %v100, %v154
  %v172 = vadd.f32 %v101, %v154
  %v173 = vadd.f32 %v102, %v154
  %v174 = vadd.f32 %v103, %v154
  %v175 = vadd.f32 %v104, %v154
  %v176 = vadd.f32 %v105, %v154
  %v177 = vadd.f32 %v106, %v154
  %v178 = vadd.f32 %v107, %v154
  %v179 = vadd.f32 %v108, %v154
  %v180 = vadd.f32 %v109, %v154
  %v181 = vadd.f32 %v110, %v154
  %v182 = vadd.f32 %v111, %v154
  %v183 = vadd.f32 %v112, %v154
  %v184 = vadd.f32 %v113, %v154
  %v185 = vadd.f32 %v114, %v154
  %v186 = vadd.f32 %v115, %v154
  %v187 = vadd.f32 %v116, %v154
  %v188 = vadd.f32 %v117, %v154
  %v189 = vadd.f32 %v118, %v154
  %v190 = vadd.f32 %v119, %v154
  %v191 = vadd.f32 %v120, %v154
  %v192 = vadd.f32 %v121, %v154
  %v193 = vadd.f32 %v122, %v154
  %v194 = vadd.f32 %v123, %v154
  %v195 = vadd.f32 %v124, %v154
  %v196 = vadd.f32 %v125, %v154
  %v197 = vadd.f32 %v126, %v154
  %v198 = vadd.f32 %v127, %v154
  %v199 = vadd.f32 %v128, %v154
  %v200 = vadd.f32 %v129, %v154
  %v201 = vadd.f32 %v130, %v154
  %v202 = vadd.f32 %v131, %v154
  %v203 = vadd.f32 %v132, %v154
  %v204 = vadd.f32 %v133, %v154
  %v205 = vadd.f32 %v134, %v154
  %v206 = vadd.f32 %v135, %v154
  %v207 = vadd.f32 %v136, %v154
  %v208 = vadd.f32 %v137, %v154
  %v209 = vadd.f32 %v138, %v154
  %v210 = vadd.f32 %v139, %v154
  %v211 = vadd.f32 %v140, %v154
  %v212 = vadd.f32 %v141, %v154
  %v213 = vadd.f32 %v142, %v154
  %v214 = vadd.f32 %v143, %v154
  %v215 = vadd.f32 %v144, %v154
  %v216 = vadd.f32 %v145, %v154
  %v217 = vadd.f32 %v146, %v154
  %v218 = vadd.f32 %v147, %v154
  %v219 = vadd.f32 %v148, %v154
  %v220 = vmax.f32 %v156, 0.0
  %v221 = vmax.f32 %v157, 0.0
  %v222 = vmax.f32 %v158, 0.0
  %v223 = vmax.f32 %v159, 0.0
  %v224 = vmax.f32 %v160, 0.0
  %v225 = vmax.f32 %v161, 0.0
  %v226 = vmax.f32 %v162, 0.0
  %v227 = vmax.f32 %v163, 0.0
  %v228 = vmax.f32 %v164, 0.0
  %v229 = vmax.f32 %v165, 0.0
  %v230 = vmax.f32 %v166, 0.0
  %v231 = vmax.f32 %v167, 0.0
  %v232 = vmax.f32 %v168, 0.0
  %v233 = vmax.f32 %v169, 0.0
  %v234 = vmax.f32 %v170, 0.0
  %v235 = vmax.f32 %v171, 0.0
  %v236 = vmax.f32 %v172, 0.0
  %v237 = vmax.f32 %v173, 0.0
  %v238 = vmax.f32 %v174, 0.0
  %v239 = vmax.f32 %v175, 0.0
  %v240 = vmax.f32 %v176, 0.0
  %v241 = vmax.f32 %v177, 0.0
  %v242 = vmax.f32 %v178, 0.0
  %v243 = vmax.f32 %v179, 0.0
  %v244 = vmax.f32 %v180, 0.0
  %v245 = vmax.f32 %v181, 0.0
  %v246 = vmax.f32 %v182, 0.0
  %v247 = vmax.f32 %v183, 0.0
  %v248 = vmax.f32 %v184, 0.0
  %v249 = vmax.f32 %v185, 0.0
  %v250 = vmax.f32 %v186, 0.0
  %v251 = vmax.f32 %v187, 0.0
  %v252 = vmax.f32 %v188, 0.0
  %v253 = vmax.f32 %v189, 0.0
  %v254 = vmax.f32 %v190, 0.0
  %v255 = vmax.f32 %v191, 0.0
  %v256 = vmax.f32 %v192, 0.0
  %v257 = vmax.f32 %v193, 0.0
  %v258 = vmax.f32 %v194, 0.0
  %v259 = vmax.f32 %v195, 0.0
  %v260 = vmax.f32 %v196, 0.0
  %v261 = vmax.f32 %v197, 0.0
  %v262 = vmax.f32 %v198, 0.0
  %v263 = vmax.f32 %v199, 0.0
  %v264 = vmax.f32 %v200, 0.0
  %v265 = vmax.f32 %v201, 0.0
  %v266 = vmax.f32 %v202, 0.0
  %v267 = vmax.f32 %v203, 0.0
  %v268 = vmax.f32 %v204, 0.0
  %v269 = vmax.f32 %v205, 0.0
  %v270 = vmax.f32 %v206, 0.0
  %v271 = vmax.f32 %v207, 0.0
  %v272 = vmax.f32 %v208, 0.0
  %v273 = vmax.f32 %v209, 0.0
  %v274 = vmax.f32 %v210, 0.0
  %v275 = vmax.f32 %v211, 0.0
  %v276 = vmax.f32 %v212, 0.0
  %v277 = vmax.f32 %v213, 0.0
  %v278 = vmax.f32 %v214, 0.0
  %v279 = vmax.f32 %v215, 0.0
  %v280 = vmax.f32 %v216, 0.0
  %v281 = vmax.f32 %v217, 0.0
  %v282 = vmax.f32 %v218, 0.0
  %v283 = vmax.f32 %v219, 0.0
  %v284 = vpack.c.bf16 %v221, %v220
  %v285 = vpack.c.bf16 %v223, %v222
  %v286 = vpack.c.bf16 %v225, %v224
  %v287 = vpack.c.bf16 %v227, %v226
  %v288 = vpack.c.bf16 %v229, %v228
  %v289 = vpack.c.bf16 %v231, %v230
  %v290 = vpack.c.bf16 %v233, %v232
  %v291 = vpack.c.bf16 %v235, %v234
  %v292 = vpack.c.bf16 %v237, %v236
  %v293 = vpack.c.bf16 %v239, %v238
  %v294 = vpack.c.bf16 %v241, %v240
  %v295 = vpack.c.bf16 %v243, %v242
  %v296 = vpack.c.bf16 %v245, %v244
  %v297 = vpack.c.bf16 %v247, %v246
  %v298 = vpack.c.bf16 %v249, %v248
  %v299 = vpack.c.bf16 %v251, %v250
  %v300 = vpack.c.bf16 %v253, %v252
  %v301 = vpack.c.bf16 %v255, %v254
  %v302 = vpack.c.bf16 %v257, %v256
  %v303 = vpack.c.bf16 %v259, %v258
  %v304 = vpack.c.bf16 %v261, %v260
  %v305 = vpack.c.bf16 %v263, %v262
  %v306 = vpack.c.bf16 %v265, %v264
  %v307 = vpack.c.bf16 %v267, %v266
  %v308 = vpack.c.bf16 %v269, %v268
  %v309 = vpack.c.bf16 %v271, %v270
  %v310 = vpack.c.bf16 %v273, %v272
  %v311 = vpack.c.bf16 %v275, %v274
  %v312 = vpack.c.bf16 %v277, %v276
  %v313 = vpack.c.bf16 %v279, %v278
  %v314 = vpack.c.bf16 %v281, %v280
  %v315 = vpack.c.bf16 %v283, %v282
  %v348 = vunpack.c.l.b16 %v284
  %v349 = vunpack.c.h.b16 %v284
  %v350 = vunpack.c.l.b16 %v285
  %v351 = vunpack.c.h.b16 %v285
  %v352 = vunpack.c.l.b16 %v286
  %v353 = vunpack.c.h.b16 %v286
  %v354 = vunpack.c.l.b16 %v287
  %v355 = vunpack.c.h.b16 %v287
  %v356 = vunpack.c.l.b16 %v288
  %v357 = vunpack.c.h.b16 %v288
  %v358 = vunpack.c.l.b16 %v289
  %v359 = vunpack.c.h.b16 %v289
  %v360 = vunpack.c.l.b16 %v290
  %v361 = vunpack.c.h.b16 %v290
  %v362 = vunpack.c.l.b16 %v291
  %v363 = vunpack.c.h.b16 %v291
  %v364 = vunpack.c.l.b16 %v292
  %v365 = vunpack.c.h.b16 %v292
  %v366 = vunpack.c.l.b16 %v293
  %v367 = vunpack.c.h.b16 %v293
  %v368 = vunpack.c.l.b16 %v294
  %v369 = vunpack.c.h.b16 %v294
  %v370 = vunpack.c.l.b16 %v295
  %v371 = vunpack.c.h.b16 %v295
  %v372 = vunpack.c.l.b16 %v296
  %v373 = vunpack.c.h.b16 %v296
  %v374 = vunpack.c.l.b16 %v297
  %v375 = vunpack.c.h.b16 %v297
  %v376 = vunpack.c.l.b16 %v298
  %v377 = vunpack.c.h.b16 %v298
  %v378 = vunpack.c.l.b16 %v299
  %v379 = vunpack.c.h.b16 %v299
  %v380 = vunpack.c.l.b16 %v300
  %v381 = vunpack.c.h.b16 %v300
  %v382 = vunpack.c.l.b16 %v301
  %v383 = vunpack.c.h.b16 %v301
  %v384 = vunpack.c.l.b16 %v302
  %v385 = vunpack.c.h.b16 %v302
  %v386 = vunpack.c.l.b16 %v303
  %v387 = vunpack.c.h.b16 %v303
  %v388 = vunpack.c.l.b16 %v304
  %v389 = vunpack.c.h.b16 %v304
  %v390 = vunpack.c.l.b16 %v305
  %v391 = vunpack.c.h.b16 %v305
  %v392 = vunpack.c.l.b16 %v306
  %v393 = vunpack.c.h.b16 %v306
  %v394 = vunpack.c.l.b16 %v307
  %v395 = vunpack.c.h.b16 %v307
  %v396 = vunpack.c.l.b16 %v308
  %v397 = vunpack.c.h.b16 %v308
  %v398 = vunpack.c.l.b16 %v309
  %v399 = vunpack.c.h.b16 %v309
  %v400 = vunpack.c.l.b16 %v310
  %v401 = vunpack.c.h.b16 %v310
  %v402 = vunpack.c.l.b16 %v311
  %v403 = vunpack.c.h.b16 %v311
  %v404 = vunpack.c.l.b16 %v312
  %v405 = vunpack.c.h.b16 %v312
  %v406 = vunpack.c.l.b16 %v313
  %v407 = vunpack.c.h.b16 %v313
  %v408 = vunpack.c.l.b16 %v314
  %v409 = vunpack.c.h.b16 %v314
  %v410 = vunpack.c.l.b16 %v315
  %v411 = vunpack.c.h.b16 %v315
  %v412 = vpack.c.b16 %v348, %v348
  %v413 = vpack.c.b16 %v349, %v349
  %v414 = vpack.c.b16 %v350, %v350
  %v415 = vpack.c.b16 %v351, %v351
  %v416 = vpack.c.b16 %v352, %v352
  %v417 = vpack.c.b16 %v353, %v353
  %v418 = vpack.c.b16 %v354, %v354
  %v419 = vpack.c.b16 %v355, %v355
  %v420 = vpack.c.b16 %v356, %v356
  %v421 = vpack.c.b16 %v357, %v357
  %v422 = vpack.c.b16 %v358, %v358
  %v423 = vpack.c.b16 %v359, %v359
  %v424 = vpack.c.b16 %v360, %v360
  %v425 = vpack.c.b16 %v361, %v361
  %v426 = vpack.c.b16 %v362, %v362
  %v427 = vpack.c.b16 %v363, %v363
  %v428 = vpack.c.b16 %v364, %v364
  %v429 = vpack.c.b16 %v365, %v365
  %v430 = vpack.c.b16 %v366, %v366
  %v431 = vpack.c.b16 %v367, %v367
  %v432 = vpack.c.b16 %v368, %v368
  %v433 = vpack.c.b16 %v369, %v369
  %v434 = vpack.c.b16 %v370, %v370
  %v435 = vpack.c.b16 %v371, %v371
  %v436 = vpack.c.b16 %v372, %v372
  %v437 = vpack.c.b16 %v373, %v373
  %v438 = vpack.c.b16 %v374, %v374
  %v439 = vpack.c.b16 %v375, %v375
  %v440 = vpack.c.b16 %v376, %v376
  %v441 = vpack.c.b16 %v377, %v377
  %v442 = vpack.c.b16 %v378, %v378
  %v443 = vpack.c.b16 %v379, %v379
  %v444 = vpack.c.b16 %v380, %v380
  %v445 = vpack.c.b16 %v381, %v381
  %v446 = vpack.c.b16 %v382, %v382
  %v447 = vpack.c.b16 %v383, %v383
  %v448 = vpack.c.b16 %v384, %v384
  %v449 = vpack.c.b16 %v385, %v385
  %v450 = vpack.c.b16 %v386, %v386
  %v451 = vpack.c.b16 %v387, %v387
  %v452 = vpack.c.b16 %v388, %v388
  %v453 = vpack.c.b16 %v389, %v389
  %v454 = vpack.c.b16 %v390, %v390
  %v455 = vpack.c.b16 %v391, %v391
  %v456 = vpack.c.b16 %v392, %v392
  %v457 = vpack.c.b16 %v393, %v393
  %v458 = vpack.c.b16 %v394, %v394
  %v459 = vpack.c.b16 %v395, %v395
  %v460 = vpack.c.b16 %v396, %v396
  %v461 = vpack.c.b16 %v397, %v397
  %v462 = vpack.c.b16 %v398, %v398
  %v463 = vpack.c.b16 %v399, %v399
  %v464 = vpack.c.b16 %v400, %v400
  %v465 = vpack.c.b16 %v401, %v401
  %v466 = vpack.c.b16 %v402, %v402
  %v467 = vpack.c.b16 %v403, %v403
  %v468 = vpack.c.b16 %v404, %v404
  %v469 = vpack.c.b16 %v405, %v405
  %v470 = vpack.c.b16 %v406, %v406
  %v471 = vpack.c.b16 %v407, %v407
  %v472 = vpack.c.b16 %v408, %v408
  %v473 = vpack.c.b16 %v409, %v409
  %v474 = vpack.c.b16 %v410, %v410
  %v475 = vpack.c.b16 %v411, %v411
  %540 = vst [vmem:[%s3] sm:$0xf] %v412
  %541 = vst [vmem:[%s3 + $0x4] sm:$0xf] %v413
  %542 = vst [vmem:[%s3 + $0x8] sm:$0xf] %v414
  %543 = vst [vmem:[%s3 + $0xc] sm:$0xf] %v415
  %544 = vst [vmem:[%s3 + $0x10] sm:$0xf] %v416
  %545 = vst [vmem:[%s3 + $0x14] sm:$0xf] %v417
  %546 = vst [vmem:[%s3 + $0x18] sm:$0xf] %v418
  %547 = vst [vmem:[%s3 + $0x1c] sm:$0xf] %v419
  %548 = vst [vmem:[%s3 + $0x20] sm:$0xf] %v420
  %549 = vst [vmem:[%s3 + $0x24] sm:$0xf] %v421
  %550 = vst [vmem:[%s3 + $0x28] sm:$0xf] %v422
  %551 = vst [vmem:[%s3 + $0x2c] sm:$0xf] %v423
  %552 = vst [vmem:[%s3 + $0x30] sm:$0xf] %v424
  %553 = vst [vmem:[%s3 + $0x34] sm:$0xf] %v425
  %554 = vst [vmem:[%s3 + $0x38] sm:$0xf] %v426
  %555 = vst [vmem:[%s3 + $0x3c] sm:$0xf] %v427
  %556 = vst [vmem:[%s3 + $0x40] sm:$0xf] %v428
  %557 = vst [vmem:[%s3 + $0x44] sm:$0xf] %v429
  %558 = vst [vmem:[%s3 + $0x48] sm:$0xf] %v430
  %559 = vst [vmem:[%s3 + $0x4c] sm:$0xf] %v431
  %560 = vst [vmem:[%s3 + $0x50] sm:$0xf] %v432
  %561 = vst [vmem:[%s3 + $0x54] sm:$0xf] %v433
  %562 = vst [vmem:[%s3 + $0x58] sm:$0xf] %v434
  %563 = vst [vmem:[%s3 + $0x5c] sm:$0xf] %v435
  %564 = vst [vmem:[%s3 + $0x60] sm:$0xf] %v436
  %565 = vst [vmem:[%s3 + $0x64] sm:$0xf] %v437
  %566 = vst [vmem:[%s3 + $0x68] sm:$0xf] %v438
  %567 = vst [vmem:[%s3 + $0x6c] sm:$0xf] %v439
  %568 = vst [vmem:[%s3 + $0x70] sm:$0xf] %v440
  %569 = vst [vmem:[%s3 + $0x74] sm:$0xf] %v441
  %570 = vst [vmem:[%s3 + $0x78] sm:$0xf] %v442
  %571 = vst [vmem:[%s3 + $0x7c] sm:$0xf] %v443
  %572 = vst [vmem:[%s3 + $0x80] sm:$0xf] %v444
  %573 = vst [vmem:[%s3 + $0x84] sm:$0xf] %v445
  %574 = vst [vmem:[%s3 + $0x88] sm:$0xf] %v446
  %575 = vst [vmem:[%s3 + $0x8c] sm:$0xf] %v447
  %576 = vst [vmem:[%s3 + $0x90] sm:$0xf] %v448
  %577 = vst [vmem:[%s3 + $0x94] sm:$0xf] %v449
  %578 = vst [vmem:[%s3 + $0x98] sm:$0xf] %v450
  %579 = vst [vmem:[%s3 + $0x9c] sm:$0xf] %v451
  %580 = vst [vmem:[%s3 + $0xa0] sm:$0xf] %v452
  %581 = vst [vmem:[%s3 + $0xa4] sm:$0xf] %v453
  %582 = vst [vmem:[%s3 + $0xa8] sm:$0xf] %v454
  %583 = vst [vmem:[%s3 + $0xac] sm:$0xf] %v455
  %584 = vst [vmem:[%s3 + $0xb0] sm:$0xf] %v456
  %585 = vst [vmem:[%s3 + $0xb4] sm:$0xf] %v457
  %586 = vst [vmem:[%s3 + $0xb8] sm:$0xf] %v458
  %587 = vst [vmem:[%s3 + $0xbc] sm:$0xf] %v459
  %588 = vst [vmem:[%s3 + $0xc0] sm:$0xf] %v460
  %589 = vst [vmem:[%s3 + $0xc4] sm:$0xf] %v461
  %590 = vst [vmem:[%s3 + $0xc8] sm:$0xf] %v462
  %591 = vst [vmem:[%s3 + $0xcc] sm:$0xf] %v463
  %592 = vst [vmem:[%s3 + $0xd0] sm:$0xf] %v464
  %593 = vst [vmem:[%s3 + $0xd4] sm:$0xf] %v465
  %594 = vst [vmem:[%s3 + $0xd8] sm:$0xf] %v466
  %595 = vst [vmem:[%s3 + $0xdc] sm:$0xf] %v467
  %596 = vst [vmem:[%s3 + $0xe0] sm:$0xf] %v468
  %597 = vst [vmem:[%s3 + $0xe4] sm:$0xf] %v469
  %598 = vst [vmem:[%s3 + $0xe8] sm:$0xf] %v470
  %599 = vst [vmem:[%s3 + $0xec] sm:$0xf] %v471
  %600 = vst [vmem:[%s3 + $0xf0] sm:$0xf] %v472
  %601 = vst [vmem:[%s3 + $0xf4] sm:$0xf] %v473
  %602 = vst [vmem:[%s3 + $0xf8] sm:$0xf] %v474
  %603 = vst [vmem:[%s3 + $0xfc] sm:$0xf] %v475
  // Predicated region
  $region14: #{double_conv.5} parent=0 // pred_check
    _
  $region15: #{double_conv.5} parent=0 // pred_check_branch
    %605 = sbr.rel (0) target = $region17
  $region16: #{double_conv.5} parent=0 // pred_region
    _
  $region17: #{double_conv.5} parent=0 // pred_fallthru
    _
  // Predicated region
  $region18: #{double_conv.5} parent=0 // pred_check
    _
  $region19: #{double_conv.5} parent=0 // pred_check_branch
    %607 = sbr.rel (0) target = $region21
  $region20: #{double_conv.5} parent=0 // pred_region
    _
  $region21: #{double_conv.5} parent=0 // pred_fallthru
    _

// kernel: double_conv.7
$region0: #{double_conv.7}
  #allocation0 [shape = 'u32[]', space=smem, size = 0x4, offset = 0x4, fixed_abs, tag = 'smem constant byte address 0x4 - core index']
  #allocation1 [shape = 'u32[144,128]{1,0:T(1,128)}', space=vmem, size = 0x12000, scoped, tag = 'internal scratch']
  %s0 = inlined_call_operand.vmem [shape: f32[512,128], index: 0, kind: input, shape index: {}]
  %s1 = inlined_call_operand.vmem [shape: f32[1,128], index: 1, kind: input, shape index: {}]
  %s2 = inlined_call_operand.vmem [shape: f32[1,128], index: 2, kind: input, shape index: {}]
  %s3 = inlined_call_operand.vmem [shape: f32[512,128], index: 3, kind: output, shape index: {}]
  %s4 = sld [smem:[#allocation0]]
  $region22: #{double_conv.7} parent=0
    _
  %s6 = ssub.s32 1, %s4
  %s7 = scalar_select 0, %s6, %s4
  // Predicated region
  $region2: #{double_conv.7} parent=0 // pred_check
    _
  $region3: #{double_conv.7} parent=0 // pred_check_branch
    %9 = sbr.rel (0) target = $region5
  $region4: #{double_conv.7} parent=0 // pred_region
    _
  $region5: #{double_conv.7} parent=0 // pred_fallthru
    _
  // Predicated region
  $region6: #{double_conv.7} parent=0 // pred_check
    _
  $region7: #{double_conv.7} parent=0 // pred_check_branch
    %11 = sbr.rel (0) target = $region9
  $region8: #{double_conv.7} parent=0 // pred_region
    _
  $region9: #{double_conv.7} parent=0 // pred_fallthru
    _
  // Predicated region
  $region10: #{double_conv.7} parent=0 // pred_check
    _
  $region11: #{double_conv.7} parent=0 // pred_check_branch
    %13 = sbr.rel (0) target = $region13
  $region12: #{double_conv.7} parent=0 // pred_region
    _
  $region13: #{double_conv.7} parent=0 // pred_fallthru
    _
  %v14 = vld [vmem:[%s0] sm:$0xff]
  %v15 = vld [vmem:[%s0 + $0x8] sm:$0xff]
  %v16 = vld [vmem:[%s0 + $0x10] sm:$0xff]
  %v17 = vld [vmem:[%s0 + $0x18] sm:$0xff]
  %v18 = vld [vmem:[%s0 + $0x20] sm:$0xff]
  %v19 = vld [vmem:[%s0 + $0x28] sm:$0xff]
  %v20 = vld [vmem:[%s0 + $0x30] sm:$0xff]
  %v21 = vld [vmem:[%s0 + $0x38] sm:$0xff]
  %v22 = vld [vmem:[%s0 + $0x40] sm:$0xff]
  %v23 = vld [vmem:[%s0 + $0x48] sm:$0xff]
  %v24 = vld [vmem:[%s0 + $0x50] sm:$0xff]
  %v25 = vld [vmem:[%s0 + $0x58] sm:$0xff]
  %v26 = vld [vmem:[%s0 + $0x60] sm:$0xff]
  %v27 = vld [vmem:[%s0 + $0x68] sm:$0xff]
  %v28 = vld [vmem:[%s0 + $0x70] sm:$0xff]
  %v29 = vld [vmem:[%s0 + $0x78] sm:$0xff]
  %v30 = vld [vmem:[%s0 + $0x80] sm:$0xff]
  %v31 = vld [vmem:[%s0 + $0x88] sm:$0xff]
  %v32 = vld [vmem:[%s0 + $0x90] sm:$0xff]
  %v33 = vld [vmem:[%s0 + $0x98] sm:$0xff]
  %v34 = vld [vmem:[%s0 + $0xa0] sm:$0xff]
  %v35 = vld [vmem:[%s0 + $0xa8] sm:$0xff]
  %v36 = vld [vmem:[%s0 + $0xb0] sm:$0xff]
  %v37 = vld [vmem:[%s0 + $0xb8] sm:$0xff]
  %v38 = vld [vmem:[%s0 + $0xc0] sm:$0xff]
  %v39 = vld [vmem:[%s0 + $0xc8] sm:$0xff]
  %v40 = vld [vmem:[%s0 + $0xd0] sm:$0xff]
  %v41 = vld [vmem:[%s0 + $0xd8] sm:$0xff]
  %v42 = vld [vmem:[%s0 + $0xe0] sm:$0xff]
  %v43 = vld [vmem:[%s0 + $0xe8] sm:$0xff]
  %v44 = vld [vmem:[%s0 + $0xf0] sm:$0xff]
  %v45 = vld [vmem:[%s0 + $0xf8] sm:$0xff]
  %v46 = vld [vmem:[%s0 + $0x100] sm:$0xff]
  %v47 = vld [vmem:[%s0 + $0x108] sm:$0xff]
  %v48 = vld [vmem:[%s0 + $0x110] sm:$0xff]
  %v49 = vld [vmem:[%s0 + $0x118] sm:$0xff]
  %v50 = vld [vmem:[%s0 + $0x120] sm:$0xff]
  %v51 = vld [vmem:[%s0 + $0x128] sm:$0xff]
  %v52 = vld [vmem:[%s0 + $0x130] sm:$0xff]
  %v53 = vld [vmem:[%s0 + $0x138] sm:$0xff]
  %v54 = vld [vmem:[%s0 + $0x140] sm:$0xff]
  %v55 = vld [vmem:[%s0 + $0x148] sm:$0xff]
  %v56 = vld [vmem:[%s0 + $0x150] sm:$0xff]
  %v57 = vld [vmem:[%s0 + $0x158] sm:$0xff]
  %v58 = vld [vmem:[%s0 + $0x160] sm:$0xff]
  %v59 = vld [vmem:[%s0 + $0x168] sm:$0xff]
  %v60 = vld [vmem:[%s0 + $0x170] sm:$0xff]
  %v61 = vld [vmem:[%s0 + $0x178] sm:$0xff]
  %v62 = vld [vmem:[%s0 + $0x180] sm:$0xff]
  %v63 = vld [vmem:[%s0 + $0x188] sm:$0xff]
  %v64 = vld [vmem:[%s0 + $0x190] sm:$0xff]
  %v65 = vld [vmem:[%s0 + $0x198] sm:$0xff]
  %v66 = vld [vmem:[%s0 + $0x1a0] sm:$0xff]
  %v67 = vld [vmem:[%s0 + $0x1a8] sm:$0xff]
  %v68 = vld [vmem:[%s0 + $0x1b0] sm:$0xff]
  %v69 = vld [vmem:[%s0 + $0x1b8] sm:$0xff]
  %v70 = vld [vmem:[%s0 + $0x1c0] sm:$0xff]
  %v71 = vld [vmem:[%s0 + $0x1c8] sm:$0xff]
  %v72 = vld [vmem:[%s0 + $0x1d0] sm:$0xff]
  %v73 = vld [vmem:[%s0 + $0x1d8] sm:$0xff]
  %v74 = vld [vmem:[%s0 + $0x1e0] sm:$0xff]
  %v75 = vld [vmem:[%s0 + $0x1e8] sm:$0xff]
  %v76 = vld [vmem:[%s0 + $0x1f0] sm:$0xff]
  %v77 = vld [vmem:[%s0 + $0x1f8] sm:$0xff]
  %v78 = vld [vmem:[%s1] sm:$0x1]
  %v80 = vlaneseq
  %v81 = vshrl.u32 %v80, 7
  %v82 = vsub.s32 0, %v81
  %v83 = vrot.slane %v78, %v82
  %v85 = vmul.f32 %v14, %v83
  %v86 = vmul.f32 %v15, %v83
  %v87 = vmul.f32 %v16, %v83
  %v88 = vmul.f32 %v17, %v83
  %v89 = vmul.f32 %v18, %v83
  %v90 = vmul.f32 %v19, %v83
  %v91 = vmul.f32 %v20, %v83
  %v92 = vmul.f32 %v21, %v83
  %v93 = vmul.f32 %v22, %v83
  %v94 = vmul.f32 %v23, %v83
  %v95 = vmul.f32 %v24, %v83
  %v96 = vmul.f32 %v25, %v83
  %v97 = vmul.f32 %v26, %v83
  %v98 = vmul.f32 %v27, %v83
  %v99 = vmul.f32 %v28, %v83
  %v100 = vmul.f32 %v29, %v83
  %v101 = vmul.f32 %v30, %v83
  %v102 = vmul.f32 %v31, %v83
  %v103 = vmul.f32 %v32, %v83
  %v104 = vmul.f32 %v33, %v83
  %v105 = vmul.f32 %v34, %v83
  %v106 = vmul.f32 %v35, %v83
  %v107 = vmul.f32 %v36, %v83
  %v108 = vmul.f32 %v37, %v83
  %v109 = vmul.f32 %v38, %v83
  %v110 = vmul.f32 %v39, %v83
  %v111 = vmul.f32 %v40, %v83
  %v112 = vmul.f32 %v41, %v83
  %v113 = vmul.f32 %v42, %v83
  %v114 = vmul.f32 %v43, %v83
  %v115 = vmul.f32 %v44, %v83
  %v116 = vmul.f32 %v45, %v83
  %v117 = vmul.f32 %v46, %v83
  %v118 = vmul.f32 %v47, %v83
  %v119 = vmul.f32 %v48, %v83
  %v120 = vmul.f32 %v49, %v83
  %v121 = vmul.f32 %v50, %v83
  %v122 = vmul.f32 %v51, %v83
  %v123 = vmul.f32 %v52, %v83
  %v124 = vmul.f32 %v53, %v83
  %v125 = vmul.f32 %v54, %v83
  %v126 = vmul.f32 %v55, %v83
  %v127 = vmul.f32 %v56, %v83
  %v128 = vmul.f32 %v57, %v83
  %v129 = vmul.f32 %v58, %v83
  %v130 = vmul.f32 %v59, %v83
  %v131 = vmul.f32 %v60, %v83
  %v132 = vmul.f32 %v61, %v83
  %v133 = vmul.f32 %v62, %v83
  %v134 = vmul.f32 %v63, %v83
  %v135 = vmul.f32 %v64, %v83
  %v136 = vmul.f32 %v65, %v83
  %v137 = vmul.f32 %v66, %v83
  %v138 = vmul.f32 %v67, %v83
  %v139 = vmul.f32 %v68, %v83
  %v140 = vmul.f32 %v69, %v83
  %v141 = vmul.f32 %v70, %v83
  %v142 = vmul.f32 %v71, %v83
  %v143 = vmul.f32 %v72, %v83
  %v144 = vmul.f32 %v73, %v83
  %v145 = vmul.f32 %v74, %v83
  %v146 = vmul.f32 %v75, %v83
  %v147 = vmul.f32 %v76, %v83
  %v148 = vmul.f32 %v77, %v83
  %v149 = vld [vmem:[%s2] sm:$0x1]
  %v151 = vlaneseq
  %v152 = vshrl.u32 %v151, 7
  %v153 = vsub.s32 0, %v152
  %v154 = vrot.slane %v149, %v153
  %v156 = vadd.f32 %v85, %v154
  %v157 = vadd.f32 %v86, %v154
  %v158 = vadd.f32 %v87, %v154
  %v159 = vadd.f32 %v88, %v154
  %v160 = vadd.f32 %v89, %v154
  %v161 = vadd.f32 %v90, %v154
  %v162 = vadd.f32 %v91, %v154
  %v163 = vadd.f32 %v92, %v154
  %v164 = vadd.f32 %v93, %v154
  %v165 = vadd.f32 %v94, %v154
  %v166 = vadd.f32 %v95, %v154
  %v167 = vadd.f32 %v96, %v154
  %v168 = vadd.f32 %v97, %v154
  %v169 = vadd.f32 %v98, %v154
  %v170 = vadd.f32 %v99, %v154
  %v171 = vadd.f32 %v100, %v154
  %v172 = vadd.f32 %v101, %v154
  %v173 = vadd.f32 %v102, %v154
  %v174 = vadd.f32 %v103, %v154
  %v175 = vadd.f32 %v104, %v154
  %v176 = vadd.f32 %v105, %v154
  %v177 = vadd.f32 %v106, %v154
  %v178 = vadd.f32 %v107, %v154
  %v179 = vadd.f32 %v108, %v154
  %v180 = vadd.f32 %v109, %v154
  %v181 = vadd.f32 %v110, %v154
  %v182 = vadd.f32 %v111, %v154
  %v183 = vadd.f32 %v112, %v154
  %v184 = vadd.f32 %v113, %v154
  %v185 = vadd.f32 %v114, %v154
  %v186 = vadd.f32 %v115, %v154
  %v187 = vadd.f32 %v116, %v154
  %v188 = vadd.f32 %v117, %v154
  %v189 = vadd.f32 %v118, %v154
  %v190 = vadd.f32 %v119, %v154
  %v191 = vadd.f32 %v120, %v154
  %v192 = vadd.f32 %v121, %v154
  %v193 = vadd.f32 %v122, %v154
  %v194 = vadd.f32 %v123, %v154
  %v195 = vadd.f32 %v124, %v154
  %v196 = vadd.f32 %v125, %v154
  %v197 = vadd.f32 %v126, %v154
  %v198 = vadd.f32 %v127, %v154
  %v199 = vadd.f32 %v128, %v154
  %v200 = vadd.f32 %v129, %v154
  %v201 = vadd.f32 %v130, %v154
  %v202 = vadd.f32 %v131, %v154
  %v203 = vadd.f32 %v132, %v154
  %v204 = vadd.f32 %v133, %v154
  %v205 = vadd.f32 %v134, %v154
  %v206 = vadd.f32 %v135, %v154
  %v207 = vadd.f32 %v136, %v154
  %v208 = vadd.f32 %v137, %v154
  %v209 = vadd.f32 %v138, %v154
  %v210 = vadd.f32 %v139, %v154
  %v211 = vadd.f32 %v140, %v154
  %v212 = vadd.f32 %v141, %v154
  %v213 = vadd.f32 %v142, %v154
  %v214 = vadd.f32 %v143, %v154
  %v215 = vadd.f32 %v144, %v154
  %v216 = vadd.f32 %v145, %v154
  %v217 = vadd.f32 %v146, %v154
  %v218 = vadd.f32 %v147, %v154
  %v219 = vadd.f32 %v148, %v154
  %v220 = vmax.f32 %v156, 0.0
  %v221 = vmax.f32 %v157, 0.0
  %v222 = vmax.f32 %v158, 0.0
  %v223 = vmax.f32 %v159, 0.0
  %v224 = vmax.f32 %v160, 0.0
  %v225 = vmax.f32 %v161, 0.0
  %v226 = vmax.f32 %v162, 0.0
  %v227 = vmax.f32 %v163, 0.0
  %v228 = vmax.f32 %v164, 0.0
  %v229 = vmax.f32 %v165, 0.0
  %v230 = vmax.f32 %v166, 0.0
  %v231 = vmax.f32 %v167, 0.0
  %v232 = vmax.f32 %v168, 0.0
  %v233 = vmax.f32 %v169, 0.0
  %v234 = vmax.f32 %v170, 0.0
  %v235 = vmax.f32 %v171, 0.0
  %v236 = vmax.f32 %v172, 0.0
  %v237 = vmax.f32 %v173, 0.0
  %v238 = vmax.f32 %v174, 0.0
  %v239 = vmax.f32 %v175, 0.0
  %v240 = vmax.f32 %v176, 0.0
  %v241 = vmax.f32 %v177, 0.0
  %v242 = vmax.f32 %v178, 0.0
  %v243 = vmax.f32 %v179, 0.0
  %v244 = vmax.f32 %v180, 0.0
  %v245 = vmax.f32 %v181, 0.0
  %v246 = vmax.f32 %v182, 0.0
  %v247 = vmax.f32 %v183, 0.0
  %v248 = vmax.f32 %v184, 0.0
  %v249 = vmax.f32 %v185, 0.0
  %v250 = vmax.f32 %v186, 0.0
  %v251 = vmax.f32 %v187, 0.0
  %v252 = vmax.f32 %v188, 0.0
  %v253 = vmax.f32 %v189, 0.0
  %v254 = vmax.f32 %v190, 0.0
  %v255 = vmax.f32 %v191, 0.0
  %v256 = vmax.f32 %v192, 0.0
  %v257 = vmax.f32 %v193, 0.0
  %v258 = vmax.f32 %v194, 0.0
  %v259 = vmax.f32 %v195, 0.0
  %v260 = vmax.f32 %v196, 0.0
  %v261 = vmax.f32 %v197, 0.0
  %v262 = vmax.f32 %v198, 0.0
  %v263 = vmax.f32 %v199, 0.0
  %v264 = vmax.f32 %v200, 0.0
  %v265 = vmax.f32 %v201, 0.0
  %v266 = vmax.f32 %v202, 0.0
  %v267 = vmax.f32 %v203, 0.0
  %v268 = vmax.f32 %v204, 0.0
  %v269 = vmax.f32 %v205, 0.0
  %v270 = vmax.f32 %v206, 0.0
  %v271 = vmax.f32 %v207, 0.0
  %v272 = vmax.f32 %v208, 0.0
  %v273 = vmax.f32 %v209, 0.0
  %v274 = vmax.f32 %v210, 0.0
  %v275 = vmax.f32 %v211, 0.0
  %v276 = vmax.f32 %v212, 0.0
  %v277 = vmax.f32 %v213, 0.0
  %v278 = vmax.f32 %v214, 0.0
  %v279 = vmax.f32 %v215, 0.0
  %v280 = vmax.f32 %v216, 0.0
  %v281 = vmax.f32 %v217, 0.0
  %v282 = vmax.f32 %v218, 0.0
  %v283 = vmax.f32 %v219, 0.0
  %284 = vst [vmem:[%s3] sm:$0xff] %v220
  %285 = vst [vmem:[%s3 + $0x8] sm:$0xff] %v221
  %286 = vst [vmem:[%s3 + $0x10] sm:$0xff] %v222
  %287 = vst [vmem:[%s3 + $0x18] sm:$0xff] %v223
  %288 = vst [vmem:[%s3 + $0x20] sm:$0xff] %v224
  %289 = vst [vmem:[%s3 + $0x28] sm:$0xff] %v225
  %290 = vst [vmem:[%s3 + $0x30] sm:$0xff] %v226
  %291 = vst [vmem:[%s3 + $0x38] sm:$0xff] %v227
  %292 = vst [vmem:[%s3 + $0x40] sm:$0xff] %v228
  %293 = vst [vmem:[%s3 + $0x48] sm:$0xff] %v229
  %294 = vst [vmem:[%s3 + $0x50] sm:$0xff] %v230
  %295 = vst [vmem:[%s3 + $0x58] sm:$0xff] %v231
  %296 = vst [vmem:[%s3 + $0x60] sm:$0xff] %v232
  %297 = vst [vmem:[%s3 + $0x68] sm:$0xff] %v233
  %298 = vst [vmem:[%s3 + $0x70] sm:$0xff] %v234
  %299 = vst [vmem:[%s3 + $0x78] sm:$0xff] %v235
  %300 = vst [vmem:[%s3 + $0x80] sm:$0xff] %v236
  %301 = vst [vmem:[%s3 + $0x88] sm:$0xff] %v237
  %302 = vst [vmem:[%s3 + $0x90] sm:$0xff] %v238
  %303 = vst [vmem:[%s3 + $0x98] sm:$0xff] %v239
  %304 = vst [vmem:[%s3 + $0xa0] sm:$0xff] %v240
  %305 = vst [vmem:[%s3 + $0xa8] sm:$0xff] %v241
  %306 = vst [vmem:[%s3 + $0xb0] sm:$0xff] %v242
  %307 = vst [vmem:[%s3 + $0xb8] sm:$0xff] %v243
  %308 = vst [vmem:[%s3 + $0xc0] sm:$0xff] %v244
  %309 = vst [vmem:[%s3 + $0xc8] sm:$0xff] %v245
  %310 = vst [vmem:[%s3 + $0xd0] sm:$0xff] %v246
  %311 = vst [vmem:[%s3 + $0xd8] sm:$0xff] %v247
  %312 = vst [vmem:[%s3 + $0xe0] sm:$0xff] %v248
  %313 = vst [vmem:[%s3 + $0xe8] sm:$0xff] %v249
  %314 = vst [vmem:[%s3 + $0xf0] sm:$0xff] %v250
  %315 = vst [vmem:[%s3 + $0xf8] sm:$0xff] %v251
  %316 = vst [vmem:[%s3 + $0x100] sm:$0xff] %v252
  %317 = vst [vmem:[%s3 + $0x108] sm:$0xff] %v253
  %318 = vst [vmem:[%s3 + $0x110] sm:$0xff] %v254
  %319 = vst [vmem:[%s3 + $0x118] sm:$0xff] %v255
  %320 = vst [vmem:[%s3 + $0x120] sm:$0xff] %v256
  %321 = vst [vmem:[%s3 + $0x128] sm:$0xff] %v257
  %322 = vst [vmem:[%s3 + $0x130] sm:$0xff] %v258
  %323 = vst [vmem:[%s3 + $0x138] sm:$0xff] %v259
  %324 = vst [vmem:[%s3 + $0x140] sm:$0xff] %v260
  %325 = vst [vmem:[%s3 + $0x148] sm:$0xff] %v261
  %326 = vst [vmem:[%s3 + $0x150] sm:$0xff] %v262
  %327 = vst [vmem:[%s3 + $0x158] sm:$0xff] %v263
  %328 = vst [vmem:[%s3 + $0x160] sm:$0xff] %v264
  %329 = vst [vmem:[%s3 + $0x168] sm:$0xff] %v265
  %330 = vst [vmem:[%s3 + $0x170] sm:$0xff] %v266
  %331 = vst [vmem:[%s3 + $0x178] sm:$0xff] %v267
  %332 = vst [vmem:[%s3 + $0x180] sm:$0xff] %v268
  %333 = vst [vmem:[%s3 + $0x188] sm:$0xff] %v269
  %334 = vst [vmem:[%s3 + $0x190] sm:$0xff] %v270
  %335 = vst [vmem:[%s3 + $0x198] sm:$0xff] %v271
  %336 = vst [vmem:[%s3 + $0x1a0] sm:$0xff] %v272
  %337 = vst [vmem:[%s3 + $0x1a8] sm:$0xff] %v273
  %338 = vst [vmem:[%s3 + $0x1b0] sm:$0xff] %v274
  %339 = vst [vmem:[%s3 + $0x1b8] sm:$0xff] %v275
  %340 = vst [vmem:[%s3 + $0x1c0] sm:$0xff] %v276
  %341 = vst [vmem:[%s3 + $0x1c8] sm:$0xff] %v277
  %342 = vst [vmem:[%s3 + $0x1d0] sm:$0xff] %v278
  %343 = vst [vmem:[%s3 + $0x1d8] sm:$0xff] %v279
  %344 = vst [vmem:[%s3 + $0x1e0] sm:$0xff] %v280
  %345 = vst [vmem:[%s3 + $0x1e8] sm:$0xff] %v281
  %346 = vst [vmem:[%s3 + $0x1f0] sm:$0xff] %v282
  %347 = vst [vmem:[%s3 + $0x1f8] sm:$0xff] %v283
  // Predicated region
  $region14: #{double_conv.7} parent=0 // pred_check
    _
  $region15: #{double_conv.7} parent=0 // pred_check_branch
    %349 = sbr.rel (0) target = $region17
  $region16: #{double_conv.7} parent=0 // pred_region
    _
  $region17: #{double_conv.7} parent=0 // pred_fallthru
    _
  // Predicated region
  $region18: #{double_conv.7} parent=0 // pred_check
    _
  $region19: #{double_conv.7} parent=0 // pred_check_branch
    %351 = sbr.rel (0) target = $region21
  $region20: #{double_conv.7} parent=0 // pred_region
    _
  $region21: #{double_conv.7} parent=0 // pred_fallthru
    _

// kernel: double_conv.4
$region0: #{double_conv.4}
  #allocation0 [shape = 'u32[]', space=smem, size = 0x4, offset = 0x4, fixed_abs, tag = 'smem constant byte address 0x4 - core index']
  #allocation1 [shape = 'u32[144,128]{1,0:T(1,128)}', space=vmem, size = 0x12000, scoped, tag = 'internal scratch']
  %s0 = inlined_call_operand.vmem [shape: bf16[2,1,18,18,128], index: 0, kind: input, shape index: {}]
  %s1 = inlined_call_operand.vmem [shape: bf16[9,128,128], index: 1, kind: input, shape index: {}]
  %s2 = inlined_call_operand.vmem [shape: f32[2,16,16,128], index: 2, kind: output, shape index: {0}]
  %s3 = inlined_call_operand.vmem [shape: f32[2,1,1,128], index: 3, kind: output, shape index: {1}]
  %s4 = inlined_call_operand.vmem [shape: f32[2,1,1,128], index: 4, kind: output, shape index: {2}]
  %5 = xla_tuple %s2, %s3, %s4
  %s6 = sld [smem:[#allocation0]]
  $region57: #{double_conv.4} parent=0
    _
  %s8 = ssub.s32 1, %s6
  %s9 = scalar_select 0, %s8, %s6
  loop: start=0, step=1, limit=4
  $region2: #{double_conv.4} parent=0 // loop_pre_header
    _
  $region3: #{double_conv.4} parent=0 // loop_header
    %s11 = sphi 0, %s15
    %p12 = scmp.ge.s32.totalorder %s11, 4
    %s18 = sphi 0, %s30
    %s19 = sphi 0, %s26
    %s20 = sphi 0, %s18
    %s21 = sphi 0, %s19
    %s22 = sphi 0, %s20
    %s23 = sphi 0, %s21
    %s35 = sphi 0, %s37
    %s38 = sphi 0, %s35
    %s39 = sphi 0, %s38
    %s55 = sphi 0, %s39
    %s59 = sphi 0, %s59
    %s61 = sphi 0, %s59
    %s62 = sphi 0, %s61
    %s76 = sphi 0, %s62
    %s84 = sphi 0, %s86
    %s87 = sphi 0, %s84
    %s88 = sphi 0, %s87
    %s104 = sphi 0, %s88
    %s112 = sphi 0, %s114
    %s115 = sphi 0, %s112
    %s116 = sphi 0, %s115
    %s132 = sphi 0, %s116
    %s140 = sphi 0, %s142
    %s143 = sphi 0, %s140
    %s144 = sphi 0, %s143
    %s160 = sphi 0, %s144
  $region4: #{double_conv.4} parent=0 // loop_header_branch
    %14 = sbr.rel (%p12) target = $region8
  $region5: #{double_conv.4} parent=0 // loop_body
    %s16 = ssub.s32 %s11, 1
    %s17 = ssub.s32 %s11, 2
    %s24 = sadd.s32 1, %s19
    %p25 = scmp.ge.s32.totalorder %s24, 1
    %s26 = scalar_select %p25, 0, %s24
    %s27 = sadd.s32 1, %s18
    %s28 = scalar_select %p25, %s27, %s18
    %p29 = scmp.ge.s32.totalorder %s28, 2
    %s30 = scalar_select %p29, 0, %s28
    %s31 = ssub.s32 %s18, %s30
    %s32 = ssub.s32 %s19, %s26
    %s33 = sor.u32 %s31, %s32
    %p34 = scmp.eq.s32.totalorder %s33, 0
    %s36 = sadd.s32 %s35, 1
    %s37 = scalar_select %p34, %s35, %s36
    %p40 = pneg %p34
    %p41 = scmp.eq.s32.totalorder %s11, 1
    %p42 = por %p40, %p41
    %p43 = scmp.ne.s32.totalorder %s35, %s38
    %p44 = scmp.eq.s32.totalorder %s11, 0
    %p45 = por %p43, %p44
    %p46 = scmp.ne.s32.totalorder %s35, %s38
    %p47 = scmp.eq.s32.totalorder %s16, 1
    %p48 = por %p46, %p47
    %p49 = scmp.ne.s32.totalorder %s38, %s39
    %p50 = scmp.eq.s32.totalorder %s16, 0
    %p51 = por %p49, %p50
    %p52 = scmp.ne.s32.totalorder %s38, %s39
    %p53 = scmp.eq.s32.totalorder %s17, 1
    %p54 = por %p52, %p53
    %p56 = scmp.ne.s32.totalorder %s39, %s55
    %p57 = scmp.eq.s32.totalorder %s17, 0
    %p58 = por %p56, %p57
    %s60 = sadd.s32 %s59, 1
    %p63 = scmp.eq.s32.totalorder %s11, 1
    %p64 = scmp.ne.s32.totalorder %s59, %s61
    %p65 = scmp.eq.s32.totalorder %s11, 0
    %p66 = por %p64, %p65
    %p67 = scmp.ne.s32.totalorder %s59, %s61
    %p68 = scmp.eq.s32.totalorder %s16, 1
    %p69 = por %p67, %p68
    %p70 = scmp.ne.s32.totalorder %s61, %s62
    %p71 = scmp.eq.s32.totalorder %s16, 0
    %p72 = por %p70, %p71
    %p73 = scmp.ne.s32.totalorder %s61, %s62
    %p74 = scmp.eq.s32.totalorder %s17, 1
    %p75 = por %p73, %p74
    %p77 = scmp.ne.s32.totalorder %s62, %s76
    %p78 = scmp.eq.s32.totalorder %s17, 0
    %p79 = por %p77, %p78
    %s80 = ssub.s32 %s18, %s30
    %s81 = ssub.s32 %s19, %s26
    %s82 = sor.u32 %s80, %s81
    %p83 = scmp.eq.s32.totalorder %s82, 0
    %s85 = sadd.s32 %s84, 1
    %s86 = scalar_select %p83, %s84, %s85
    %p89 = pneg %p83
    %p90 = scmp.eq.s32.totalorder %s11, 1
    %p91 = por %p89, %p90
    %p92 = scmp.ne.s32.totalorder %s84, %s87
    %p93 = scmp.eq.s32.totalorder %s11, 0
    %p94 = por %p92, %p93
    %p95 = scmp.ne.s32.totalorder %s84, %s87
    %p96 = scmp.eq.s32.totalorder %s16, 1
    %p97 = por %p95, %p96
    %p98 = scmp.ne.s32.totalorder %s87, %s88
    %p99 = scmp.eq.s32.totalorder %s16, 0
    %p100 = por %p98, %p99
    %p101 = scmp.ne.s32.totalorder %s87, %s88
    %p102 = scmp.eq.s32.totalorder %s17, 1
    %p103 = por %p101, %p102
    %p105 = scmp.ne.s32.totalorder %s88, %s104
    %p106 = scmp.eq.s32.totalorder %s17, 0
    %p107 = por %p105, %p106
    %s108 = ssub.s32 %s18, %s30
    %s109 = ssub.s32 %s19, %s26
    %s110 = sor.u32 %s108, %s109
    %p111 = scmp.eq.s32.totalorder %s110, 0
    %s113 = sadd.s32 %s112, 1
    %s114 = scalar_select %p111, %s112, %s113
    %p117 = pneg %p111
    %p118 = scmp.eq.s32.totalorder %s11, 1
    %p119 = por %p117, %p118
    %p120 = scmp.ne.s32.totalorder %s112, %s115
    %p121 = scmp.eq.s32.totalorder %s11, 0
    %p122 = por %p120, %p121
    %p123 = scmp.ne.s32.totalorder %s112, %s115
    %p124 = scmp.eq.s32.totalorder %s16, 1
    %p125 = por %p123, %p124
    %p126 = scmp.ne.s32.totalorder %s115, %s116
    %p127 = scmp.eq.s32.totalorder %s16, 0
    %p128 = por %p126, %p127
    %p129 = scmp.ne.s32.totalorder %s115, %s116
    %p130 = scmp.eq.s32.totalorder %s17, 1
    %p131 = por %p129, %p130
    %p133 = scmp.ne.s32.totalorder %s116, %s132
    %p134 = scmp.eq.s32.totalorder %s17, 0
    %p135 = por %p133, %p134
    %s136 = ssub.s32 %s18, %s30
    %s137 = ssub.s32 %s19, %s26
    %s138 = sor.u32 %s136, %s137
    %p139 = scmp.eq.s32.totalorder %s138, 0
    %s141 = sadd.s32 %s140, 1
    %s142 = scalar_select %p139, %s140, %s141
    %p145 = pneg %p139
    %p146 = scmp.eq.s32.totalorder %s11, 1
    %p147 = por %p145, %p146
    %p148 = scmp.ne.s32.totalorder %s140, %s143
    %p149 = scmp.eq.s32.totalorder %s11, 0
    %p150 = por %p148, %p149
    %p151 = scmp.ne.s32.totalorder %s140, %s143
    %p152 = scmp.eq.s32.totalorder %s16, 1
    %p153 = por %p151, %p152
    %p154 = scmp.ne.s32.totalorder %s143, %s144
    %p155 = scmp.eq.s32.totalorder %s16, 0
    %p156 = por %p154, %p155
    %p157 = scmp.ne.s32.totalorder %s143, %s144
    %p158 = scmp.eq.s32.totalorder %s17, 1
    %p159 = por %p157, %p158
    %p161 = scmp.ne.s32.totalorder %s144, %s160
    %p162 = scmp.eq.s32.totalorder %s17, 0
    %p163 = por %p161, %p162
    %p164 = scmp.le.s32.totalorder 1, %s11
    %p165 = scmp.lt.s32.totalorder %s11, 3
    %p166 = pnand %p164, %p165
    %p167 = pneg %p166
    // Predicated region
    $region9: #{double_conv.4} parent=5 // pred_check
      _
    $region10: #{double_conv.4} parent=5 // pred_check_branch
      %169 = sbr.rel (%p166) target = $region12
    $region11: #{double_conv.4} parent=5 // pred_region
      %s170 = ssub.s32 %s11, 1
      // Predicated region
      $region13: #{double_conv.4} parent=11 // pred_check
        %p171 = pneg %p72
      $region14: #{double_conv.4} parent=11 // pred_check_branch
        %173 = sbr.rel (%p171) target = $region16
      $region15: #{double_conv.4} parent=11 // pred_region
        _
      $region16: #{double_conv.4} parent=11 // pred_fallthru
        _
    $region12: #{double_conv.4} parent=5 // pred_fallthru
      _
    %p174 = scmp.lt.s32.totalorder %s11, 2
    // Predicated region
    $region17: #{double_conv.4} parent=5 // pred_check
      %p175 = pneg %p174
    $region18: #{double_conv.4} parent=5 // pred_check_branch
      %177 = sbr.rel (%p175) target = $region20
    $region19: #{double_conv.4} parent=5 // pred_region
      // Predicated region
      $region21: #{double_conv.4} parent=19 // pred_check
        %p178 = pneg %p45
      $region22: #{double_conv.4} parent=19 // pred_check_branch
        %180 = sbr.rel (%p178) target = $region24
      $region23: #{double_conv.4} parent=19 // pred_region
        %p181 = scmp.lt.s32.totalorder %s18, 1
        %s182 = scalar_select %p181, %s18, 1
        %p183 = scmp.lt.s32.totalorder %s19, 0
        %s184 = scalar_select %p183, %s19, 0
        %s185 = smul.addr %s184, 54
        %s186 = smul.addr %s182, 54
        %s187 = sadd.s32 %s185, %s186
        %s188 = smul.addr %s187, 4
        %s189 = scalar_lea.vmem %s0, %s188
      $region24: #{double_conv.4} parent=19 // pred_fallthru
        _
    $region20: #{double_conv.4} parent=5 // pred_fallthru
      _
    %p190 = scmp.le.s32.totalorder 1, %s11
    %p191 = scmp.lt.s32.totalorder %s11, 3
    %p192 = pnand %p190, %p191
    %p193 = pneg %p192
    // Predicated region
    $region25: #{double_conv.4} parent=5 // pred_check
      _
    $region26: #{double_conv.4} parent=5 // pred_check_branch
      %195 = sbr.rel (%p192) target = $region28
    $region27: #{double_conv.4} parent=5 // pred_region
      %s196 = ssub.s32 %s11, 1
      %p197 = scmp.lt.s32.totalorder %s20, 1
      %s198 = scalar_select %p197, %s20, 1
      %p199 = scmp.lt.s32.totalorder %s21, 0
      %s200 = scalar_select %p199, %s21, 0
      %s201 = smul.addr %s200, 54
      %s202 = smul.addr %s198, 54
      %s203 = sadd.s32 %s201, %s202
      %s204 = smul.addr %s203, 4
      %s205 = scalar_lea.vmem %s0, %s204
      %p206 = pneg %p51
      %p207 = pneg %p48
      %p208 = pneg %p72
      %p209 = pneg %p69
      %p210 = pneg %p100
      %p211 = pneg %p97
      %s212 = smul.u32 16, %s21
      %p213 = scmp.lt.s32.totalorder %s20, 1
      %s214 = scalar_select %p213, %s20, 1
      %p215 = scmp.lt.s32.totalorder %s212, 15
      %s216 = scalar_select %p215, %s212, 15
      %s217 = smul.addr %s216, 2
      %s218 = smul.addr %s214, 32
      %s219 = sadd.s32 %s217, %s218
      %s220 = smul.addr %s219, 8
      %s221 = scalar_lea.vmem %s2, %s220
      %p222 = pneg %p128
      %p223 = pneg %p125
      %p224 = scmp.lt.s32.totalorder %s20, 1
      %s225 = scalar_select %p224, %s20, 1
      %p226 = scmp.lt.s32.totalorder %s21, 0
      %s227 = scalar_select %p226, %s21, 0
      %s228 = sadd.s32 %s227, %s225
      %s229 = scalar_lea.vmem %s3, %s228
      %p230 = pneg %p156
      %p231 = pneg %p153
      %p232 = scmp.lt.s32.totalorder %s20, 1
      %s233 = scalar_select %p232, %s20, 1
      %p234 = scmp.lt.s32.totalorder %s21, 0
      %s235 = scalar_select %p234, %s21, 0
      %s236 = sadd.s32 %s235, %s233
      %s237 = scalar_lea.vmem %s4, %s236
      %p238 = scmp.lt.s32.totalorder %s20, 1
      %s239 = scalar_select %p238, %s20, 1
      %p240 = scmp.lt.s32.totalorder %s21, 0
      %s241 = scalar_select %p240, %s21, 0
      %s242 = smul.addr %s241, 54
      %s243 = smul.addr %s239, 54
      %s244 = sadd.s32 %s242, %s243
      %s245 = smul.addr %s244, 4
      %s246 = scalar_lea.vmem %s0, %s245
      %s247 = smul.u32 16, %s21
      %p248 = scmp.lt.s32.totalorder %s20, 1
      %s249 = scalar_select %p248, %s20, 1
      %p250 = scmp.lt.s32.totalorder %s247, 15
      %s251 = scalar_select %p250, %s247, 15
      %s252 = smul.addr %s251, 2
      %s253 = smul.addr %s249, 32
      %s254 = sadd.s32 %s252, %s253
      %s255 = smul.addr %s254, 8
      %s256 = scalar_lea.vmem %s2, %s255
      %s257 = smul.u32 16, %s21
      %p258 = scmp.lt.s32.totalorder %s20, 1
      %s259 = scalar_select %p258, %s20, 1
      %p260 = scmp.lt.s32.totalorder %s21, 0
      %s261 = scalar_select %p260, %s21, 0
      %s262 = sadd.s32 %s261, %s259
      %s263 = scalar_lea.vmem %s3, %s262
      %p264 = scmp.lt.s32.totalorder %s20, 1
      %s265 = scalar_select %p264, %s20, 1
      %p266 = scmp.lt.s32.totalorder %s21, 0
      %s267 = scalar_select %p266, %s21, 0
      %s268 = sadd.s32 %s267, %s265
      %s269 = scalar_lea.vmem %s4, %s268
      %v271 = vld [vmem:[%s246] sm:$0xf]
      %v272 = vld [vmem:[%s246 + $0x4] sm:$0xf]
      %v273 = vld [vmem:[%s246 + $0x8] sm:$0x1]
      %v274 = vld [vmem:[%s246 + $0xc] sm:$0xf]
      %v275 = vld [vmem:[%s246 + $0x10] sm:$0xf]
      %v276 = vld [vmem:[%s246 + $0x14] sm:$0x1]
      %v277 = vld [vmem:[%s246 + $0x18] sm:$0xf]
      %v278 = vld [vmem:[%s246 + $0x1c] sm:$0xf]
      %v279 = vld [vmem:[%s246 + $0x20] sm:$0x1]
      %v280 = vld [vmem:[%s246 + $0x24] sm:$0xf]
      %v281 = vld [vmem:[%s246 + $0x28] sm:$0xf]
      %v282 = vld [vmem:[%s246 + $0x2c] sm:$0x1]
      %v283 = vld [vmem:[%s246 + $0x30] sm:$0xf]
      %v284 = vld [vmem:[%s246 + $0x34] sm:$0xf]
      %v285 = vld [vmem:[%s246 + $0x38] sm:$0x1]
      %v286 = vld [vmem:[%s246 + $0x3c] sm:$0xf]
      %v287 = vld [vmem:[%s246 + $0x40] sm:$0xf]
      %v288 = vld [vmem:[%s246 + $0x44] sm:$0x1]
      %v289 = vld [vmem:[%s246 + $0x48] sm:$0xf]
      %v290 = vld [vmem:[%s246 + $0x4c] sm:$0xf]
      %v291 = vld [vmem:[%s246 + $0x50] sm:$0x1]
      %v292 = vld [vmem:[%s246 + $0x54] sm:$0xf]
      %v293 = vld [vmem:[%s246 + $0x58] sm:$0xf]
      %v294 = vld [vmem:[%s246 + $0x5c] sm:$0x1]
      %v295 = vld [vmem:[%s246 + $0x60] sm:$0xf]
      %v296 = vld [vmem:[%s246 + $0x64] sm:$0xf]
      %v297 = vld [vmem:[%s246 + $0x68] sm:$0x1]
      %v298 = vld [vmem:[%s246 + $0x6c] sm:$0xf]
      %v299 = vld [vmem:[%s246 + $0x70] sm:$0xf]
      %v300 = vld [vmem:[%s246 + $0x74] sm:$0x1]
      %v301 = vld [vmem:[%s246 + $0x78] sm:$0xf]
      %v302 = vld [vmem:[%s246 + $0x7c] sm:$0xf]
      %v303 = vld [vmem:[%s246 + $0x80] sm:$0x1]
      %v304 = vld [vmem:[%s246 + $0x84] sm:$0xf]
      %v305 = vld [vmem:[%s246 + $0x88] sm:$0xf]
      %v306 = vld [vmem:[%s246 + $0x8c] sm:$0x1]
      %v307 = vld [vmem:[%s246 + $0x90] sm:$0xf]
      %v308 = vld [vmem:[%s246 + $0x94] sm:$0xf]
      %v309 = vld [vmem:[%s246 + $0x98] sm:$0x1]
      %v310 = vld [vmem:[%s246 + $0x9c] sm:$0xf]
      %v311 = vld [vmem:[%s246 + $0xa0] sm:$0xf]
      %v312 = vld [vmem:[%s246 + $0xa4] sm:$0x1]
      %v313 = vld [vmem:[%s246 + $0xa8] sm:$0xf]
      %v314 = vld [vmem:[%s246 + $0xac] sm:$0xf]
      %v315 = vld [vmem:[%s246 + $0xb0] sm:$0x1]
      %v316 = vld [vmem:[%s246 + $0xb4] sm:$0xf]
      %v317 = vld [vmem:[%s246 + $0xb8] sm:$0xf]
      %v318 = vld [vmem:[%s246 + $0xbc] sm:$0x1]
      %v319 = vld [vmem:[%s246 + $0xc0] sm:$0xf]
      %v320 = vld [vmem:[%s246 + $0xc4] sm:$0xf]
      %v321 = vld [vmem:[%s246 + $0xc8] sm:$0x1]
      %v322 = vld [vmem:[%s246 + $0xcc] sm:$0xf]
      %v323 = vld [vmem:[%s246 + $0xd0] sm:$0xf]
      %v324 = vld [vmem:[%s246 + $0xd4] sm:$0x1]
      %v325 = vld [vmem:[%s1] sm:$0xf]
      %v326 = vld [vmem:[%s1 + $0x4] sm:$0xf]
      %v327 = vld [vmem:[%s1 + $0x8] sm:$0xf]
      %v328 = vld [vmem:[%s1 + $0xc] sm:$0xf]
      %v329 = vld [vmem:[%s1 + $0x10] sm:$0xf]
      %v330 = vld [vmem:[%s1 + $0x14] sm:$0xf]
      %v331 = vld [vmem:[%s1 + $0x18] sm:$0xf]
      %v332 = vld [vmem:[%s1 + $0x1c] sm:$0xf]
      %v333 = vld [vmem:[%s1 + $0x20] sm:$0xf]
      %v334 = vld [vmem:[%s1 + $0x24] sm:$0xf]
      %v335 = vld [vmem:[%s1 + $0x28] sm:$0xf]
      %v336 = vld [vmem:[%s1 + $0x2c] sm:$0xf]
      %v337 = vld [vmem:[%s1 + $0x30] sm:$0xf]
      %v338 = vld [vmem:[%s1 + $0x34] sm:$0xf]
      %v339 = vld [vmem:[%s1 + $0x38] sm:$0xf]
      %v340 = vld [vmem:[%s1 + $0x3c] sm:$0xf]
      %vm341 = vsmask.f32 3328
      %vm342 = vsmask.f32 7440
      %vm343 = vmor %vm341, %vm342
      %v345 = vshrl.u32 %v271, 16
      %v347 = vrot.slane %v345, 4
      %v348 = vshll.u32 %v271, 16
      %v350 = vrot.slane %v348, 5
      %v351 = vor.u32 %v347, %v350
      %v352 = vrot.slane %v351, 4
      %v354 = vshll.u32 %v272, 16
      %v356 = vrot.slane %v354, 5
      %v357 = vsel %vm343, %v352, %v356
      %v358 = vshrl.u32 %v272, 16
      %v360 = vrot.slane %v358, 4
      %v361 = vor.u32 %v360, %v356
      %v362 = vrot.slane %v361, 4
      %v364 = vshll.u32 %v273, 16
      %v366 = vrot.slane %v364, 5
      %v367 = vsel %vm343, %v362, %v366
      %v369 = vshrl.u32 %v274, 16
      %v371 = vrot.slane %v369, 4
      %v372 = vshll.u32 %v274, 16
      %v374 = vrot.slane %v372, 5
      %v375 = vor.u32 %v371, %v374
      %v376 = vrot.slane %v375, 4
      %v378 = vshll.u32 %v275, 16
      %v380 = vrot.slane %v378, 5
      %v381 = vsel %vm343, %v376, %v380
      %v382 = vshrl.u32 %v275, 16
      %v384 = vrot.slane %v382, 4
      %v385 = vor.u32 %v384, %v380
      %v386 = vrot.slane %v385, 4
      %v388 = vshll.u32 %v276, 16
      %v390 = vrot.slane %v388, 5
      %v391 = vsel %vm343, %v386, %v390
      %v393 = vshrl.u32 %v277, 16
      %v395 = vrot.slane %v393, 4
      %v396 = vshll.u32 %v277, 16
      %v398 = vrot.slane %v396, 5
      %v399 = vor.u32 %v395, %v398
      %v400 = vrot.slane %v399, 4
      %v402 = vshll.u32 %v278, 16
      %v404 = vrot.slane %v402, 5
      %v405 = vsel %vm343, %v400, %v404
      %v406 = vshrl.u32 %v278, 16
      %v408 = vrot.slane %v406, 4
      %v409 = vor.u32 %v408, %v404
      %v410 = vrot.slane %v409, 4
      %v412 = vshll.u32 %v279, 16
      %v414 = vrot.slane %v412, 5
      %v415 = vsel %vm343, %v410, %v414
      %v417 = vshrl.u32 %v280, 16
      %v419 = vrot.slane %v417, 4
      %v420 = vshll.u32 %v280, 16
      %v422 = vrot.slane %v420, 5
      %v423 = vor.u32 %v419, %v422
      %v424 = vrot.slane %v423, 4
      %v426 = vshll.u32 %v281, 16
      %v428 = vrot.slane %v426, 5
      %v429 = vsel %vm343, %v424, %v428
      %v430 = vshrl.u32 %v281, 16
      %v432 = vrot.slane %v430, 4
      %v433 = vor.u32 %v432, %v428
      %v434 = vrot.slane %v433, 4
      %v436 = vshll.u32 %v282, 16
      %v438 = vrot.slane %v436, 5
      %v439 = vsel %vm343, %v434, %v438
      %v441 = vshrl.u32 %v283, 16
      %v443 = vrot.slane %v441, 4
      %v444 = vshll.u32 %v283, 16
      %v446 = vrot.slane %v444, 5
      %v447 = vor.u32 %v443, %v446
      %v448 = vrot.slane %v447, 4
      %v450 = vshll.u32 %v284, 16
      %v452 = vrot.slane %v450, 5
      %v453 = vsel %vm343, %v448, %v452
      %v454 = vshrl.u32 %v284, 16
      %v456 = vrot.slane %v454, 4
      %v457 = vor.u32 %v456, %v452
      %v458 = vrot.slane %v457, 4
      %v460 = vshll.u32 %v285, 16
      %v462 = vrot.slane %v460, 5
      %v463 = vsel %vm343, %v458, %v462
      %v465 = vshrl.u32 %v286, 16
      %v467 = vrot.slane %v465, 4
      %v468 = vshll.u32 %v286, 16
      %v470 = vrot.slane %v468, 5
      %v471 = vor.u32 %v467, %v470
      %v472 = vrot.slane %v471, 4
      %v474 = vshll.u32 %v287, 16
      %v476 = vrot.slane %v474, 5
      %v477 = vsel %vm343, %v472, %v476
      %v478 = vshrl.u32 %v287, 16
      %v480 = vrot.slane %v478, 4
      %v481 = vor.u32 %v480, %v476
      %v482 = vrot.slane %v481, 4
      %v484 = vshll.u32 %v288, 16
      %v486 = vrot.slane %v484, 5
      %v487 = vsel %vm343, %v482, %v486
      %v489 = vshrl.u32 %v289, 16
      %v491 = vrot.slane %v489, 4
      %v492 = vshll.u32 %v289, 16
      %v494 = vrot.slane %v492, 5
      %v495 = vor.u32 %v491, %v494
      %v496 = vrot.slane %v495, 4
      %v498 = vshll.u32 %v290, 16
      %v500 = vrot.slane %v498, 5
      %v501 = vsel %vm343, %v496, %v500
      %v502 = vshrl.u32 %v290, 16
      %v504 = vrot.slane %v502, 4
      %v505 = vor.u32 %v504, %v500
      %v506 = vrot.slane %v505, 4
      %v508 = vshll.u32 %v291, 16
      %v510 = vrot.slane %v508, 5
      %v511 = vsel %vm343, %v506, %v510
      %v513 = vshrl.u32 %v292, 16
      %v515 = vrot.slane %v513, 4
      %v516 = vshll.u32 %v292, 16
      %v518 = vrot.slane %v516, 5
      %v519 = vor.u32 %v515, %v518
      %v520 = vrot.slane %v519, 4
      %v522 = vshll.u32 %v293, 16
      %v524 = vrot.slane %v522, 5
      %v525 = vsel %vm343, %v520, %v524
      %v526 = vshrl.u32 %v293, 16
      %v528 = vrot.slane %v526, 4
      %v529 = vor.u32 %v528, %v524
      %v530 = vrot.slane %v529, 4
      %v532 = vshll.u32 %v294, 16
      %v534 = vrot.slane %v532, 5
      %v535 = vsel %vm343, %v530, %v534
      %v537 = vshrl.u32 %v295, 16
      %v539 = vrot.slane %v537, 4
      %v540 = vshll.u32 %v295, 16
      %v542 = vrot.slane %v540, 5
      %v543 = vor.u32 %v539, %v542
      %v544 = vrot.slane %v543, 4
      %v546 = vshll.u32 %v296, 16
      %v548 = vrot.slane %v546, 5
      %v549 = vsel %vm343, %v544, %v548
      %v550 = vshrl.u32 %v296, 16
      %v552 = vrot.slane %v550, 4
      %v553 = vor.u32 %v552, %v548
      %v554 = vrot.slane %v553, 4
      %v556 = vshll.u32 %v297, 16
      %v558 = vrot.slane %v556, 5
      %v559 = vsel %vm343, %v554, %v558
      %v561 = vshrl.u32 %v298, 16
      %v563 = vrot.slane %v561, 4
      %v564 = vshll.u32 %v298, 16
      %v566 = vrot.slane %v564, 5
      %v567 = vor.u32 %v563, %v566
      %v568 = vrot.slane %v567, 4
      %v570 = vshll.u32 %v299, 16
      %v572 = vrot.slane %v570, 5
      %v573 = vsel %vm343, %v568, %v572
      %v574 = vshrl.u32 %v299, 16
      %v576 = vrot.slane %v574, 4
      %v577 = vor.u32 %v576, %v572
      %v578 = vrot.slane %v577, 4
      %v580 = vshll.u32 %v300, 16
      %v582 = vrot.slane %v580, 5
      %v583 = vsel %vm343, %v578, %v582
      %v585 = vshrl.u32 %v301, 16
      %v587 = vrot.slane %v585, 4
      %v588 = vshll.u32 %v301, 16
      %v590 = vrot.slane %v588, 5
      %v591 = vor.u32 %v587, %v590
      %v592 = vrot.slane %v591, 4
      %v594 = vshll.u32 %v302, 16
      %v596 = vrot.slane %v594, 5
      %v597 = vsel %vm343, %v592, %v596
      %v598 = vshrl.u32 %v302, 16
      %v600 = vrot.slane %v598, 4
      %v601 = vor.u32 %v600, %v596
      %v602 = vrot.slane %v601, 4
      %v604 = vshll.u32 %v303, 16
      %v606 = vrot.slane %v604, 5
      %v607 = vsel %vm343, %v602, %v606
      %v609 = vshrl.u32 %v304, 16
      %v611 = vrot.slane %v609, 4
      %v612 = vshll.u32 %v304, 16
      %v614 = vrot.slane %v612, 5
      %v615 = vor.u32 %v611, %v614
      %v616 = vrot.slane %v615, 4
      %v618 = vshll.u32 %v305, 16
      %v620 = vrot.slane %v618, 5
      %v621 = vsel %vm343, %v616, %v620
      %v622 = vshrl.u32 %v305, 16
      %v624 = vrot.slane %v622, 4
      %v625 = vor.u32 %v624, %v620
      %v626 = vrot.slane %v625, 4
      %v628 = vshll.u32 %v306, 16
      %v630 = vrot.slane %v628, 5
      %v631 = vsel %vm343, %v626, %v630
      %v633 = vshrl.u32 %v307, 16
      %v635 = vrot.slane %v633, 4
      %v636 = vshll.u32 %v307, 16
      %v638 = vrot.slane %v636, 5
      %v639 = vor.u32 %v635, %v638
      %v640 = vrot.slane %v639, 4
      %v642 = vshll.u32 %v308, 16
      %v644 = vrot.slane %v642, 5
      %v645 = vsel %vm343, %v640, %v644
      %v646 = vshrl.u32 %v308, 16
      %v648 = vrot.slane %v646, 4
      %v649 = vor.u32 %v648, %v644
      %v650 = vrot.slane %v649, 4
      %v652 = vshll.u32 %v309, 16
      %v654 = vrot.slane %v652, 5
      %v655 = vsel %vm343, %v650, %v654
      %v657 = vshrl.u32 %v310, 16
      %v659 = vrot.slane %v657, 4
      %v660 = vshll.u32 %v310, 16
      %v662 = vrot.slane %v660, 5
      %v663 = vor.u32 %v659, %v662
      %v664 = vrot.slane %v663, 4
      %v666 = vshll.u32 %v311, 16
      %v668 = vrot.slane %v666, 5
      %v669 = vsel %vm343, %v664, %v668
      %v670 = vshrl.u32 %v311, 16
      %v672 = vrot.slane %v670, 4
      %v673 = vor.u32 %v672, %v668
      %v674 = vrot.slane %v673, 4
      %v676 = vshll.u32 %v312, 16
      %v678 = vrot.slane %v676, 5
      %v679 = vsel %vm343, %v674, %v678
      %v681 = vshrl.u32 %v313, 16
      %v683 = vrot.slane %v681, 4
      %v684 = vshll.u32 %v313, 16
      %v686 = vrot.slane %v684, 5
      %v687 = vor.u32 %v683, %v686
      %v688 = vrot.slane %v687, 4
      %v690 = vshll.u32 %v314, 16
      %v692 = vrot.slane %v690, 5
      %v693 = vsel %vm343, %v688, %v692
      %v694 = vshrl.u32 %v314, 16
      %v696 = vrot.slane %v694, 4
      %v697 = vor.u32 %v696, %v692
      %v698 = vrot.slane %v697, 4
      %v700 = vshll.u32 %v315, 16
      %v702 = vrot.slane %v700, 5
      %v703 = vsel %vm343, %v698, %v702
      %v705 = vshrl.u32 %v316, 16
      %v707 = vrot.slane %v705, 4
      %v708 = vshll.u32 %v316, 16
      %v710 = vrot.slane %v708, 5
      %v711 = vor.u32 %v707, %v710
      %v712 = vrot.slane %v711, 4
      %v714 = vshll.u32 %v317, 16
      %v716 = vrot.slane %v714, 5
      %v717 = vsel %vm343, %v712, %v716
      %v718 = vshrl.u32 %v317, 16
      %v720 = vrot.slane %v718, 4
      %v721 = vor.u32 %v720, %v716
      %v722 = vrot.slane %v721, 4
      %v724 = vshll.u32 %v318, 16
      %v726 = vrot.slane %v724, 5
      %v727 = vsel %vm343, %v722, %v726
      %s728 = scalar_lea.vmem %s1, 64
      %v729 = vld [vmem:[%s728] sm:$0xf]
      %v730 = vld [vmem:[%s728 + $0x4] sm:$0xf]
      %v731 = vld [vmem:[%s728 + $0x8] sm:$0xf]
      %v732 = vld [vmem:[%s728 + $0xc] sm:$0xf]
      %v733 = vld [vmem:[%s728 + $0x10] sm:$0xf]
      %v734 = vld [vmem:[%s728 + $0x14] sm:$0xf]
      %v735 = vld [vmem:[%s728 + $0x18] sm:$0xf]
      %v736 = vld [vmem:[%s728 + $0x1c] sm:$0xf]
      %v737 = vld [vmem:[%s728 + $0x20] sm:$0xf]
      %v738 = vld [vmem:[%s728 + $0x24] sm:$0xf]
      %v739 = vld [vmem:[%s728 + $0x28] sm:$0xf]
      %v740 = vld [vmem:[%s728 + $0x2c] sm:$0xf]
      %v741 = vld [vmem:[%s728 + $0x30] sm:$0xf]
      %v742 = vld [vmem:[%s728 + $0x34] sm:$0xf]
      %v743 = vld [vmem:[%s728 + $0x38] sm:$0xf]
      %v744 = vld [vmem:[%s728 + $0x3c] sm:$0xf]
      %v745 = vunpack.c.l.b16 %v357
      %v746 = vunpack.c.l.b16 %v367
      %v747 = vunpack.c.l.b16 %v381
      %v748 = vunpack.c.l.b16 %v391
      %v749 = vunpack.c.l.b16 %v405
      %v750 = vunpack.c.l.b16 %v415
      %v751 = vunpack.c.l.b16 %v429
      %v752 = vunpack.c.l.b16 %v439
      %v753 = vunpack.c.l.b16 %v453
      %v754 = vunpack.c.l.b16 %v463
      %v755 = vunpack.c.l.b16 %v477
      %v756 = vunpack.c.l.b16 %v487
      %v757 = vunpack.c.l.b16 %v501
      %v758 = vunpack.c.l.b16 %v511
      %v759 = vunpack.c.l.b16 %v525
      %v760 = vunpack.c.l.b16 %v535
      %v761 = vunpack.c.l.b16 %v549
      %v762 = vunpack.c.l.b16 %v559
      %v763 = vunpack.c.l.b16 %v573
      %v764 = vunpack.c.l.b16 %v583
      %v765 = vunpack.c.l.b16 %v597
      %v766 = vunpack.c.l.b16 %v607
      %v767 = vunpack.c.l.b16 %v621
      %v768 = vunpack.c.l.b16 %v631
      %v769 = vunpack.c.l.b16 %v645
      %v770 = vunpack.c.l.b16 %v655
      %v771 = vunpack.c.l.b16 %v669
      %v772 = vunpack.c.l.b16 %v679
      %v773 = vunpack.c.l.b16 %v693
      %v774 = vunpack.c.l.b16 %v703
      %v775 = vunpack.c.l.b16 %v717
      %v776 = vunpack.c.l.b16 %v727
      %v777 = vpack.c.b16 %v746, %v745
      %v778 = vpack.c.b16 %v748, %v747
      %v779 = vpack.c.b16 %v750, %v749
      %v780 = vpack.c.b16 %v752, %v751
      %v781 = vpack.c.b16 %v754, %v753
      %v782 = vpack.c.b16 %v756, %v755
      %v783 = vpack.c.b16 %v758, %v757
      %v784 = vpack.c.b16 %v760, %v759
      %v785 = vpack.c.b16 %v762, %v761
      %v786 = vpack.c.b16 %v764, %v763
      %v787 = vpack.c.b16 %v766, %v765
      %v788 = vpack.c.b16 %v768, %v767
      %v789 = vpack.c.b16 %v770, %v769
      %v790 = vpack.c.b16 %v772, %v771
      %v791 = vpack.c.b16 %v774, %v773
      %v792 = vpack.c.b16 %v776, %v775
      %v825 = vunpack.c.l.b16 %v729
      %v826 = vunpack.c.l.b16 %v730
      %v827 = vunpack.c.l.b16 %v731
      %v828 = vunpack.c.l.b16 %v732
      %v829 = vunpack.c.l.b16 %v733
      %v830 = vunpack.c.l.b16 %v734
      %v831 = vunpack.c.l.b16 %v735
      %v832 = vunpack.c.l.b16 %v736
      %v833 = vunpack.c.l.b16 %v737
      %v834 = vunpack.c.l.b16 %v738
      %v835 = vunpack.c.l.b16 %v739
      %v836 = vunpack.c.l.b16 %v740
      %v837 = vunpack.c.l.b16 %v741
      %v838 = vunpack.c.l.b16 %v742
      %v839 = vunpack.c.l.b16 %v743
      %v840 = vunpack.c.l.b16 %v744
      %v841 = vpack.c.b16 %v826, %v825
      %v842 = vpack.c.b16 %v828, %v827
      %v843 = vpack.c.b16 %v830, %v829
      %v844 = vpack.c.b16 %v832, %v831
      %v845 = vpack.c.b16 %v834, %v833
      %v846 = vpack.c.b16 %v836, %v835
      %v847 = vpack.c.b16 %v838, %v837
      %v848 = vpack.c.b16 %v840, %v839
      %857 = vmatprep.subr.bf16.mxu0 0
      %858 = vmatpush1.bf16.msra.mxu0 %v848
      %859 = vmatprep.subr.bf16.mxu0 0
      %860 = vmatpush1.bf16.msra.mxu0 %v847
      %861 = vmatprep.subr.bf16.mxu0 0
      %862 = vmatpush1.bf16.msra.mxu0 %v846
      %863 = vmatprep.subr.bf16.mxu0 0
      %864 = vmatpush1.bf16.msra.mxu0 %v845
      %865 = vmatprep.subr.bf16.mxu0 0
      %866 = vmatpush1.bf16.msra.mxu0 %v844
      %867 = vmatprep.subr.bf16.mxu0 0
      %868 = vmatpush1.bf16.msra.mxu0 %v843
      %869 = vmatprep.subr.bf16.mxu0 0
      %870 = vmatpush1.bf16.msra.mxu0 %v842
      %871 = vmatprep.subr.bf16.mxu0 0
      %872 = vmatpush1.bf16.msra.mxu0 %v841
      %873 = vmatprep.subr.bf16.mxu0 0
      %874 = vmatpush2.bf16.msra.mxu0 0
      %875 = vmatprep.subr.bf16.mxu0 0
      %876 = vmatpush2.bf16.msra.mxu0 0
      %877 = vmatprep.subr.bf16.mxu0 0
      %878 = vmatpush2.bf16.msra.mxu0 0
      %879 = vmatprep.subr.bf16.mxu0 0
      %880 = vmatpush2.bf16.msra.mxu0 0
      %881 = vmatprep.subr.bf16.mxu0 0
      %882 = vmatpush2.bf16.msra.mxu0 0
      %883 = vmatprep.subr.bf16.mxu0 0
      %884 = vmatpush2.bf16.msra.mxu0 0
      %885 = vmatprep.subr.bf16.mxu0 0
      %886 = vmatpush2.bf16.msra.mxu0 0
      %887 = vmatprep.subr.bf16.mxu0 0
      %888 = vmatpush2.bf16.msra.mxu0 0
      %889 = vmatprep.mubr.bf16.mxu0 0
      %890 = vmatmul.mubr.bf16.gmra.mxu0 %v777
      %v891 = vpop.f32.mrf.mxu0
      %v892 = vadd.f32 0.0, %v891
      %v893 = vpop.f32.mrf.mxu0
      %v894 = vpop.f32.mrf.mxu0
      %v895 = vadd.f32 0.0, %v894
      %v896 = vpop.f32.mrf.mxu0
      %897 = vmatprep.mubr.bf16.mxu0 0
      %898 = vmatmul.mubr.bf16.gmra.mxu0 %v778
      %v899 = vpop.f32.mrf.mxu0
      %v900 = vadd.f32 0.0, %v899
      %v901 = vpop.f32.mrf.mxu0
      %v902 = vpop.f32.mrf.mxu0
      %v903 = vadd.f32 0.0, %v902
      %v904 = vpop.f32.mrf.mxu0
      %905 = vmatprep.mubr.bf16.mxu0 0
      %906 = vmatmul.mubr.bf16.gmra.mxu0 %v779
      %v907 = vpop.f32.mrf.mxu0
      %v908 = vadd.f32 0.0, %v907
      %v909 = vpop.f32.mrf.mxu0
      %v910 = vpop.f32.mrf.mxu0
      %v911 = vadd.f32 0.0, %v910
      %v912 = vpop.f32.mrf.mxu0
      %913 = vmatprep.mubr.bf16.mxu0 0
      %914 = vmatmul.mubr.bf16.gmra.mxu0 %v780
      %v915 = vpop.f32.mrf.mxu0
      %v916 = vadd.f32 0.0, %v915
      %v917 = vpop.f32.mrf.mxu0
      %v918 = vpop.f32.mrf.mxu0
      %v919 = vadd.f32 0.0, %v918
      %v920 = vpop.f32.mrf.mxu0
      %921 = vmatprep.mubr.bf16.mxu0 0
      %922 = vmatmul.mubr.bf16.gmra.mxu0 %v781
      %v923 = vpop.f32.mrf.mxu0
      %v924 = vadd.f32 0.0, %v923
      %v925 = vpop.f32.mrf.mxu0
      %v926 = vpop.f32.mrf.mxu0
      %v927 = vadd.f32 0.0, %v926
      %v928 = vpop.f32.mrf.mxu0
      %929 = vmatprep.mubr.bf16.mxu0 0
      %930 = vmatmul.mubr.bf16.gmra.mxu0 %v782
      %v931 = vpop.f32.mrf.mxu0
      %v932 = vadd.f32 0.0, %v931
      %v933 = vpop.f32.mrf.mxu0
      %v934 = vpop.f32.mrf.mxu0
      %v935 = vadd.f32 0.0, %v934
      %v936 = vpop.f32.mrf.mxu0
      %937 = vmatprep.mubr.bf16.mxu0 0
      %938 = vmatmul.mubr.bf16.gmra.mxu0 %v783
      %v939 = vpop.f32.mrf.mxu0
      %v940 = vadd.f32 0.0, %v939
      %v941 = vpop.f32.mrf.mxu0
      %v942 = vpop.f32.mrf.mxu0
      %v943 = vadd.f32 0.0, %v942
      %v944 = vpop.f32.mrf.mxu0
      %945 = vmatprep.mubr.bf16.mxu0 0
      %946 = vmatmul.mubr.bf16.gmra.mxu0 %v784
      %v947 = vpop.f32.mrf.mxu0
      %v948 = vadd.f32 0.0, %v947
      %v949 = vpop.f32.mrf.mxu0
      %v950 = vpop.f32.mrf.mxu0
      %v951 = vadd.f32 0.0, %v950
      %v952 = vpop.f32.mrf.mxu0
      %953 = vmatprep.mubr.bf16.mxu0 0
      %954 = vmatmul.mubr.bf16.gmra.mxu0 %v785
      %v955 = vpop.f32.mrf.mxu0
      %v956 = vadd.f32 0.0, %v955
      %v957 = vpop.f32.mrf.mxu0
      %v958 = vpop.f32.mrf.mxu0
      %v959 = vadd.f32 0.0, %v958
      %v960 = vpop.f32.mrf.mxu0
      %961 = vmatprep.mubr.bf16.mxu0 0
      %962 = vmatmul.mubr.bf16.gmra.mxu0 %v786
      %v963 = vpop.f32.mrf.mxu0
      %v964 = vadd.f32 0.0, %v963
      %v965 = vpop.f32.mrf.mxu0
      %v966 = vpop.f32.mrf.mxu0
      %v967 = vadd.f32 0.0, %v966
      %v968 = vpop.f32.mrf.mxu0
      %969 = vmatprep.mubr.bf16.mxu0 0
      %970 = vmatmul.mubr.bf16.gmra.mxu0 %v787
      %v971 = vpop.f32.mrf.mxu0
      %v972 = vadd.f32 0.0, %v971
      %v973 = vpop.f32.mrf.mxu0
      %v974 = vpop.f32.mrf.mxu0
      %v975 = vadd.f32 0.0, %v974
      %v976 = vpop.f32.mrf.mxu0
      %977 = vmatprep.mubr.bf16.mxu0 0
      %978 = vmatmul.mubr.bf16.gmra.mxu0 %v788
      %v979 = vpop.f32.mrf.mxu0
      %v980 = vadd.f32 0.0, %v979
      %v981 = vpop.f32.mrf.mxu0
      %v982 = vpop.f32.mrf.mxu0
      %v983 = vadd.f32 0.0, %v982
      %v984 = vpop.f32.mrf.mxu0
      %985 = vmatprep.mubr.bf16.mxu0 0
      %986 = vmatmul.mubr.bf16.gmra.mxu0 %v789
      %v987 = vpop.f32.mrf.mxu0
      %v988 = vadd.f32 0.0, %v987
      %v989 = vpop.f32.mrf.mxu0
      %v990 = vpop.f32.mrf.mxu0
      %v991 = vadd.f32 0.0, %v990
      %v992 = vpop.f32.mrf.mxu0
      %993 = vmatprep.mubr.bf16.mxu0 0
      %994 = vmatmul.mubr.bf16.gmra.mxu0 %v790
      %v995 = vpop.f32.mrf.mxu0
      %v996 = vadd.f32 0.0, %v995
      %v997 = vpop.f32.mrf.mxu0
      %v998 = vpop.f32.mrf.mxu0
      %v999 = vadd.f32 0.0, %v998
      %v1000 = vpop.f32.mrf.mxu0
      %1001 = vmatprep.mubr.bf16.mxu0 0
      %1002 = vmatmul.mubr.bf16.gmra.mxu0 %v791
      %v1003 = vpop.f32.mrf.mxu0
      %v1004 = vadd.f32 0.0, %v1003
      %v1005 = vpop.f32.mrf.mxu0
      %v1006 = vpop.f32.mrf.mxu0
      %v1007 = vadd.f32 0.0, %v1006
      %v1008 = vpop.f32.mrf.mxu0
      %1009 = vmatprep.mubr.bf16.mxu0 0
      %1010 = vmatmul.mubr.bf16.gmra.mxu0 %v792
      %v1011 = vpop.f32.mrf.mxu0
      %v1012 = vadd.f32 0.0, %v1011
      %v1013 = vpop.f32.mrf.mxu0
      %v1014 = vpop.f32.mrf.mxu0
      %v1015 = vadd.f32 0.0, %v1014
      %v1016 = vpop.f32.mrf.mxu0
      %1017 = vdwg.mxu0
      %v1050 = vunpack.c.l.b16 %v271
      %v1051 = vunpack.c.l.b16 %v272
      %v1052 = vunpack.c.l.b16 %v274
      %v1053 = vunpack.c.l.b16 %v275
      %v1054 = vunpack.c.l.b16 %v277
      %v1055 = vunpack.c.l.b16 %v278
      %v1056 = vunpack.c.l.b16 %v280
      %v1057 = vunpack.c.l.b16 %v281
      %v1058 = vunpack.c.l.b16 %v283
      %v1059 = vunpack.c.l.b16 %v284
      %v1060 = vunpack.c.l.b16 %v286
      %v1061 = vunpack.c.l.b16 %v287
      %v1062 = vunpack.c.l.b16 %v289
      %v1063 = vunpack.c.l.b16 %v290
      %v1064 = vunpack.c.l.b16 %v292
      %v1065 = vunpack.c.l.b16 %v293
      %v1066 = vunpack.c.l.b16 %v295
      %v1067 = vunpack.c.l.b16 %v296
      %v1068 = vunpack.c.l.b16 %v298
      %v1069 = vunpack.c.l.b16 %v299
      %v1070 = vunpack.c.l.b16 %v301
      %v1071 = vunpack.c.l.b16 %v302
      %v1072 = vunpack.c.l.b16 %v304
      %v1073 = vunpack.c.l.b16 %v305
      %v1074 = vunpack.c.l.b16 %v307
      %v1075 = vunpack.c.l.b16 %v308
      %v1076 = vunpack.c.l.b16 %v310
      %v1077 = vunpack.c.l.b16 %v311
      %v1078 = vunpack.c.l.b16 %v313
      %v1079 = vunpack.c.l.b16 %v314
      %v1080 = vunpack.c.l.b16 %v316
      %v1081 = vunpack.c.l.b16 %v317
      %v1082 = vpack.c.b16 %v1051, %v1050
      %v1083 = vpack.c.b16 %v1053, %v1052
      %v1084 = vpack.c.b16 %v1055, %v1054
      %v1085 = vpack.c.b16 %v1057, %v1056
      %v1086 = vpack.c.b16 %v1059, %v1058
      %v1087 = vpack.c.b16 %v1061, %v1060
      %v1088 = vpack.c.b16 %v1063, %v1062
      %v1089 = vpack.c.b16 %v1065, %v1064
      %v1090 = vpack.c.b16 %v1067, %v1066
      %v1091 = vpack.c.b16 %v1069, %v1068
      %v1092 = vpack.c.b16 %v1071, %v1070
      %v1093 = vpack.c.b16 %v1073, %v1072
      %v1094 = vpack.c.b16 %v1075, %v1074
      %v1095 = vpack.c.b16 %v1077, %v1076
      %v1096 = vpack.c.b16 %v1079, %v1078
      %v1097 = vpack.c.b16 %v1081, %v1080
      %v1130 = vunpack.c.l.b16 %v325
      %v1131 = vunpack.c.l.b16 %v326
      %v1132 = vunpack.c.l.b16 %v327
      %v1133 = vunpack.c.l.b16 %v328
      %v1134 = vunpack.c.l.b16 %v329
      %v1135 = vunpack.c.l.b16 %v330
      %v1136 = vunpack.c.l.b16 %v331
      %v1137 = vunpack.c.l.b16 %v332
      %v1138 = vunpack.c.l.b16 %v333
      %v1139 = vunpack.c.l.b16 %v334
      %v1140 = vunpack.c.l.b16 %v335
      %v1141 = vunpack.c.l.b16 %v336
      %v1142 = vunpack.c.l.b16 %v337
      %v1143 = vunpack.c.l.b16 %v338
      %v1144 = vunpack.c.l.b16 %v339
      %v1145 = vunpack.c.l.b16 %v340
      %v1146 = vpack.c.b16 %v1131, %v1130
      %v1147 = vpack.c.b16 %v1133, %v1132
      %v1148 = vpack.c.b16 %v1135, %v1134
      %v1149 = vpack.c.b16 %v1137, %v1136
      %v1150 = vpack.c.b16 %v1139, %v1138
      %v1151 = vpack.c.b16 %v1141, %v1140
      %v1152 = vpack.c.b16 %v1143, %v1142
      %v1153 = vpack.c.b16 %v1145, %v1144
      %1162 = vmatprep.subr.bf16.mxu0 0
      %1163 = vmatpush1.bf16.msra.mxu0 %v1153
      %1164 = vmatprep.subr.bf16.mxu0 0
      %1165 = vmatpush1.bf16.msra.mxu0 %v1152
      %1166 = vmatprep.subr.bf16.mxu0 0
      %1167 = vmatpush1.bf16.msra.mxu0 %v1151
      %1168 = vmatprep.subr.bf16.mxu0 0
      %1169 = vmatpush1.bf16.msra.mxu0 %v1150
      %1170 = vmatprep.subr.bf16.mxu0 0
      %1171 = vmatpush1.bf16.msra.mxu0 %v1149
      %1172 = vmatprep.subr.bf16.mxu0 0
      %1173 = vmatpush1.bf16.msra.mxu0 %v1148
      %1174 = vmatprep.subr.bf16.mxu0 0
      %1175 = vmatpush1.bf16.msra.mxu0 %v1147
      %1176 = vmatprep.subr.bf16.mxu0 0
      %1177 = vmatpush1.bf16.msra.mxu0 %v1146
      %1178 = vmatprep.subr.bf16.mxu0 0
      %1179 = vmatpush2.bf16.msra.mxu0 0
      %1180 = vmatprep.subr.bf16.mxu0 0
      %1181 = vmatpush2.bf16.msra.mxu0 0
      %1182 = vmatprep.subr.bf16.mxu0 0
      %1183 = vmatpush2.bf16.msra.mxu0 0
      %1184 = vmatprep.subr.bf16.mxu0 0
      %1185 = vmatpush2.bf16.msra.mxu0 0
      %1186 = vmatprep.subr.bf16.mxu0 0
      %1187 = vmatpush2.bf16.msra.mxu0 0
      %1188 = vmatprep.subr.bf16.mxu0 0
      %1189 = vmatpush2.bf16.msra.mxu0 0
      %1190 = vmatprep.subr.bf16.mxu0 0
      %1191 = vmatpush2.bf16.msra.mxu0 0
      %1192 = vmatprep.subr.bf16.mxu0 0
      %1193 = vmatpush2.bf16.msra.mxu0 0
      %1194 = vmatprep.mubr.bf16.mxu0 0
      %1195 = vmatmul.mubr.bf16.gmra.mxu0 %v1082
      %v1196 = vpop.f32.mrf.mxu0
      %v1197 = vadd.f32 %v892, %v1196
      %v1198 = vpop.f32.mrf.mxu0
      %v1199 = vpop.f32.mrf.mxu0
      %v1200 = vadd.f32 %v895, %v1199
      %v1201 = vpop.f32.mrf.mxu0
      %1202 = vmatprep.mubr.bf16.mxu0 0
      %1203 = vmatmul.mubr.bf16.gmra.mxu0 %v1083
      %v1204 = vpop.f32.mrf.mxu0
      %v1205 = vadd.f32 %v900, %v1204
      %v1206 = vpop.f32.mrf.mxu0
      %v1207 = vpop.f32.mrf.mxu0
      %v1208 = vadd.f32 %v903, %v1207
      %v1209 = vpop.f32.mrf.mxu0
      %1210 = vmatprep.mubr.bf16.mxu0 0
      %1211 = vmatmul.mubr.bf16.gmra.mxu0 %v1084
      %v1212 = vpop.f32.mrf.mxu0
      %v1213 = vadd.f32 %v908, %v1212
      %v1214 = vpop.f32.mrf.mxu0
      %v1215 = vpop.f32.mrf.mxu0
      %v1216 = vadd.f32 %v911, %v1215
      %v1217 = vpop.f32.mrf.mxu0
      %1218 = vmatprep.mubr.bf16.mxu0 0
      %1219 = vmatmul.mubr.bf16.gmra.mxu0 %v1085
      %v1220 = vpop.f32.mrf.mxu0
      %v1221 = vadd.f32 %v916, %v1220
      %v1222 = vpop.f32.mrf.mxu0
      %v1223 = vpop.f32.mrf.mxu0
      %v1224 = vadd.f32 %v919, %v1223
      %v1225 = vpop.f32.mrf.mxu0
      %1226 = vmatprep.mubr.bf16.mxu0 0
      %1227 = vmatmul.mubr.bf16.gmra.mxu0 %v1086
      %v1228 = vpop.f32.mrf.mxu0
      %v1229 = vadd.f32 %v924, %v1228
      %v1230 = vpop.f32.mrf.mxu0
      %v1231 = vpop.f32.mrf.mxu0
      %v1232 = vadd.f32 %v927, %v1231
      %v1233 = vpop.f32.mrf.mxu0
      %1234 = vmatprep.mubr.bf16.mxu0 0
      %1235 = vmatmul.mubr.bf16.gmra.mxu0 %v1087
      %v1236 = vpop.f32.mrf.mxu0
      %v1237 = vadd.f32 %v932, %v1236
      %v1238 = vpop.f32.mrf.mxu0
      %v1239 = vpop.f32.mrf.mxu0
      %v1240 = vadd.f32 %v935, %v1239
      %v1241 = vpop.f32.mrf.mxu0
      %1242 = vmatprep.mubr.bf16.mxu0 0
      %1243 = vmatmul.mubr.bf16.gmra.mxu0 %v1088
      %v1244 = vpop.f32.mrf.mxu0
      %v1245 = vadd.f32 %v940, %v1244
      %v1246 = vpop.f32.mrf.mxu0
      %v1247 = vpop.f32.mrf.mxu0
      %v1248 = vadd.f32 %v943, %v1247
      %v1249 = vpop.f32.mrf.mxu0
      %1250 = vmatprep.mubr.bf16.mxu0 0
      %1251 = vmatmul.mubr.bf16.gmra.mxu0 %v1089
      %v1252 = vpop.f32.mrf.mxu0
      %v1253 = vadd.f32 %v948, %v1252
      %v1254 = vpop.f32.mrf.mxu0
      %v1255 = vpop.f32.mrf.mxu0
      %v1256 = vadd.f32 %v951, %v1255
      %v1257 = vpop.f32.mrf.mxu0
      %1258 = vmatprep.mubr.bf16.mxu0 0
      %1259 = vmatmul.mubr.bf16.gmra.mxu0 %v1090
      %v1260 = vpop.f32.mrf.mxu0
      %v1261 = vadd.f32 %v956, %v1260
      %v1262 = vpop.f32.mrf.mxu0
      %v1263 = vpop.f32.mrf.mxu0
      %v1264 = vadd.f32 %v959, %v1263
      %v1265 = vpop.f32.mrf.mxu0
      %1266 = vmatprep.mubr.bf16.mxu0 0
      %1267 = vmatmul.mubr.bf16.gmra.mxu0 %v1091
      %v1268 = vpop.f32.mrf.mxu0
      %v1269 = vadd.f32 %v964, %v1268
      %v1270 = vpop.f32.mrf.mxu0
      %v1271 = vpop.f32.mrf.mxu0
      %v1272 = vadd.f32 %v967, %v1271
      %v1273 = vpop.f32.mrf.mxu0
      %1274 = vmatprep.mubr.bf16.mxu0 0
      %1275 = vmatmul.mubr.bf16.gmra.mxu0 %v1092
      %v1276 = vpop.f32.mrf.mxu0
      %v1277 = vadd.f32 %v972, %v1276
      %v1278 = vpop.f32.mrf.mxu0
      %v1279 = vpop.f32.mrf.mxu0
      %v1280 = vadd.f32 %v975, %v1279
      %v1281 = vpop.f32.mrf.mxu0
      %1282 = vmatprep.mubr.bf16.mxu0 0
      %1283 = vmatmul.mubr.bf16.gmra.mxu0 %v1093
      %v1284 = vpop.f32.mrf.mxu0
      %v1285 = vadd.f32 %v980, %v1284
      %v1286 = vpop.f32.mrf.mxu0
      %v1287 = vpop.f32.mrf.mxu0
      %v1288 = vadd.f32 %v983, %v1287
      %v1289 = vpop.f32.mrf.mxu0
      %1290 = vmatprep.mubr.bf16.mxu0 0
      %1291 = vmatmul.mubr.bf16.gmra.mxu0 %v1094
      %v1292 = vpop.f32.mrf.mxu0
      %v1293 = vadd.f32 %v988, %v1292
      %v1294 = vpop.f32.mrf.mxu0
      %v1295 = vpop.f32.mrf.mxu0
      %v1296 = vadd.f32 %v991, %v1295
      %v1297 = vpop.f32.mrf.mxu0
      %1298 = vmatprep.mubr.bf16.mxu0 0
      %1299 = vmatmul.mubr.bf16.gmra.mxu0 %v1095
      %v1300 = vpop.f32.mrf.mxu0
      %v1301 = vadd.f32 %v996, %v1300
      %v1302 = vpop.f32.mrf.mxu0
      %v1303 = vpop.f32.mrf.mxu0
      %v1304 = vadd.f32 %v999, %v1303
      %v1305 = vpop.f32.mrf.mxu0
      %1306 = vmatprep.mubr.bf16.mxu0 0
      %1307 = vmatmul.mubr.bf16.gmra.mxu0 %v1096
      %v1308 = vpop.f32.mrf.mxu0
      %v1309 = vadd.f32 %v1004, %v1308
      %v1310 = vpop.f32.mrf.mxu0
      %v1311 = vpop.f32.mrf.mxu0
      %v1312 = vadd.f32 %v1007, %v1311
      %v1313 = vpop.f32.mrf.mxu0
      %1314 = vmatprep.mubr.bf16.mxu0 0
      %1315 = vmatmul.mubr.bf16.gmra.mxu0 %v1097
      %v1316 = vpop.f32.mrf.mxu0
      %v1317 = vadd.f32 %v1012, %v1316
      %v1318 = vpop.f32.mrf.mxu0
      %v1319 = vpop.f32.mrf.mxu0
      %v1320 = vadd.f32 %v1015, %v1319
      %v1321 = vpop.f32.mrf.mxu0
      %1322 = vdwg.mxu0
      %vm1339 = vcmask 1042432
      %vm1340 = vcmask 1046532
      %vm1341 = vmor %vm1339, %vm1340
      %v1342 = vrot.slane %v271, 5
      %v1343 = vrot.slane %v1342, 4
      %v1344 = vrot.slane %v272, 5
      %v1345 = vsel %vm1341, %v1343, %v1344
      %v1346 = vrot.slane %v1344, 4
      %v1347 = vrot.slane %v273, 5
      %v1348 = vsel %vm1341, %v1346, %v1347
      %v1349 = vrot.slane %v274, 5
      %v1350 = vrot.slane %v1349, 4
      %v1351 = vrot.slane %v275, 5
      %v1352 = vsel %vm1341, %v1350, %v1351
      %v1353 = vrot.slane %v1351, 4
      %v1354 = vrot.slane %v276, 5
      %v1355 = vsel %vm1341, %v1353, %v1354
      %v1356 = vrot.slane %v277, 5
      %v1357 = vrot.slane %v1356, 4
      %v1358 = vrot.slane %v278, 5
      %v1359 = vsel %vm1341, %v1357, %v1358
      %v1360 = vrot.slane %v1358, 4
      %v1361 = vrot.slane %v279, 5
      %v1362 = vsel %vm1341, %v1360, %v1361
      %v1363 = vrot.slane %v280, 5
      %v1364 = vrot.slane %v1363, 4
      %v1365 = vrot.slane %v281, 5
      %v1366 = vsel %vm1341, %v1364, %v1365
      %v1367 = vrot.slane %v1365, 4
      %v1368 = vrot.slane %v282, 5
      %v1369 = vsel %vm1341, %v1367, %v1368
      %v1370 = vrot.slane %v283, 5
      %v1371 = vrot.slane %v1370, 4
      %v1372 = vrot.slane %v284, 5
      %v1373 = vsel %vm1341, %v1371, %v1372
      %v1374 = vrot.slane %v1372, 4
      %v1375 = vrot.slane %v285, 5
      %v1376 = vsel %vm1341, %v1374, %v1375
      %v1377 = vrot.slane %v286, 5
      %v1378 = vrot.slane %v1377, 4
      %v1379 = vrot.slane %v287, 5
      %v1380 = vsel %vm1341, %v1378, %v1379
      %v1381 = vrot.slane %v1379, 4
      %v1382 = vrot.slane %v288, 5
      %v1383 = vsel %vm1341, %v1381, %v1382
      %v1384 = vrot.slane %v289, 5
      %v1385 = vrot.slane %v1384, 4
      %v1386 = vrot.slane %v290, 5
      %v1387 = vsel %vm1341, %v1385, %v1386
      %v1388 = vrot.slane %v1386, 4
      %v1389 = vrot.slane %v291, 5
      %v1390 = vsel %vm1341, %v1388, %v1389
      %v1391 = vrot.slane %v292, 5
      %v1392 = vrot.slane %v1391, 4
      %v1393 = vrot.slane %v293, 5
      %v1394 = vsel %vm1341, %v1392, %v1393
      %v1395 = vrot.slane %v1393, 4
      %v1396 = vrot.slane %v294, 5
      %v1397 = vsel %vm1341, %v1395, %v1396
      %v1398 = vrot.slane %v295, 5
      %v1399 = vrot.slane %v1398, 4
      %v1400 = vrot.slane %v296, 5
      %v1401 = vsel %vm1341, %v1399, %v1400
      %v1402 = vrot.slane %v1400, 4
      %v1403 = vrot.slane %v297, 5
      %v1404 = vsel %vm1341, %v1402, %v1403
      %v1405 = vrot.slane %v298, 5
      %v1406 = vrot.slane %v1405, 4
      %v1407 = vrot.slane %v299, 5
      %v1408 = vsel %vm1341, %v1406, %v1407
      %v1409 = vrot.slane %v1407, 4
      %v1410 = vrot.slane %v300, 5
      %v1411 = vsel %vm1341, %v1409, %v1410
      %v1412 = vrot.slane %v301, 5
      %v1413 = vrot.slane %v1412, 4
      %v1414 = vrot.slane %v302, 5
      %v1415 = vsel %vm1341, %v1413, %v1414
      %v1416 = vrot.slane %v1414, 4
      %v1417 = vrot.slane %v303, 5
      %v1418 = vsel %vm1341, %v1416, %v1417
      %v1419 = vrot.slane %v304, 5
      %v1420 = vrot.slane %v1419, 4
      %v1421 = vrot.slane %v305, 5
      %v1422 = vsel %vm1341, %v1420, %v1421
      %v1423 = vrot.slane %v1421, 4
      %v1424 = vrot.slane %v306, 5
      %v1425 = vsel %vm1341, %v1423, %v1424
      %v1426 = vrot.slane %v307, 5
      %v1427 = vrot.slane %v1426, 4
      %v1428 = vrot.slane %v308, 5
      %v1429 = vsel %vm1341, %v1427, %v1428
      %v1430 = vrot.slane %v1428, 4
      %v1431 = vrot.slane %v309, 5
      %v1432 = vsel %vm1341, %v1430, %v1431
      %v1433 = vrot.slane %v310, 5
      %v1434 = vrot.slane %v1433, 4
      %v1435 = vrot.slane %v311, 5
      %v1436 = vsel %vm1341, %v1434, %v1435
      %v1437 = vrot.slane %v1435, 4
      %v1438 = vrot.slane %v312, 5
      %v1439 = vsel %vm1341, %v1437, %v1438
      %v1440 = vrot.slane %v313, 5
      %v1441 = vrot.slane %v1440, 4
      %v1442 = vrot.slane %v314, 5
      %v1443 = vsel %vm1341, %v1441, %v1442
      %v1444 = vrot.slane %v1442, 4
      %v1445 = vrot.slane %v315, 5
      %v1446 = vsel %vm1341, %v1444, %v1445
      %v1447 = vrot.slane %v316, 5
      %v1448 = vrot.slane %v1447, 4
      %v1449 = vrot.slane %v317, 5
      %v1450 = vsel %vm1341, %v1448, %v1449
      %v1451 = vrot.slane %v1449, 4
      %v1452 = vrot.slane %v318, 5
      %v1453 = vsel %vm1341, %v1451, %v1452
      %s1454 = scalar_lea.vmem %s1, 128
      %v1455 = vld [vmem:[%s1454] sm:$0xf]
      %v1456 = vld [vmem:[%s1454 + $0x4] sm:$0xf]
      %v1457 = vld [vmem:[%s1454 + $0x8] sm:$0xf]
      %v1458 = vld [vmem:[%s1454 + $0xc] sm:$0xf]
      %v1459 = vld [vmem:[%s1454 + $0x10] sm:$0xf]
      %v1460 = vld [vmem:[%s1454 + $0x14] sm:$0xf]
      %v1461 = vld [vmem:[%s1454 + $0x18] sm:$0xf]
      %v1462 = vld [vmem:[%s1454 + $0x1c] sm:$0xf]
      %v1463 = vld [vmem:[%s1454 + $0x20] sm:$0xf]
      %v1464 = vld [vmem:[%s1454 + $0x24] sm:$0xf]
      %v1465 = vld [vmem:[%s1454 + $0x28] sm:$0xf]
      %v1466 = vld [vmem:[%s1454 + $0x2c] sm:$0xf]
      %v1467 = vld [vmem:[%s1454 + $0x30] sm:$0xf]
      %v1468 = vld [vmem:[%s1454 + $0x34] sm:$0xf]
      %v1469 = vld [vmem:[%s1454 + $0x38] sm:$0xf]
      %v1470 = vld [vmem:[%s1454 + $0x3c] sm:$0xf]
      %v1471 = vunpack.c.l.b16 %v1345
      %v1472 = vunpack.c.l.b16 %v1348
      %v1473 = vunpack.c.l.b16 %v1352
      %v1474 = vunpack.c.l.b16 %v1355
      %v1475 = vunpack.c.l.b16 %v1359
      %v1476 = vunpack.c.l.b16 %v1362
      %v1477 = vunpack.c.l.b16 %v1366
      %v1478 = vunpack.c.l.b16 %v1369
      %v1479 = vunpack.c.l.b16 %v1373
      %v1480 = vunpack.c.l.b16 %v1376
      %v1481 = vunpack.c.l.b16 %v1380
      %v1482 = vunpack.c.l.b16 %v1383
      %v1483 = vunpack.c.l.b16 %v1387
      %v1484 = vunpack.c.l.b16 %v1390
      %v1485 = vunpack.c.l.b16 %v1394
      %v1486 = vunpack.c.l.b16 %v1397
      %v1487 = vunpack.c.l.b16 %v1401
      %v1488 = vunpack.c.l.b16 %v1404
      %v1489 = vunpack.c.l.b16 %v1408
      %v1490 = vunpack.c.l.b16 %v1411
      %v1491 = vunpack.c.l.b16 %v1415
      %v1492 = vunpack.c.l.b16 %v1418
      %v1493 = vunpack.c.l.b16 %v1422
      %v1494 = vunpack.c.l.b16 %v1425
      %v1495 = vunpack.c.l.b16 %v1429
      %v1496 = vunpack.c.l.b16 %v1432
      %v1497 = vunpack.c.l.b16 %v1436
      %v1498 = vunpack.c.l.b16 %v1439
      %v1499 = vunpack.c.l.b16 %v1443
      %v1500 = vunpack.c.l.b16 %v1446
      %v1501 = vunpack.c.l.b16 %v1450
      %v1502 = vunpack.c.l.b16 %v1453
      %v1503 = vpack.c.b16 %v1472, %v1471
      %v1504 = vpack.c.b16 %v1474, %v1473
      %v1505 = vpack.c.b16 %v1476, %v1475
      %v1506 = vpack.c.b16 %v1478, %v1477
      %v1507 = vpack.c.b16 %v1480, %v1479
      %v1508 = vpack.c.b16 %v1482, %v1481
      %v1509 = vpack.c.b16 %v1484, %v1483
      %v1510 = vpack.c.b16 %v1486, %v1485
      %v1511 = vpack.c.b16 %v1488, %v1487
      %v1512 = vpack.c.b16 %v1490, %v1489
      %v1513 = vpack.c.b16 %v1492, %v1491
      %v1514 = vpack.c.b16 %v1494, %v1493
      %v1515 = vpack.c.b16 %v1496, %v1495
      %v1516 = vpack.c.b16 %v1498, %v1497
      %v1517 = vpack.c.b16 %v1500, %v1499
      %v1518 = vpack.c.b16 %v1502, %v1501
      %v1551 = vunpack.c.l.b16 %v1455
      %v1552 = vunpack.c.l.b16 %v1456
      %v1553 = vunpack.c.l.b16 %v1457
      %v1554 = vunpack.c.l.b16 %v1458
      %v1555 = vunpack.c.l.b16 %v1459
      %v1556 = vunpack.c.l.b16 %v1460
      %v1557 = vunpack.c.l.b16 %v1461
      %v1558 = vunpack.c.l.b16 %v1462
      %v1559 = vunpack.c.l.b16 %v1463
      %v1560 = vunpack.c.l.b16 %v1464
      %v1561 = vunpack.c.l.b16 %v1465
      %v1562 = vunpack.c.l.b16 %v1466
      %v1563 = vunpack.c.l.b16 %v1467
      %v1564 = vunpack.c.l.b16 %v1468
      %v1565 = vunpack.c.l.b16 %v1469
      %v1566 = vunpack.c.l.b16 %v1470
      %v1567 = vpack.c.b16 %v1552, %v1551
      %v1568 = vpack.c.b16 %v1554, %v1553
      %v1569 = vpack.c.b16 %v1556, %v1555
      %v1570 = vpack.c.b16 %v1558, %v1557
      %v1571 = vpack.c.b16 %v1560, %v1559
      %v1572 = vpack.c.b16 %v1562, %v1561
      %v1573 = vpack.c.b16 %v1564, %v1563
      %v1574 = vpack.c.b16 %v1566, %v1565
      %1583 = vmatprep.subr.bf16.mxu0 0
      %1584 = vmatpush1.bf16.msra.mxu0 %v1574
      %1585 = vmatprep.subr.bf16.mxu0 0
      %1586 = vmatpush1.bf16.msra.mxu0 %v1573
      %1587 = vmatprep.subr.bf16.mxu0 0
      %1588 = vmatpush1.bf16.msra.mxu0 %v1572
      %1589 = vmatprep.subr.bf16.mxu0 0
      %1590 = vmatpush1.bf16.msra.mxu0 %v1571
      %1591 = vmatprep.subr.bf16.mxu0 0
      %1592 = vmatpush1.bf16.msra.mxu0 %v1570
      %1593 = vmatprep.subr.bf16.mxu0 0
      %1594 = vmatpush1.bf16.msra.mxu0 %v1569
      %1595 = vmatprep.subr.bf16.mxu0 0
      %1596 = vmatpush1.bf16.msra.mxu0 %v1568
      %1597 = vmatprep.subr.bf16.mxu0 0
      %1598 = vmatpush1.bf16.msra.mxu0 %v1567
      %1599 = vmatprep.subr.bf16.mxu0 0
      %1600 = vmatpush2.bf16.msra.mxu0 0
      %1601 = vmatprep.subr.bf16.mxu0 0
      %1602 = vmatpush2.bf16.msra.mxu0 0
      %1603 = vmatprep.subr.bf16.mxu0 0
      %1604 = vmatpush2.bf16.msra.mxu0 0
      %1605 = vmatprep.subr.bf16.mxu0 0
      %1606 = vmatpush2.bf16.msra.mxu0 0
      %1607 = vmatprep.subr.bf16.mxu0 0
      %1608 = vmatpush2.bf16.msra.mxu0 0
      %1609 = vmatprep.subr.bf16.mxu0 0
      %1610 = vmatpush2.bf16.msra.mxu0 0
      %1611 = vmatprep.subr.bf16.mxu0 0
      %1612 = vmatpush2.bf16.msra.mxu0 0
      %1613 = vmatprep.subr.bf16.mxu0 0
      %1614 = vmatpush2.bf16.msra.mxu0 0
      %1615 = vmatprep.mubr.bf16.mxu0 0
      %1616 = vmatmul.mubr.bf16.gmra.mxu0 %v1503
      %v1617 = vpop.f32.mrf.mxu0
      %v1618 = vadd.f32 0.0, %v1617
      %v1619 = vpop.f32.mrf.mxu0
      %v1620 = vpop.f32.mrf.mxu0
      %v1621 = vadd.f32 0.0, %v1620
      %v1622 = vpop.f32.mrf.mxu0
      %1623 = vmatprep.mubr.bf16.mxu0 0
      %1624 = vmatmul.mubr.bf16.gmra.mxu0 %v1504
      %v1625 = vpop.f32.mrf.mxu0
      %v1626 = vadd.f32 0.0, %v1625
      %v1627 = vpop.f32.mrf.mxu0
      %v1628 = vpop.f32.mrf.mxu0
      %v1629 = vadd.f32 0.0, %v1628
      %v1630 = vpop.f32.mrf.mxu0
      %1631 = vmatprep.mubr.bf16.mxu0 0
      %1632 = vmatmul.mubr.bf16.gmra.mxu0 %v1505
      %v1633 = vpop.f32.mrf.mxu0
      %v1634 = vadd.f32 0.0, %v1633
      %v1635 = vpop.f32.mrf.mxu0
      %v1636 = vpop.f32.mrf.mxu0
      %v1637 = vadd.f32 0.0, %v1636
      %v1638 = vpop.f32.mrf.mxu0
      %1639 = vmatprep.mubr.bf16.mxu0 0
      %1640 = vmatmul.mubr.bf16.gmra.mxu0 %v1506
      %v1641 = vpop.f32.mrf.mxu0
      %v1642 = vadd.f32 0.0, %v1641
      %v1643 = vpop.f32.mrf.mxu0
      %v1644 = vpop.f32.mrf.mxu0
      %v1645 = vadd.f32 0.0, %v1644
      %v1646 = vpop.f32.mrf.mxu0
      %1647 = vmatprep.mubr.bf16.mxu0 0
      %1648 = vmatmul.mubr.bf16.gmra.mxu0 %v1507
      %v1649 = vpop.f32.mrf.mxu0
      %v1650 = vadd.f32 0.0, %v1649
      %v1651 = vpop.f32.mrf.mxu0
      %v1652 = vpop.f32.mrf.mxu0
      %v1653 = vadd.f32 0.0, %v1652
      %v1654 = vpop.f32.mrf.mxu0
      %1655 = vmatprep.mubr.bf16.mxu0 0
      %1656 = vmatmul.mubr.bf16.gmra.mxu0 %v1508
      %v1657 = vpop.f32.mrf.mxu0
      %v1658 = vadd.f32 0.0, %v1657
      %v1659 = vpop.f32.mrf.mxu0
      %v1660 = vpop.f32.mrf.mxu0
      %v1661 = vadd.f32 0.0, %v1660
      %v1662 = vpop.f32.mrf.mxu0
      %1663 = vmatprep.mubr.bf16.mxu0 0
      %1664 = vmatmul.mubr.bf16.gmra.mxu0 %v1509
      %v1665 = vpop.f32.mrf.mxu0
      %v1666 = vadd.f32 0.0, %v1665
      %v1667 = vpop.f32.mrf.mxu0
      %v1668 = vpop.f32.mrf.mxu0
      %v1669 = vadd.f32 0.0, %v1668
      %v1670 = vpop.f32.mrf.mxu0
      %1671 = vmatprep.mubr.bf16.mxu0 0
      %1672 = vmatmul.mubr.bf16.gmra.mxu0 %v1510
      %v1673 = vpop.f32.mrf.mxu0
      %v1674 = vadd.f32 0.0, %v1673
      %v1675 = vpop.f32.mrf.mxu0
      %v1676 = vpop.f32.mrf.mxu0
      %v1677 = vadd.f32 0.0, %v1676
      %v1678 = vpop.f32.mrf.mxu0
      %1679 = vmatprep.mubr.bf16.mxu0 0
      %1680 = vmatmul.mubr.bf16.gmra.mxu0 %v1511
      %v1681 = vpop.f32.mrf.mxu0
      %v1682 = vadd.f32 0.0, %v1681
      %v1683 = vpop.f32.mrf.mxu0
      %v1684 = vpop.f32.mrf.mxu0
      %v1685 = vadd.f32 0.0, %v1684
      %v1686 = vpop.f32.mrf.mxu0
      %1687 = vmatprep.mubr.bf16.mxu0 0
      %1688 = vmatmul.mubr.bf16.gmra.mxu0 %v1512
      %v1689 = vpop.f32.mrf.mxu0
      %v1690 = vadd.f32 0.0, %v1689
      %v1691 = vpop.f32.mrf.mxu0
      %v1692 = vpop.f32.mrf.mxu0
      %v1693 = vadd.f32 0.0, %v1692
      %v1694 = vpop.f32.mrf.mxu0
      %1695 = vmatprep.mubr.bf16.mxu0 0
      %1696 = vmatmul.mubr.bf16.gmra.mxu0 %v1513
      %v1697 = vpop.f32.mrf.mxu0
      %v1698 = vadd.f32 0.0, %v1697
      %v1699 = vpop.f32.mrf.mxu0
      %v1700 = vpop.f32.mrf.mxu0
      %v1701 = vadd.f32 0.0, %v1700
      %v1702 = vpop.f32.mrf.mxu0
      %1703 = vmatprep.mubr.bf16.mxu0 0
      %1704 = vmatmul.mubr.bf16.gmra.mxu0 %v1514
      %v1705 = vpop.f32.mrf.mxu0
      %v1706 = vadd.f32 0.0, %v1705
      %v1707 = vpop.f32.mrf.mxu0
      %v1708 = vpop.f32.mrf.mxu0
      %v1709 = vadd.f32 0.0, %v1708
      %v1710 = vpop.f32.mrf.mxu0
      %1711 = vmatprep.mubr.bf16.mxu0 0
      %1712 = vmatmul.mubr.bf16.gmra.mxu0 %v1515
      %v1713 = vpop.f32.mrf.mxu0
      %v1714 = vadd.f32 0.0, %v1713
      %v1715 = vpop.f32.mrf.mxu0
      %v1716 = vpop.f32.mrf.mxu0
      %v1717 = vadd.f32 0.0, %v1716
      %v1718 = vpop.f32.mrf.mxu0
      %1719 = vmatprep.mubr.bf16.mxu0 0
      %1720 = vmatmul.mubr.bf16.gmra.mxu0 %v1516
      %v1721 = vpop.f32.mrf.mxu0
      %v1722 = vadd.f32 0.0, %v1721
      %v1723 = vpop.f32.mrf.mxu0
      %v1724 = vpop.f32.mrf.mxu0
      %v1725 = vadd.f32 0.0, %v1724
      %v1726 = vpop.f32.mrf.mxu0
      %1727 = vmatprep.mubr.bf16.mxu0 0
      %1728 = vmatmul.mubr.bf16.gmra.mxu0 %v1517
      %v1729 = vpop.f32.mrf.mxu0
      %v1730 = vadd.f32 0.0, %v1729
      %v1731 = vpop.f32.mrf.mxu0
      %v1732 = vpop.f32.mrf.mxu0
      %v1733 = vadd.f32 0.0, %v1732
      %v1734 = vpop.f32.mrf.mxu0
      %1735 = vmatprep.mubr.bf16.mxu0 0
      %1736 = vmatmul.mubr.bf16.gmra.mxu0 %v1518
      %v1737 = vpop.f32.mrf.mxu0
      %v1738 = vadd.f32 0.0, %v1737
      %v1739 = vpop.f32.mrf.mxu0
      %v1740 = vpop.f32.mrf.mxu0
      %v1741 = vadd.f32 0.0, %v1740
      %v1742 = vpop.f32.mrf.mxu0
      %1743 = vdwg.mxu0
      %v1744 = vadd.f32 %v1197, %v1618
      %v1745 = vadd.f32 %v1200, %v1621
      %v1746 = vadd.f32 %v1205, %v1626
      %v1747 = vadd.f32 %v1208, %v1629
      %v1748 = vadd.f32 %v1213, %v1634
      %v1749 = vadd.f32 %v1216, %v1637
      %v1750 = vadd.f32 %v1221, %v1642
      %v1751 = vadd.f32 %v1224, %v1645
      %v1752 = vadd.f32 %v1229, %v1650
      %v1753 = vadd.f32 %v1232, %v1653
      %v1754 = vadd.f32 %v1237, %v1658
      %v1755 = vadd.f32 %v1240, %v1661
      %v1756 = vadd.f32 %v1245, %v1666
      %v1757 = vadd.f32 %v1248, %v1669
      %v1758 = vadd.f32 %v1253, %v1674
      %v1759 = vadd.f32 %v1256, %v1677
      %v1760 = vadd.f32 %v1261, %v1682
      %v1761 = vadd.f32 %v1264, %v1685
      %v1762 = vadd.f32 %v1269, %v1690
      %v1763 = vadd.f32 %v1272, %v1693
      %v1764 = vadd.f32 %v1277, %v1698
      %v1765 = vadd.f32 %v1280, %v1701
      %v1766 = vadd.f32 %v1285, %v1706
      %v1767 = vadd.f32 %v1288, %v1709
      %v1768 = vadd.f32 %v1293, %v1714
      %v1769 = vadd.f32 %v1296, %v1717
      %v1770 = vadd.f32 %v1301, %v1722
      %v1771 = vadd.f32 %v1304, %v1725
      %v1772 = vadd.f32 %v1309, %v1730
      %v1773 = vadd.f32 %v1312, %v1733
      %v1774 = vadd.f32 %v1317, %v1738
      %v1775 = vadd.f32 %v1320, %v1741
      %s1776 = scalar_lea.vmem %s1, 192
      %v1777 = vld [vmem:[%s1776] sm:$0xf]
      %v1778 = vld [vmem:[%s1776 + $0x4] sm:$0xf]
      %v1779 = vld [vmem:[%s1776 + $0x8] sm:$0xf]
      %v1780 = vld [vmem:[%s1776 + $0xc] sm:$0xf]
      %v1781 = vld [vmem:[%s1776 + $0x10] sm:$0xf]
      %v1782 = vld [vmem:[%s1776 + $0x14] sm:$0xf]
      %v1783 = vld [vmem:[%s1776 + $0x18] sm:$0xf]
      %v1784 = vld [vmem:[%s1776 + $0x1c] sm:$0xf]
      %v1785 = vld [vmem:[%s1776 + $0x20] sm:$0xf]
      %v1786 = vld [vmem:[%s1776 + $0x24] sm:$0xf]
      %v1787 = vld [vmem:[%s1776 + $0x28] sm:$0xf]
      %v1788 = vld [vmem:[%s1776 + $0x2c] sm:$0xf]
      %v1789 = vld [vmem:[%s1776 + $0x30] sm:$0xf]
      %v1790 = vld [vmem:[%s1776 + $0x34] sm:$0xf]
      %v1791 = vld [vmem:[%s1776 + $0x38] sm:$0xf]
      %v1792 = vld [vmem:[%s1776 + $0x3c] sm:$0xf]
      %v1795 = vunpack.c.l.b16 %v319
      %v1796 = vunpack.c.l.b16 %v320
      %v1797 = vpack.c.b16 %v1796, %v1795
      %v1815 = vunpack.c.l.b16 %v1777
      %v1816 = vunpack.c.l.b16 %v1778
      %v1817 = vunpack.c.l.b16 %v1779
      %v1818 = vunpack.c.l.b16 %v1780
      %v1819 = vunpack.c.l.b16 %v1781
      %v1820 = vunpack.c.l.b16 %v1782
      %v1821 = vunpack.c.l.b16 %v1783
      %v1822 = vunpack.c.l.b16 %v1784
      %v1823 = vunpack.c.l.b16 %v1785
      %v1824 = vunpack.c.l.b16 %v1786
      %v1825 = vunpack.c.l.b16 %v1787
      %v1826 = vunpack.c.l.b16 %v1788
      %v1827 = vunpack.c.l.b16 %v1789
      %v1828 = vunpack.c.l.b16 %v1790
      %v1829 = vunpack.c.l.b16 %v1791
      %v1830 = vunpack.c.l.b16 %v1792
      %v1831 = vpack.c.b16 %v1816, %v1815
      %v1832 = vpack.c.b16 %v1818, %v1817
      %v1833 = vpack.c.b16 %v1820, %v1819
      %v1834 = vpack.c.b16 %v1822, %v1821
      %v1835 = vpack.c.b16 %v1824, %v1823
      %v1836 = vpack.c.b16 %v1826, %v1825
      %v1837 = vpack.c.b16 %v1828, %v1827
      %v1838 = vpack.c.b16 %v1830, %v1829
      %1847 = vmatprep.subr.bf16.mxu0 0
      %1848 = vmatpush1.bf16.msra.mxu0 %v1838
      %1849 = vmatprep.subr.bf16.mxu0 0
      %1850 = vmatpush1.bf16.msra.mxu0 %v1837
      %1851 = vmatprep.subr.bf16.mxu0 0
      %1852 = vmatpush1.bf16.msra.mxu0 %v1836
      %1853 = vmatprep.subr.bf16.mxu0 0
      %1854 = vmatpush1.bf16.msra.mxu0 %v1835
      %1855 = vmatprep.subr.bf16.mxu0 0
      %1856 = vmatpush1.bf16.msra.mxu0 %v1834
      %1857 = vmatprep.subr.bf16.mxu0 0
      %1858 = vmatpush1.bf16.msra.mxu0 %v1833
      %1859 = vmatprep.subr.bf16.mxu0 0
      %1860 = vmatpush1.bf16.msra.mxu0 %v1832
      %1861 = vmatprep.subr.bf16.mxu0 0
      %1862 = vmatpush1.bf16.msra.mxu0 %v1831
      %1863 = vmatprep.subr.bf16.mxu0 0
      %1864 = vmatpush2.bf16.msra.mxu0 0
      %1865 = vmatprep.subr.bf16.mxu0 0
      %1866 = vmatpush2.bf16.msra.mxu0 0
      %1867 = vmatprep.subr.bf16.mxu0 0
      %1868 = vmatpush2.bf16.msra.mxu0 0
      %1869 = vmatprep.subr.bf16.mxu0 0
      %1870 = vmatpush2.bf16.msra.mxu0 0
      %1871 = vmatprep.subr.bf16.mxu0 0
      %1872 = vmatpush2.bf16.msra.mxu0 0
      %1873 = vmatprep.subr.bf16.mxu0 0
      %1874 = vmatpush2.bf16.msra.mxu0 0
      %1875 = vmatprep.subr.bf16.mxu0 0
      %1876 = vmatpush2.bf16.msra.mxu0 0
      %1877 = vmatprep.subr.bf16.mxu0 0
      %1878 = vmatpush2.bf16.msra.mxu0 0
      %1879 = vmatprep.mubr.bf16.mxu0 0
      %1880 = vmatmul.mubr.bf16.gmra.mxu0 %v1083
      %v1881 = vpop.f32.mrf.mxu0
      %v1882 = vadd.f32 0.0, %v1881
      %v1883 = vpop.f32.mrf.mxu0
      %v1884 = vpop.f32.mrf.mxu0
      %v1885 = vadd.f32 0.0, %v1884
      %v1886 = vpop.f32.mrf.mxu0
      %1887 = vmatprep.mubr.bf16.mxu0 0
      %1888 = vmatmul.mubr.bf16.gmra.mxu0 %v1084
      %v1889 = vpop.f32.mrf.mxu0
      %v1890 = vadd.f32 0.0, %v1889
      %v1891 = vpop.f32.mrf.mxu0
      %v1892 = vpop.f32.mrf.mxu0
      %v1893 = vadd.f32 0.0, %v1892
      %v1894 = vpop.f32.mrf.mxu0
      %1895 = vmatprep.mubr.bf16.mxu0 0
      %1896 = vmatmul.mubr.bf16.gmra.mxu0 %v1085
      %v1897 = vpop.f32.mrf.mxu0
      %v1898 = vadd.f32 0.0, %v1897
      %v1899 = vpop.f32.mrf.mxu0
      %v1900 = vpop.f32.mrf.mxu0
      %v1901 = vadd.f32 0.0, %v1900
      %v1902 = vpop.f32.mrf.mxu0
      %1903 = vmatprep.mubr.bf16.mxu0 0
      %1904 = vmatmul.mubr.bf16.gmra.mxu0 %v1086
      %v1905 = vpop.f32.mrf.mxu0
      %v1906 = vadd.f32 0.0, %v1905
      %v1907 = vpop.f32.mrf.mxu0
      %v1908 = vpop.f32.mrf.mxu0
      %v1909 = vadd.f32 0.0, %v1908
      %v1910 = vpop.f32.mrf.mxu0
      %1911 = vmatprep.mubr.bf16.mxu0 0
      %1912 = vmatmul.mubr.bf16.gmra.mxu0 %v1087
      %v1913 = vpop.f32.mrf.mxu0
      %v1914 = vadd.f32 0.0, %v1913
      %v1915 = vpop.f32.mrf.mxu0
      %v1916 = vpop.f32.mrf.mxu0
      %v1917 = vadd.f32 0.0, %v1916
      %v1918 = vpop.f32.mrf.mxu0
      %1919 = vmatprep.mubr.bf16.mxu0 0
      %1920 = vmatmul.mubr.bf16.gmra.mxu0 %v1088
      %v1921 = vpop.f32.mrf.mxu0
      %v1922 = vadd.f32 0.0, %v1921
      %v1923 = vpop.f32.mrf.mxu0
      %v1924 = vpop.f32.mrf.mxu0
      %v1925 = vadd.f32 0.0, %v1924
      %v1926 = vpop.f32.mrf.mxu0
      %1927 = vmatprep.mubr.bf16.mxu0 0
      %1928 = vmatmul.mubr.bf16.gmra.mxu0 %v1089
      %v1929 = vpop.f32.mrf.mxu0
      %v1930 = vadd.f32 0.0, %v1929
      %v1931 = vpop.f32.mrf.mxu0
      %v1932 = vpop.f32.mrf.mxu0
      %v1933 = vadd.f32 0.0, %v1932
      %v1934 = vpop.f32.mrf.mxu0
      %1935 = vmatprep.mubr.bf16.mxu0 0
      %1936 = vmatmul.mubr.bf16.gmra.mxu0 %v1090
      %v1937 = vpop.f32.mrf.mxu0
      %v1938 = vadd.f32 0.0, %v1937
      %v1939 = vpop.f32.mrf.mxu0
      %v1940 = vpop.f32.mrf.mxu0
      %v1941 = vadd.f32 0.0, %v1940
      %v1942 = vpop.f32.mrf.mxu0
      %1943 = vmatprep.mubr.bf16.mxu0 0
      %1944 = vmatmul.mubr.bf16.gmra.mxu0 %v1091
      %v1945 = vpop.f32.mrf.mxu0
      %v1946 = vadd.f32 0.0, %v1945
      %v1947 = vpop.f32.mrf.mxu0
      %v1948 = vpop.f32.mrf.mxu0
      %v1949 = vadd.f32 0.0, %v1948
      %v1950 = vpop.f32.mrf.mxu0
      %1951 = vmatprep.mubr.bf16.mxu0 0
      %1952 = vmatmul.mubr.bf16.gmra.mxu0 %v1092
      %v1953 = vpop.f32.mrf.mxu0
      %v1954 = vadd.f32 0.0, %v1953
      %v1955 = vpop.f32.mrf.mxu0
      %v1956 = vpop.f32.mrf.mxu0
      %v1957 = vadd.f32 0.0, %v1956
      %v1958 = vpop.f32.mrf.mxu0
      %1959 = vmatprep.mubr.bf16.mxu0 0
      %1960 = vmatmul.mubr.bf16.gmra.mxu0 %v1093
      %v1961 = vpop.f32.mrf.mxu0
      %v1962 = vadd.f32 0.0, %v1961
      %v1963 = vpop.f32.mrf.mxu0
      %v1964 = vpop.f32.mrf.mxu0
      %v1965 = vadd.f32 0.0, %v1964
      %v1966 = vpop.f32.mrf.mxu0
      %1967 = vmatprep.mubr.bf16.mxu0 0
      %1968 = vmatmul.mubr.bf16.gmra.mxu0 %v1094
      %v1969 = vpop.f32.mrf.mxu0
      %v1970 = vadd.f32 0.0, %v1969
      %v1971 = vpop.f32.mrf.mxu0
      %v1972 = vpop.f32.mrf.mxu0
      %v1973 = vadd.f32 0.0, %v1972
      %v1974 = vpop.f32.mrf.mxu0
      %1975 = vmatprep.mubr.bf16.mxu0 0
      %1976 = vmatmul.mubr.bf16.gmra.mxu0 %v1095
      %v1977 = vpop.f32.mrf.mxu0
      %v1978 = vadd.f32 0.0, %v1977
      %v1979 = vpop.f32.mrf.mxu0
      %v1980 = vpop.f32.mrf.mxu0
      %v1981 = vadd.f32 0.0, %v1980
      %v1982 = vpop.f32.mrf.mxu0
      %1983 = vmatprep.mubr.bf16.mxu0 0
      %1984 = vmatmul.mubr.bf16.gmra.mxu0 %v1096
      %v1985 = vpop.f32.mrf.mxu0
      %v1986 = vadd.f32 0.0, %v1985
      %v1987 = vpop.f32.mrf.mxu0
      %v1988 = vpop.f32.mrf.mxu0
      %v1989 = vadd.f32 0.0, %v1988
      %v1990 = vpop.f32.mrf.mxu0
      %1991 = vmatprep.mubr.bf16.mxu0 0
      %1992 = vmatmul.mubr.bf16.gmra.mxu0 %v1097
      %v1993 = vpop.f32.mrf.mxu0
      %v1994 = vadd.f32 0.0, %v1993
      %v1995 = vpop.f32.mrf.mxu0
      %v1996 = vpop.f32.mrf.mxu0
      %v1997 = vadd.f32 0.0, %v1996
      %v1998 = vpop.f32.mrf.mxu0
      %1999 = vmatprep.mubr.bf16.mxu0 0
      %2000 = vmatmul.mubr.bf16.gmra.mxu0 %v1797
      %v2001 = vpop.f32.mrf.mxu0
      %v2002 = vadd.f32 0.0, %v2001
      %v2003 = vpop.f32.mrf.mxu0
      %v2004 = vpop.f32.mrf.mxu0
      %v2005 = vadd.f32 0.0, %v2004
      %v2006 = vpop.f32.mrf.mxu0
      %2007 = vdwg.mxu0
      %v2008 = vadd.f32 %v1744, %v1882
      %v2009 = vadd.f32 %v1745, %v1885
      %v2010 = vadd.f32 %v1746, %v1890
      %v2011 = vadd.f32 %v1747, %v1893
      %v2012 = vadd.f32 %v1748, %v1898
      %v2013 = vadd.f32 %v1749, %v1901
      %v2014 = vadd.f32 %v1750, %v1906
      %v2015 = vadd.f32 %v1751, %v1909
      %v2016 = vadd.f32 %v1752, %v1914
      %v2017 = vadd.f32 %v1753, %v1917
      %v2018 = vadd.f32 %v1754, %v1922
      %v2019 = vadd.f32 %v1755, %v1925
      %v2020 = vadd.f32 %v1756, %v1930
      %v2021 = vadd.f32 %v1757, %v1933
      %v2022 = vadd.f32 %v1758, %v1938
      %v2023 = vadd.f32 %v1759, %v1941
      %v2024 = vadd.f32 %v1760, %v1946
      %v2025 = vadd.f32 %v1761, %v1949
      %v2026 = vadd.f32 %v1762, %v1954
      %v2027 = vadd.f32 %v1763, %v1957
      %v2028 = vadd.f32 %v1764, %v1962
      %v2029 = vadd.f32 %v1765, %v1965
      %v2030 = vadd.f32 %v1766, %v1970
      %v2031 = vadd.f32 %v1767, %v1973
      %v2032 = vadd.f32 %v1768, %v1978
      %v2033 = vadd.f32 %v1769, %v1981
      %v2034 = vadd.f32 %v1770, %v1986
      %v2035 = vadd.f32 %v1771, %v1989
      %v2036 = vadd.f32 %v1772, %v1994
      %v2037 = vadd.f32 %v1773, %v1997
      %v2038 = vadd.f32 %v1774, %v2002
      %v2039 = vadd.f32 %v1775, %v2005
      %v2041 = vshrl.u32 %v319, 16
      %v2043 = vrot.slane %v2041, 4
      %v2044 = vshll.u32 %v319, 16
      %v2046 = vrot.slane %v2044, 5
      %v2047 = vor.u32 %v2043, %v2046
      %v2048 = vrot.slane %v2047, 4
      %v2050 = vshll.u32 %v320, 16
      %v2052 = vrot.slane %v2050, 5
      %v2053 = vsel %vm343, %v2048, %v2052
      %v2054 = vshrl.u32 %v320, 16
      %v2056 = vrot.slane %v2054, 4
      %v2057 = vor.u32 %v2056, %v2052
      %v2058 = vrot.slane %v2057, 4
      %v2060 = vshll.u32 %v321, 16
      %v2062 = vrot.slane %v2060, 5
      %v2063 = vsel %vm343, %v2058, %v2062
      %s2064 = scalar_lea.vmem %s1, 256
      %v2065 = vld [vmem:[%s2064] sm:$0xf]
      %v2066 = vld [vmem:[%s2064 + $0x4] sm:$0xf]
      %v2067 = vld [vmem:[%s2064 + $0x8] sm:$0xf]
      %v2068 = vld [vmem:[%s2064 + $0xc] sm:$0xf]
      %v2069 = vld [vmem:[%s2064 + $0x10] sm:$0xf]
      %v2070 = vld [vmem:[%s2064 + $0x14] sm:$0xf]
      %v2071 = vld [vmem:[%s2064 + $0x18] sm:$0xf]
      %v2072 = vld [vmem:[%s2064 + $0x1c] sm:$0xf]
      %v2073 = vld [vmem:[%s2064 + $0x20] sm:$0xf]
      %v2074 = vld [vmem:[%s2064 + $0x24] sm:$0xf]
      %v2075 = vld [vmem:[%s2064 + $0x28] sm:$0xf]
      %v2076 = vld [vmem:[%s2064 + $0x2c] sm:$0xf]
      %v2077 = vld [vmem:[%s2064 + $0x30] sm:$0xf]
      %v2078 = vld [vmem:[%s2064 + $0x34] sm:$0xf]
      %v2079 = vld [vmem:[%s2064 + $0x38] sm:$0xf]
      %v2080 = vld [vmem:[%s2064 + $0x3c] sm:$0xf]
      %v2081 = vunpack.c.l.b16 %v2053
      %v2082 = vunpack.c.l.b16 %v2063
      %v2083 = vpack.c.b16 %v2082, %v2081
      %v2101 = vunpack.c.l.b16 %v2065
      %v2102 = vunpack.c.l.b16 %v2066
      %v2103 = vunpack.c.l.b16 %v2067
      %v2104 = vunpack.c.l.b16 %v2068
      %v2105 = vunpack.c.l.b16 %v2069
      %v2106 = vunpack.c.l.b16 %v2070
      %v2107 = vunpack.c.l.b16 %v2071
      %v2108 = vunpack.c.l.b16 %v2072
      %v2109 = vunpack.c.l.b16 %v2073
      %v2110 = vunpack.c.l.b16 %v2074
      %v2111 = vunpack.c.l.b16 %v2075
      %v2112 = vunpack.c.l.b16 %v2076
      %v2113 = vunpack.c.l.b16 %v2077
      %v2114 = vunpack.c.l.b16 %v2078
      %v2115 = vunpack.c.l.b16 %v2079
      %v2116 = vunpack.c.l.b16 %v2080
      %v2117 = vpack.c.b16 %v2102, %v2101
      %v2118 = vpack.c.b16 %v2104, %v2103
      %v2119 = vpack.c.b16 %v2106, %v2105
      %v2120 = vpack.c.b16 %v2108, %v2107
      %v2121 = vpack.c.b16 %v2110, %v2109
      %v2122 = vpack.c.b16 %v2112, %v2111
      %v2123 = vpack.c.b16 %v2114, %v2113
      %v2124 = vpack.c.b16 %v2116, %v2115
      %2133 = vmatprep.subr.bf16.mxu0 0
      %2134 = vmatpush1.bf16.msra.mxu0 %v2124
      %2135 = vmatprep.subr.bf16.mxu0 0
      %2136 = vmatpush1.bf16.msra.mxu0 %v2123
      %2137 = vmatprep.subr.bf16.mxu0 0
      %2138 = vmatpush1.bf16.msra.mxu0 %v2122
      %2139 = vmatprep.subr.bf16.mxu0 0
      %2140 = vmatpush1.bf16.msra.mxu0 %v2121
      %2141 = vmatprep.subr.bf16.mxu0 0
      %2142 = vmatpush1.bf16.msra.mxu0 %v2120
      %2143 = vmatprep.subr.bf16.mxu0 0
      %2144 = vmatpush1.bf16.msra.mxu0 %v2119
      %2145 = vmatprep.subr.bf16.mxu0 0
      %2146 = vmatpush1.bf16.msra.mxu0 %v2118
      %2147 = vmatprep.subr.bf16.mxu0 0
      %2148 = vmatpush1.bf16.msra.mxu0 %v2117
      %2149 = vmatprep.subr.bf16.mxu0 0
      %2150 = vmatpush2.bf16.msra.mxu0 0
      %2151 = vmatprep.subr.bf16.mxu0 0
      %2152 = vmatpush2.bf16.msra.mxu0 0
      %2153 = vmatprep.subr.bf16.mxu0 0
      %2154 = vmatpush2.bf16.msra.mxu0 0
      %2155 = vmatprep.subr.bf16.mxu0 0
      %2156 = vmatpush2.bf16.msra.mxu0 0
      %2157 = vmatprep.subr.bf16.mxu0 0
      %2158 = vmatpush2.bf16.msra.mxu0 0
      %2159 = vmatprep.subr.bf16.mxu0 0
      %2160 = vmatpush2.bf16.msra.mxu0 0
      %2161 = vmatprep.subr.bf16.mxu0 0
      %2162 = vmatpush2.bf16.msra.mxu0 0
      %2163 = vmatprep.subr.bf16.mxu0 0
      %2164 = vmatpush2.bf16.msra.mxu0 0
      %2165 = vmatprep.mubr.bf16.mxu0 0
      %2166 = vmatmul.mubr.bf16.gmra.mxu0 %v778
      %v2167 = vpop.f32.mrf.mxu0
      %v2168 = vadd.f32 0.0, %v2167
      %v2169 = vpop.f32.mrf.mxu0
      %v2170 = vpop.f32.mrf.mxu0
      %v2171 = vadd.f32 0.0, %v2170
      %v2172 = vpop.f32.mrf.mxu0
      %2173 = vmatprep.mubr.bf16.mxu0 0
      %2174 = vmatmul.mubr.bf16.gmra.mxu0 %v779
      %v2175 = vpop.f32.mrf.mxu0
      %v2176 = vadd.f32 0.0, %v2175
      %v2177 = vpop.f32.mrf.mxu0
      %v2178 = vpop.f32.mrf.mxu0
      %v2179 = vadd.f32 0.0, %v2178
      %v2180 = vpop.f32.mrf.mxu0
      %2181 = vmatprep.mubr.bf16.mxu0 0
      %2182 = vmatmul.mubr.bf16.gmra.mxu0 %v780
      %v2183 = vpop.f32.mrf.mxu0
      %v2184 = vadd.f32 0.0, %v2183
      %v2185 = vpop.f32.mrf.mxu0
      %v2186 = vpop.f32.mrf.mxu0
      %v2187 = vadd.f32 0.0, %v2186
      %v2188 = vpop.f32.mrf.mxu0
      %2189 = vmatprep.mubr.bf16.mxu0 0
      %2190 = vmatmul.mubr.bf16.gmra.mxu0 %v781
      %v2191 = vpop.f32.mrf.mxu0
      %v2192 = vadd.f32 0.0, %v2191
      %v2193 = vpop.f32.mrf.mxu0
      %v2194 = vpop.f32.mrf.mxu0
      %v2195 = vadd.f32 0.0, %v2194
      %v2196 = vpop.f32.mrf.mxu0
      %2197 = vmatprep.mubr.bf16.mxu0 0
      %2198 = vmatmul.mubr.bf16.gmra.mxu0 %v782
      %v2199 = vpop.f32.mrf.mxu0
      %v2200 = vadd.f32 0.0, %v2199
      %v2201 = vpop.f32.mrf.mxu0
      %v2202 = vpop.f32.mrf.mxu0
      %v2203 = vadd.f32 0.0, %v2202
      %v2204 = vpop.f32.mrf.mxu0
      %2205 = vmatprep.mubr.bf16.mxu0 0
      %2206 = vmatmul.mubr.bf16.gmra.mxu0 %v783
      %v2207 = vpop.f32.mrf.mxu0
      %v2208 = vadd.f32 0.0, %v2207
      %v2209 = vpop.f32.mrf.mxu0
      %v2210 = vpop.f32.mrf.mxu0
      %v2211 = vadd.f32 0.0, %v2210
      %v2212 = vpop.f32.mrf.mxu0
      %2213 = vmatprep.mubr.bf16.mxu0 0
      %2214 = vmatmul.mubr.bf16.gmra.mxu0 %v784
      %v2215 = vpop.f32.mrf.mxu0
      %v2216 = vadd.f32 0.0, %v2215
      %v2217 = vpop.f32.mrf.mxu0
      %v2218 = vpop.f32.mrf.mxu0
      %v2219 = vadd.f32 0.0, %v2218
      %v2220 = vpop.f32.mrf.mxu0
      %2221 = vmatprep.mubr.bf16.mxu0 0
      %2222 = vmatmul.mubr.bf16.gmra.mxu0 %v785
      %v2223 = vpop.f32.mrf.mxu0
      %v2224 = vadd.f32 0.0, %v2223
      %v2225 = vpop.f32.mrf.mxu0
      %v2226 = vpop.f32.mrf.mxu0
      %v2227 = vadd.f32 0.0, %v2226
      %v2228 = vpop.f32.mrf.mxu0
      %2229 = vmatprep.mubr.bf16.mxu0 0
      %2230 = vmatmul.mubr.bf16.gmra.mxu0 %v786
      %v2231 = vpop.f32.mrf.mxu0
      %v2232 = vadd.f32 0.0, %v2231
      %v2233 = vpop.f32.mrf.mxu0
      %v2234 = vpop.f32.mrf.mxu0
      %v2235 = vadd.f32 0.0, %v2234
      %v2236 = vpop.f32.mrf.mxu0
      %2237 = vmatprep.mubr.bf16.mxu0 0
      %2238 = vmatmul.mubr.bf16.gmra.mxu0 %v787
      %v2239 = vpop.f32.mrf.mxu0
      %v2240 = vadd.f32 0.0, %v2239
      %v2241 = vpop.f32.mrf.mxu0
      %v2242 = vpop.f32.mrf.mxu0
      %v2243 = vadd.f32 0.0, %v2242
      %v2244 = vpop.f32.mrf.mxu0
      %2245 = vmatprep.mubr.bf16.mxu0 0
      %2246 = vmatmul.mubr.bf16.gmra.mxu0 %v788
      %v2247 = vpop.f32.mrf.mxu0
      %v2248 = vadd.f32 0.0, %v2247
      %v2249 = vpop.f32.mrf.mxu0
      %v2250 = vpop.f32.mrf.mxu0
      %v2251 = vadd.f32 0.0, %v2250
      %v2252 = vpop.f32.mrf.mxu0
      %2253 = vmatprep.mubr.bf16.mxu0 0
      %2254 = vmatmul.mubr.bf16.gmra.mxu0 %v789
      %v2255 = vpop.f32.mrf.mxu0
      %v2256 = vadd.f32 0.0, %v2255
      %v2257 = vpop.f32.mrf.mxu0
      %v2258 = vpop.f32.mrf.mxu0
      %v2259 = vadd.f32 0.0, %v2258
      %v2260 = vpop.f32.mrf.mxu0
      %2261 = vmatprep.mubr.bf16.mxu0 0
      %2262 = vmatmul.mubr.bf16.gmra.mxu0 %v790
      %v2263 = vpop.f32.mrf.mxu0
      %v2264 = vadd.f32 0.0, %v2263
      %v2265 = vpop.f32.mrf.mxu0
      %v2266 = vpop.f32.mrf.mxu0
      %v2267 = vadd.f32 0.0, %v2266
      %v2268 = vpop.f32.mrf.mxu0
      %2269 = vmatprep.mubr.bf16.mxu0 0
      %2270 = vmatmul.mubr.bf16.gmra.mxu0 %v791
      %v2271 = vpop.f32.mrf.mxu0
      %v2272 = vadd.f32 0.0, %v2271
      %v2273 = vpop.f32.mrf.mxu0
      %v2274 = vpop.f32.mrf.mxu0
      %v2275 = vadd.f32 0.0, %v2274
      %v2276 = vpop.f32.mrf.mxu0
      %2277 = vmatprep.mubr.bf16.mxu0 0
      %2278 = vmatmul.mubr.bf16.gmra.mxu0 %v792
      %v2279 = vpop.f32.mrf.mxu0
      %v2280 = vadd.f32 0.0, %v2279
      %v2281 = vpop.f32.mrf.mxu0
      %v2282 = vpop.f32.mrf.mxu0
      %v2283 = vadd.f32 0.0, %v2282
      %v2284 = vpop.f32.mrf.mxu0
      %2285 = vmatprep.mubr.bf16.mxu0 0
      %2286 = vmatmul.mubr.bf16.gmra.mxu0 %v2083
      %v2287 = vpop.f32.mrf.mxu0
      %v2288 = vadd.f32 0.0, %v2287
      %v2289 = vpop.f32.mrf.mxu0
      %v2290 = vpop.f32.mrf.mxu0
      %v2291 = vadd.f32 0.0, %v2290
      %v2292 = vpop.f32.mrf.mxu0
      %2293 = vdwg.mxu0
      %v2294 = vadd.f32 %v2008, %v2168
      %v2295 = vadd.f32 %v2009, %v2171
      %v2296 = vadd.f32 %v2010, %v2176
      %v2297 = vadd.f32 %v2011, %v2179
      %v2298 = vadd.f32 %v2012, %v2184
      %v2299 = vadd.f32 %v2013, %v2187
      %v2300 = vadd.f32 %v2014, %v2192
      %v2301 = vadd.f32 %v2015, %v2195
      %v2302 = vadd.f32 %v2016, %v2200
      %v2303 = vadd.f32 %v2017, %v2203
      %v2304 = vadd.f32 %v2018, %v2208
      %v2305 = vadd.f32 %v2019, %v2211
      %v2306 = vadd.f32 %v2020, %v2216
      %v2307 = vadd.f32 %v2021, %v2219
      %v2308 = vadd.f32 %v2022, %v2224
      %v2309 = vadd.f32 %v2023, %v2227
      %v2310 = vadd.f32 %v2024, %v2232
      %v2311 = vadd.f32 %v2025, %v2235
      %v2312 = vadd.f32 %v2026, %v2240
      %v2313 = vadd.f32 %v2027, %v2243
      %v2314 = vadd.f32 %v2028, %v2248
      %v2315 = vadd.f32 %v2029, %v2251
      %v2316 = vadd.f32 %v2030, %v2256
      %v2317 = vadd.f32 %v2031, %v2259
      %v2318 = vadd.f32 %v2032, %v2264
      %v2319 = vadd.f32 %v2033, %v2267
      %v2320 = vadd.f32 %v2034, %v2272
      %v2321 = vadd.f32 %v2035, %v2275
      %v2322 = vadd.f32 %v2036, %v2280
      %v2323 = vadd.f32 %v2037, %v2283
      %v2324 = vadd.f32 %v2038, %v2288
      %v2325 = vadd.f32 %v2039, %v2291
      %v2327 = vrot.slane %v319, 5
      %v2328 = vrot.slane %v2327, 4
      %v2329 = vrot.slane %v320, 5
      %v2330 = vsel %vm1341, %v2328, %v2329
      %v2331 = vrot.slane %v2329, 4
      %v2332 = vrot.slane %v321, 5
      %v2333 = vsel %vm1341, %v2331, %v2332
      %s2334 = scalar_lea.vmem %s1, 320
      %v2335 = vld [vmem:[%s2334] sm:$0xf]
      %v2336 = vld [vmem:[%s2334 + $0x4] sm:$0xf]
      %v2337 = vld [vmem:[%s2334 + $0x8] sm:$0xf]
      %v2338 = vld [vmem:[%s2334 + $0xc] sm:$0xf]
      %v2339 = vld [vmem:[%s2334 + $0x10] sm:$0xf]
      %v2340 = vld [vmem:[%s2334 + $0x14] sm:$0xf]
      %v2341 = vld [vmem:[%s2334 + $0x18] sm:$0xf]
      %v2342 = vld [vmem:[%s2334 + $0x1c] sm:$0xf]
      %v2343 = vld [vmem:[%s2334 + $0x20] sm:$0xf]
      %v2344 = vld [vmem:[%s2334 + $0x24] sm:$0xf]
      %v2345 = vld [vmem:[%s2334 + $0x28] sm:$0xf]
      %v2346 = vld [vmem:[%s2334 + $0x2c] sm:$0xf]
      %v2347 = vld [vmem:[%s2334 + $0x30] sm:$0xf]
      %v2348 = vld [vmem:[%s2334 + $0x34] sm:$0xf]
      %v2349 = vld [vmem:[%s2334 + $0x38] sm:$0xf]
      %v2350 = vld [vmem:[%s2334 + $0x3c] sm:$0xf]
      %v2351 = vunpack.c.l.b16 %v2330
      %v2352 = vunpack.c.l.b16 %v2333
      %v2353 = vpack.c.b16 %v2352, %v2351
      %v2371 = vunpack.c.l.b16 %v2335
      %v2372 = vunpack.c.l.b16 %v2336
      %v2373 = vunpack.c.l.b16 %v2337
      %v2374 = vunpack.c.l.b16 %v2338
      %v2375 = vunpack.c.l.b16 %v2339
      %v2376 = vunpack.c.l.b16 %v2340
      %v2377 = vunpack.c.l.b16 %v2341
      %v2378 = vunpack.c.l.b16 %v2342
      %v2379 = vunpack.c.l.b16 %v2343
      %v2380 = vunpack.c.l.b16 %v2344
      %v2381 = vunpack.c.l.b16 %v2345
      %v2382 = vunpack.c.l.b16 %v2346
      %v2383 = vunpack.c.l.b16 %v2347
      %v2384 = vunpack.c.l.b16 %v2348
      %v2385 = vunpack.c.l.b16 %v2349
      %v2386 = vunpack.c.l.b16 %v2350
      %v2387 = vpack.c.b16 %v2372, %v2371
      %v2388 = vpack.c.b16 %v2374, %v2373
      %v2389 = vpack.c.b16 %v2376, %v2375
      %v2390 = vpack.c.b16 %v2378, %v2377
      %v2391 = vpack.c.b16 %v2380, %v2379
      %v2392 = vpack.c.b16 %v2382, %v2381
      %v2393 = vpack.c.b16 %v2384, %v2383
      %v2394 = vpack.c.b16 %v2386, %v2385
      %2403 = vmatprep.subr.bf16.mxu0 0
      %2404 = vmatpush1.bf16.msra.mxu0 %v2394
      %2405 = vmatprep.subr.bf16.mxu0 0
      %2406 = vmatpush1.bf16.msra.mxu0 %v2393
      %2407 = vmatprep.subr.bf16.mxu0 0
      %2408 = vmatpush1.bf16.msra.mxu0 %v2392
      %2409 = vmatprep.subr.bf16.mxu0 0
      %2410 = vmatpush1.bf16.msra.mxu0 %v2391
      %2411 = vmatprep.subr.bf16.mxu0 0
      %2412 = vmatpush1.bf16.msra.mxu0 %v2390
      %2413 = vmatprep.subr.bf16.mxu0 0
      %2414 = vmatpush1.bf16.msra.mxu0 %v2389
      %2415 = vmatprep.subr.bf16.mxu0 0
      %2416 = vmatpush1.bf16.msra.mxu0 %v2388
      %2417 = vmatprep.subr.bf16.mxu0 0
      %2418 = vmatpush1.bf16.msra.mxu0 %v2387
      %2419 = vmatprep.subr.bf16.mxu0 0
      %2420 = vmatpush2.bf16.msra.mxu0 0
      %2421 = vmatprep.subr.bf16.mxu0 0
      %2422 = vmatpush2.bf16.msra.mxu0 0
      %2423 = vmatprep.subr.bf16.mxu0 0
      %2424 = vmatpush2.bf16.msra.mxu0 0
      %2425 = vmatprep.subr.bf16.mxu0 0
      %2426 = vmatpush2.bf16.msra.mxu0 0
      %2427 = vmatprep.subr.bf16.mxu0 0
      %2428 = vmatpush2.bf16.msra.mxu0 0
      %2429 = vmatprep.subr.bf16.mxu0 0
      %2430 = vmatpush2.bf16.msra.mxu0 0
      %2431 = vmatprep.subr.bf16.mxu0 0
      %2432 = vmatpush2.bf16.msra.mxu0 0
      %2433 = vmatprep.subr.bf16.mxu0 0
      %2434 = vmatpush2.bf16.msra.mxu0 0
      %2435 = vmatprep.mubr.bf16.mxu0 0
      %2436 = vmatmul.mubr.bf16.gmra.mxu0 %v1504
      %v2437 = vpop.f32.mrf.mxu0
      %v2438 = vadd.f32 0.0, %v2437
      %v2439 = vpop.f32.mrf.mxu0
      %v2440 = vpop.f32.mrf.mxu0
      %v2441 = vadd.f32 0.0, %v2440
      %v2442 = vpop.f32.mrf.mxu0
      %2443 = vmatprep.mubr.bf16.mxu0 0
      %2444 = vmatmul.mubr.bf16.gmra.mxu0 %v1505
      %v2445 = vpop.f32.mrf.mxu0
      %v2446 = vadd.f32 0.0, %v2445
      %v2447 = vpop.f32.mrf.mxu0
      %v2448 = vpop.f32.mrf.mxu0
      %v2449 = vadd.f32 0.0, %v2448
      %v2450 = vpop.f32.mrf.mxu0
      %2451 = vmatprep.mubr.bf16.mxu0 0
      %2452 = vmatmul.mubr.bf16.gmra.mxu0 %v1506
      %v2453 = vpop.f32.mrf.mxu0
      %v2454 = vadd.f32 0.0, %v2453
      %v2455 = vpop.f32.mrf.mxu0
      %v2456 = vpop.f32.mrf.mxu0
      %v2457 = vadd.f32 0.0, %v2456
      %v2458 = vpop.f32.mrf.mxu0
      %2459 = vmatprep.mubr.bf16.mxu0 0
      %2460 = vmatmul.mubr.bf16.gmra.mxu0 %v1507
      %v2461 = vpop.f32.mrf.mxu0
      %v2462 = vadd.f32 0.0, %v2461
      %v2463 = vpop.f32.mrf.mxu0
      %v2464 = vpop.f32.mrf.mxu0
      %v2465 = vadd.f32 0.0, %v2464
      %v2466 = vpop.f32.mrf.mxu0
      %2467 = vmatprep.mubr.bf16.mxu0 0
      %2468 = vmatmul.mubr.bf16.gmra.mxu0 %v1508
      %v2469 = vpop.f32.mrf.mxu0
      %v2470 = vadd.f32 0.0, %v2469
      %v2471 = vpop.f32.mrf.mxu0
      %v2472 = vpop.f32.mrf.mxu0
      %v2473 = vadd.f32 0.0, %v2472
      %v2474 = vpop.f32.mrf.mxu0
      %2475 = vmatprep.mubr.bf16.mxu0 0
      %2476 = vmatmul.mubr.bf16.gmra.mxu0 %v1509
      %v2477 = vpop.f32.mrf.mxu0
      %v2478 = vadd.f32 0.0, %v2477
      %v2479 = vpop.f32.mrf.mxu0
      %v2480 = vpop.f32.mrf.mxu0
      %v2481 = vadd.f32 0.0, %v2480
      %v2482 = vpop.f32.mrf.mxu0
      %2483 = vmatprep.mubr.bf16.mxu0 0
      %2484 = vmatmul.mubr.bf16.gmra.mxu0 %v1510
      %v2485 = vpop.f32.mrf.mxu0
      %v2486 = vadd.f32 0.0, %v2485
      %v2487 = vpop.f32.mrf.mxu0
      %v2488 = vpop.f32.mrf.mxu0
      %v2489 = vadd.f32 0.0, %v2488
      %v2490 = vpop.f32.mrf.mxu0
      %2491 = vmatprep.mubr.bf16.mxu0 0
      %2492 = vmatmul.mubr.bf16.gmra.mxu0 %v1511
      %v2493 = vpop.f32.mrf.mxu0
      %v2494 = vadd.f32 0.0, %v2493
      %v2495 = vpop.f32.mrf.mxu0
      %v2496 = vpop.f32.mrf.mxu0
      %v2497 = vadd.f32 0.0, %v2496
      %v2498 = vpop.f32.mrf.mxu0
      %2499 = vmatprep.mubr.bf16.mxu0 0
      %2500 = vmatmul.mubr.bf16.gmra.mxu0 %v1512
      %v2501 = vpop.f32.mrf.mxu0
      %v2502 = vadd.f32 0.0, %v2501
      %v2503 = vpop.f32.mrf.mxu0
      %v2504 = vpop.f32.mrf.mxu0
      %v2505 = vadd.f32 0.0, %v2504
      %v2506 = vpop.f32.mrf.mxu0
      %2507 = vmatprep.mubr.bf16.mxu0 0
      %2508 = vmatmul.mubr.bf16.gmra.mxu0 %v1513
      %v2509 = vpop.f32.mrf.mxu0
      %v2510 = vadd.f32 0.0, %v2509
      %v2511 = vpop.f32.mrf.mxu0
      %v2512 = vpop.f32.mrf.mxu0
      %v2513 = vadd.f32 0.0, %v2512
      %v2514 = vpop.f32.mrf.mxu0
      %2515 = vmatprep.mubr.bf16.mxu0 0
      %2516 = vmatmul.mubr.bf16.gmra.mxu0 %v1514
      %v2517 = vpop.f32.mrf.mxu0
      %v2518 = vadd.f32 0.0, %v2517
      %v2519 = vpop.f32.mrf.mxu0
      %v2520 = vpop.f32.mrf.mxu0
      %v2521 = vadd.f32 0.0, %v2520
      %v2522 = vpop.f32.mrf.mxu0
      %2523 = vmatprep.mubr.bf16.mxu0 0
      %2524 = vmatmul.mubr.bf16.gmra.mxu0 %v1515
      %v2525 = vpop.f32.mrf.mxu0
      %v2526 = vadd.f32 0.0, %v2525
      %v2527 = vpop.f32.mrf.mxu0
      %v2528 = vpop.f32.mrf.mxu0
      %v2529 = vadd.f32 0.0, %v2528
      %v2530 = vpop.f32.mrf.mxu0
      %2531 = vmatprep.mubr.bf16.mxu0 0
      %2532 = vmatmul.mubr.bf16.gmra.mxu0 %v1516
      %v2533 = vpop.f32.mrf.mxu0
      %v2534 = vadd.f32 0.0, %v2533
      %v2535 = vpop.f32.mrf.mxu0
      %v2536 = vpop.f32.mrf.mxu0
      %v2537 = vadd.f32 0.0, %v2536
      %v2538 = vpop.f32.mrf.mxu0
      %2539 = vmatprep.mubr.bf16.mxu0 0
      %2540 = vmatmul.mubr.bf16.gmra.mxu0 %v1517
      %v2541 = vpop.f32.mrf.mxu0
      %v2542 = vadd.f32 0.0, %v2541
      %v2543 = vpop.f32.mrf.mxu0
      %v2544 = vpop.f32.mrf.mxu0
      %v2545 = vadd.f32 0.0, %v2544
      %v2546 = vpop.f32.mrf.mxu0
      %2547 = vmatprep.mubr.bf16.mxu0 0
      %2548 = vmatmul.mubr.bf16.gmra.mxu0 %v1518
      %v2549 = vpop.f32.mrf.mxu0
      %v2550 = vadd.f32 0.0, %v2549
      %v2551 = vpop.f32.mrf.mxu0
      %v2552 = vpop.f32.mrf.mxu0
      %v2553 = vadd.f32 0.0, %v2552
      %v2554 = vpop.f32.mrf.mxu0
      %2555 = vmatprep.mubr.bf16.mxu0 0
      %2556 = vmatmul.mubr.bf16.gmra.mxu0 %v2353
      %v2557 = vpop.f32.mrf.mxu0
      %v2558 = vadd.f32 0.0, %v2557
      %v2559 = vpop.f32.mrf.mxu0
      %v2560 = vpop.f32.mrf.mxu0
      %v2561 = vadd.f32 0.0, %v2560
      %v2562 = vpop.f32.mrf.mxu0
      %2563 = vdwg.mxu0
      %v2564 = vadd.f32 %v2294, %v2438
      %v2565 = vadd.f32 %v2295, %v2441
      %v2566 = vadd.f32 %v2296, %v2446
      %v2567 = vadd.f32 %v2297, %v2449
      %v2568 = vadd.f32 %v2298, %v2454
      %v2569 = vadd.f32 %v2299, %v2457
      %v2570 = vadd.f32 %v2300, %v2462
      %v2571 = vadd.f32 %v2301, %v2465
      %v2572 = vadd.f32 %v2302, %v2470
      %v2573 = vadd.f32 %v2303, %v2473
      %v2574 = vadd.f32 %v2304, %v2478
      %v2575 = vadd.f32 %v2305, %v2481
      %v2576 = vadd.f32 %v2306, %v2486
      %v2577 = vadd.f32 %v2307, %v2489
      %v2578 = vadd.f32 %v2308, %v2494
      %v2579 = vadd.f32 %v2309, %v2497
      %v2580 = vadd.f32 %v2310, %v2502
      %v2581 = vadd.f32 %v2311, %v2505
      %v2582 = vadd.f32 %v2312, %v2510
      %v2583 = vadd.f32 %v2313, %v2513
      %v2584 = vadd.f32 %v2314, %v2518
      %v2585 = vadd.f32 %v2315, %v2521
      %v2586 = vadd.f32 %v2316, %v2526
      %v2587 = vadd.f32 %v2317, %v2529
      %v2588 = vadd.f32 %v2318, %v2534
      %v2589 = vadd.f32 %v2319, %v2537
      %v2590 = vadd.f32 %v2320, %v2542
      %v2591 = vadd.f32 %v2321, %v2545
      %v2592 = vadd.f32 %v2322, %v2550
      %v2593 = vadd.f32 %v2323, %v2553
      %v2594 = vadd.f32 %v2324, %v2558
      %v2595 = vadd.f32 %v2325, %v2561
      %s2596 = scalar_lea.vmem %s1, 384
      %v2597 = vld [vmem:[%s2596] sm:$0xf]
      %v2598 = vld [vmem:[%s2596 + $0x4] sm:$0xf]
      %v2599 = vld [vmem:[%s2596 + $0x8] sm:$0xf]
      %v2600 = vld [vmem:[%s2596 + $0xc] sm:$0xf]
      %v2601 = vld [vmem:[%s2596 + $0x10] sm:$0xf]
      %v2602 = vld [vmem:[%s2596 + $0x14] sm:$0xf]
      %v2603 = vld [vmem:[%s2596 + $0x18] sm:$0xf]
      %v2604 = vld [vmem:[%s2596 + $0x1c] sm:$0xf]
      %v2605 = vld [vmem:[%s2596 + $0x20] sm:$0xf]
      %v2606 = vld [vmem:[%s2596 + $0x24] sm:$0xf]
      %v2607 = vld [vmem:[%s2596 + $0x28] sm:$0xf]
      %v2608 = vld [vmem:[%s2596 + $0x2c] sm:$0xf]
      %v2609 = vld [vmem:[%s2596 + $0x30] sm:$0xf]
      %v2610 = vld [vmem:[%s2596 + $0x34] sm:$0xf]
      %v2611 = vld [vmem:[%s2596 + $0x38] sm:$0xf]
      %v2612 = vld [vmem:[%s2596 + $0x3c] sm:$0xf]
      %v2615 = vunpack.c.l.b16 %v322
      %v2616 = vunpack.c.l.b16 %v323
      %v2617 = vpack.c.b16 %v2616, %v2615
      %v2635 = vunpack.c.l.b16 %v2597
      %v2636 = vunpack.c.l.b16 %v2598
      %v2637 = vunpack.c.l.b16 %v2599
      %v2638 = vunpack.c.l.b16 %v2600
      %v2639 = vunpack.c.l.b16 %v2601
      %v2640 = vunpack.c.l.b16 %v2602
      %v2641 = vunpack.c.l.b16 %v2603
      %v2642 = vunpack.c.l.b16 %v2604
      %v2643 = vunpack.c.l.b16 %v2605
      %v2644 = vunpack.c.l.b16 %v2606
      %v2645 = vunpack.c.l.b16 %v2607
      %v2646 = vunpack.c.l.b16 %v2608
      %v2647 = vunpack.c.l.b16 %v2609
      %v2648 = vunpack.c.l.b16 %v2610
      %v2649 = vunpack.c.l.b16 %v2611
      %v2650 = vunpack.c.l.b16 %v2612
      %v2651 = vpack.c.b16 %v2636, %v2635
      %v2652 = vpack.c.b16 %v2638, %v2637
      %v2653 = vpack.c.b16 %v2640, %v2639
      %v2654 = vpack.c.b16 %v2642, %v2641
      %v2655 = vpack.c.b16 %v2644, %v2643
      %v2656 = vpack.c.b16 %v2646, %v2645
      %v2657 = vpack.c.b16 %v2648, %v2647
      %v2658 = vpack.c.b16 %v2650, %v2649
      %2667 = vmatprep.subr.bf16.mxu0 0
      %2668 = vmatpush1.bf16.msra.mxu0 %v2658
      %2669 = vmatprep.subr.bf16.mxu0 0
      %2670 = vmatpush1.bf16.msra.mxu0 %v2657
      %2671 = vmatprep.subr.bf16.mxu0 0
      %2672 = vmatpush1.bf16.msra.mxu0 %v2656
      %2673 = vmatprep.subr.bf16.mxu0 0
      %2674 = vmatpush1.bf16.msra.mxu0 %v2655
      %2675 = vmatprep.subr.bf16.mxu0 0
      %2676 = vmatpush1.bf16.msra.mxu0 %v2654
      %2677 = vmatprep.subr.bf16.mxu0 0
      %2678 = vmatpush1.bf16.msra.mxu0 %v2653
      %2679 = vmatprep.subr.bf16.mxu0 0
      %2680 = vmatpush1.bf16.msra.mxu0 %v2652
      %2681 = vmatprep.subr.bf16.mxu0 0
      %2682 = vmatpush1.bf16.msra.mxu0 %v2651
      %2683 = vmatprep.subr.bf16.mxu0 0
      %2684 = vmatpush2.bf16.msra.mxu0 0
      %2685 = vmatprep.subr.bf16.mxu0 0
      %2686 = vmatpush2.bf16.msra.mxu0 0
      %2687 = vmatprep.subr.bf16.mxu0 0
      %2688 = vmatpush2.bf16.msra.mxu0 0
      %2689 = vmatprep.subr.bf16.mxu0 0
      %2690 = vmatpush2.bf16.msra.mxu0 0
      %2691 = vmatprep.subr.bf16.mxu0 0
      %2692 = vmatpush2.bf16.msra.mxu0 0
      %2693 = vmatprep.subr.bf16.mxu0 0
      %2694 = vmatpush2.bf16.msra.mxu0 0
      %2695 = vmatprep.subr.bf16.mxu0 0
      %2696 = vmatpush2.bf16.msra.mxu0 0
      %2697 = vmatprep.subr.bf16.mxu0 0
      %2698 = vmatpush2.bf16.msra.mxu0 0
      %2699 = vmatprep.mubr.bf16.mxu0 0
      %2700 = vmatmul.mubr.bf16.gmra.mxu0 %v1084
      %v2701 = vpop.f32.mrf.mxu0
      %v2702 = vadd.f32 0.0, %v2701
      %v2703 = vpop.f32.mrf.mxu0
      %v2704 = vpop.f32.mrf.mxu0
      %v2705 = vadd.f32 0.0, %v2704
      %v2706 = vpop.f32.mrf.mxu0
      %2707 = vmatprep.mubr.bf16.mxu0 0
      %2708 = vmatmul.mubr.bf16.gmra.mxu0 %v1085
      %v2709 = vpop.f32.mrf.mxu0
      %v2710 = vadd.f32 0.0, %v2709
      %v2711 = vpop.f32.mrf.mxu0
      %v2712 = vpop.f32.mrf.mxu0
      %v2713 = vadd.f32 0.0, %v2712
      %v2714 = vpop.f32.mrf.mxu0
      %2715 = vmatprep.mubr.bf16.mxu0 0
      %2716 = vmatmul.mubr.bf16.gmra.mxu0 %v1086
      %v2717 = vpop.f32.mrf.mxu0
      %v2718 = vadd.f32 0.0, %v2717
      %v2719 = vpop.f32.mrf.mxu0
      %v2720 = vpop.f32.mrf.mxu0
      %v2721 = vadd.f32 0.0, %v2720
      %v2722 = vpop.f32.mrf.mxu0
      %2723 = vmatprep.mubr.bf16.mxu0 0
      %2724 = vmatmul.mubr.bf16.gmra.mxu0 %v1087
      %v2725 = vpop.f32.mrf.mxu0
      %v2726 = vadd.f32 0.0, %v2725
      %v2727 = vpop.f32.mrf.mxu0
      %v2728 = vpop.f32.mrf.mxu0
      %v2729 = vadd.f32 0.0, %v2728
      %v2730 = vpop.f32.mrf.mxu0
      %2731 = vmatprep.mubr.bf16.mxu0 0
      %2732 = vmatmul.mubr.bf16.gmra.mxu0 %v1088
      %v2733 = vpop.f32.mrf.mxu0
      %v2734 = vadd.f32 0.0, %v2733
      %v2735 = vpop.f32.mrf.mxu0
      %v2736 = vpop.f32.mrf.mxu0
      %v2737 = vadd.f32 0.0, %v2736
      %v2738 = vpop.f32.mrf.mxu0
      %2739 = vmatprep.mubr.bf16.mxu0 0
      %2740 = vmatmul.mubr.bf16.gmra.mxu0 %v1089
      %v2741 = vpop.f32.mrf.mxu0
      %v2742 = vadd.f32 0.0, %v2741
      %v2743 = vpop.f32.mrf.mxu0
      %v2744 = vpop.f32.mrf.mxu0
      %v2745 = vadd.f32 0.0, %v2744
      %v2746 = vpop.f32.mrf.mxu0
      %2747 = vmatprep.mubr.bf16.mxu0 0
      %2748 = vmatmul.mubr.bf16.gmra.mxu0 %v1090
      %v2749 = vpop.f32.mrf.mxu0
      %v2750 = vadd.f32 0.0, %v2749
      %v2751 = vpop.f32.mrf.mxu0
      %v2752 = vpop.f32.mrf.mxu0
      %v2753 = vadd.f32 0.0, %v2752
      %v2754 = vpop.f32.mrf.mxu0
      %2755 = vmatprep.mubr.bf16.mxu0 0
      %2756 = vmatmul.mubr.bf16.gmra.mxu0 %v1091
      %v2757 = vpop.f32.mrf.mxu0
      %v2758 = vadd.f32 0.0, %v2757
      %v2759 = vpop.f32.mrf.mxu0
      %v2760 = vpop.f32.mrf.mxu0
      %v2761 = vadd.f32 0.0, %v2760
      %v2762 = vpop.f32.mrf.mxu0
      %2763 = vmatprep.mubr.bf16.mxu0 0
      %2764 = vmatmul.mubr.bf16.gmra.mxu0 %v1092
      %v2765 = vpop.f32.mrf.mxu0
      %v2766 = vadd.f32 0.0, %v2765
      %v2767 = vpop.f32.mrf.mxu0
      %v2768 = vpop.f32.mrf.mxu0
      %v2769 = vadd.f32 0.0, %v2768
      %v2770 = vpop.f32.mrf.mxu0
      %2771 = vmatprep.mubr.bf16.mxu0 0
      %2772 = vmatmul.mubr.bf16.gmra.mxu0 %v1093
      %v2773 = vpop.f32.mrf.mxu0
      %v2774 = vadd.f32 0.0, %v2773
      %v2775 = vpop.f32.mrf.mxu0
      %v2776 = vpop.f32.mrf.mxu0
      %v2777 = vadd.f32 0.0, %v2776
      %v2778 = vpop.f32.mrf.mxu0
      %2779 = vmatprep.mubr.bf16.mxu0 0
      %2780 = vmatmul.mubr.bf16.gmra.mxu0 %v1094
      %v2781 = vpop.f32.mrf.mxu0
      %v2782 = vadd.f32 0.0, %v2781
      %v2783 = vpop.f32.mrf.mxu0
      %v2784 = vpop.f32.mrf.mxu0
      %v2785 = vadd.f32 0.0, %v2784
      %v2786 = vpop.f32.mrf.mxu0
      %2787 = vmatprep.mubr.bf16.mxu0 0
      %2788 = vmatmul.mubr.bf16.gmra.mxu0 %v1095
      %v2789 = vpop.f32.mrf.mxu0
      %v2790 = vadd.f32 0.0, %v2789
      %v2791 = vpop.f32.mrf.mxu0
      %v2792 = vpop.f32.mrf.mxu0
      %v2793 = vadd.f32 0.0, %v2792
      %v2794 = vpop.f32.mrf.mxu0
      %2795 = vmatprep.mubr.bf16.mxu0 0
      %2796 = vmatmul.mubr.bf16.gmra.mxu0 %v1096
      %v2797 = vpop.f32.mrf.mxu0
      %v2798 = vadd.f32 0.0, %v2797
      %v2799 = vpop.f32.mrf.mxu0
      %v2800 = vpop.f32.mrf.mxu0
      %v2801 = vadd.f32 0.0, %v2800
      %v2802 = vpop.f32.mrf.mxu0
      %2803 = vmatprep.mubr.bf16.mxu0 0
      %2804 = vmatmul.mubr.bf16.gmra.mxu0 %v1097
      %v2805 = vpop.f32.mrf.mxu0
      %v2806 = vadd.f32 0.0, %v2805
      %v2807 = vpop.f32.mrf.mxu0
      %v2808 = vpop.f32.mrf.mxu0
      %v2809 = vadd.f32 0.0, %v2808
      %v2810 = vpop.f32.mrf.mxu0
      %2811 = vmatprep.mubr.bf16.mxu0 0
      %2812 = vmatmul.mubr.bf16.gmra.mxu0 %v1797
      %v2813 = vpop.f32.mrf.mxu0
      %v2814 = vadd.f32 0.0, %v2813
      %v2815 = vpop.f32.mrf.mxu0
      %v2816 = vpop.f32.mrf.mxu0
      %v2817 = vadd.f32 0.0, %v2816
      %v2818 = vpop.f32.mrf.mxu0
      %2819 = vmatprep.mubr.bf16.mxu0 0
      %2820 = vmatmul.mubr.bf16.gmra.mxu0 %v2617
      %v2821 = vpop.f32.mrf.mxu0
      %v2822 = vadd.f32 0.0, %v2821
      %v2823 = vpop.f32.mrf.mxu0
      %v2824 = vpop.f32.mrf.mxu0
      %v2825 = vadd.f32 0.0, %v2824
      %v2826 = vpop.f32.mrf.mxu0
      %2827 = vdwg.mxu0
      %v2828 = vadd.f32 %v2564, %v2702
      %v2829 = vadd.f32 %v2565, %v2705
      %v2830 = vadd.f32 %v2566, %v2710
      %v2831 = vadd.f32 %v2567, %v2713
      %v2832 = vadd.f32 %v2568, %v2718
      %v2833 = vadd.f32 %v2569, %v2721
      %v2834 = vadd.f32 %v2570, %v2726
      %v2835 = vadd.f32 %v2571, %v2729
      %v2836 = vadd.f32 %v2572, %v2734
      %v2837 = vadd.f32 %v2573, %v2737
      %v2838 = vadd.f32 %v2574, %v2742
      %v2839 = vadd.f32 %v2575, %v2745
      %v2840 = vadd.f32 %v2576, %v2750
      %v2841 = vadd.f32 %v2577, %v2753
      %v2842 = vadd.f32 %v2578, %v2758
      %v2843 = vadd.f32 %v2579, %v2761
      %v2844 = vadd.f32 %v2580, %v2766
      %v2845 = vadd.f32 %v2581, %v2769
      %v2846 = vadd.f32 %v2582, %v2774
      %v2847 = vadd.f32 %v2583, %v2777
      %v2848 = vadd.f32 %v2584, %v2782
      %v2849 = vadd.f32 %v2585, %v2785
      %v2850 = vadd.f32 %v2586, %v2790
      %v2851 = vadd.f32 %v2587, %v2793
      %v2852 = vadd.f32 %v2588, %v2798
      %v2853 = vadd.f32 %v2589, %v2801
      %v2854 = vadd.f32 %v2590, %v2806
      %v2855 = vadd.f32 %v2591, %v2809
      %v2856 = vadd.f32 %v2592, %v2814
      %v2857 = vadd.f32 %v2593, %v2817
      %v2858 = vadd.f32 %v2594, %v2822
      %v2859 = vadd.f32 %v2595, %v2825
      %v2861 = vshrl.u32 %v322, 16
      %v2863 = vrot.slane %v2861, 4
      %v2864 = vshll.u32 %v322, 16
      %v2866 = vrot.slane %v2864, 5
      %v2867 = vor.u32 %v2863, %v2866
      %v2868 = vrot.slane %v2867, 4
      %v2870 = vshll.u32 %v323, 16
      %v2872 = vrot.slane %v2870, 5
      %v2873 = vsel %vm343, %v2868, %v2872
      %v2874 = vshrl.u32 %v323, 16
      %v2876 = vrot.slane %v2874, 4
      %v2877 = vor.u32 %v2876, %v2872
      %v2878 = vrot.slane %v2877, 4
      %v2880 = vshll.u32 %v324, 16
      %v2882 = vrot.slane %v2880, 5
      %v2883 = vsel %vm343, %v2878, %v2882
      %s2884 = scalar_lea.vmem %s1, 448
      %v2885 = vld [vmem:[%s2884] sm:$0xf]
      %v2886 = vld [vmem:[%s2884 + $0x4] sm:$0xf]
      %v2887 = vld [vmem:[%s2884 + $0x8] sm:$0xf]
      %v2888 = vld [vmem:[%s2884 + $0xc] sm:$0xf]
      %v2889 = vld [vmem:[%s2884 + $0x10] sm:$0xf]
      %v2890 = vld [vmem:[%s2884 + $0x14] sm:$0xf]
      %v2891 = vld [vmem:[%s2884 + $0x18] sm:$0xf]
      %v2892 = vld [vmem:[%s2884 + $0x1c] sm:$0xf]
      %v2893 = vld [vmem:[%s2884 + $0x20] sm:$0xf]
      %v2894 = vld [vmem:[%s2884 + $0x24] sm:$0xf]
      %v2895 = vld [vmem:[%s2884 + $0x28] sm:$0xf]
      %v2896 = vld [vmem:[%s2884 + $0x2c] sm:$0xf]
      %v2897 = vld [vmem:[%s2884 + $0x30] sm:$0xf]
      %v2898 = vld [vmem:[%s2884 + $0x34] sm:$0xf]
      %v2899 = vld [vmem:[%s2884 + $0x38] sm:$0xf]
      %v2900 = vld [vmem:[%s2884 + $0x3c] sm:$0xf]
      %v2901 = vunpack.c.l.b16 %v2873
      %v2902 = vunpack.c.l.b16 %v2883
      %v2903 = vpack.c.b16 %v2902, %v2901
      %v2921 = vunpack.c.l.b16 %v2885
      %v2922 = vunpack.c.l.b16 %v2886
      %v2923 = vunpack.c.l.b16 %v2887
      %v2924 = vunpack.c.l.b16 %v2888
      %v2925 = vunpack.c.l.b16 %v2889
      %v2926 = vunpack.c.l.b16 %v2890
      %v2927 = vunpack.c.l.b16 %v2891
      %v2928 = vunpack.c.l.b16 %v2892
      %v2929 = vunpack.c.l.b16 %v2893
      %v2930 = vunpack.c.l.b16 %v2894
      %v2931 = vunpack.c.l.b16 %v2895
      %v2932 = vunpack.c.l.b16 %v2896
      %v2933 = vunpack.c.l.b16 %v2897
      %v2934 = vunpack.c.l.b16 %v2898
      %v2935 = vunpack.c.l.b16 %v2899
      %v2936 = vunpack.c.l.b16 %v2900
      %v2937 = vpack.c.b16 %v2922, %v2921
      %v2938 = vpack.c.b16 %v2924, %v2923
      %v2939 = vpack.c.b16 %v2926, %v2925
      %v2940 = vpack.c.b16 %v2928, %v2927
      %v2941 = vpack.c.b16 %v2930, %v2929
      %v2942 = vpack.c.b16 %v2932, %v2931
      %v2943 = vpack.c.b16 %v2934, %v2933
      %v2944 = vpack.c.b16 %v2936, %v2935
      %2953 = vmatprep.subr.bf16.mxu0 0
      %2954 = vmatpush1.bf16.msra.mxu0 %v2944
      %2955 = vmatprep.subr.bf16.mxu0 0
      %2956 = vmatpush1.bf16.msra.mxu0 %v2943
      %2957 = vmatprep.subr.bf16.mxu0 0
      %2958 = vmatpush1.bf16.msra.mxu0 %v2942
      %2959 = vmatprep.subr.bf16.mxu0 0
      %2960 = vmatpush1.bf16.msra.mxu0 %v2941
      %2961 = vmatprep.subr.bf16.mxu0 0
      %2962 = vmatpush1.bf16.msra.mxu0 %v2940
      %2963 = vmatprep.subr.bf16.mxu0 0
      %2964 = vmatpush1.bf16.msra.mxu0 %v2939
      %2965 = vmatprep.subr.bf16.mxu0 0
      %2966 = vmatpush1.bf16.msra.mxu0 %v2938
      %2967 = vmatprep.subr.bf16.mxu0 0
      %2968 = vmatpush1.bf16.msra.mxu0 %v2937
      %2969 = vmatprep.subr.bf16.mxu0 0
      %2970 = vmatpush2.bf16.msra.mxu0 0
      %2971 = vmatprep.subr.bf16.mxu0 0
      %2972 = vmatpush2.bf16.msra.mxu0 0
      %2973 = vmatprep.subr.bf16.mxu0 0
      %2974 = vmatpush2.bf16.msra.mxu0 0
      %2975 = vmatprep.subr.bf16.mxu0 0
      %2976 = vmatpush2.bf16.msra.mxu0 0
      %2977 = vmatprep.subr.bf16.mxu0 0
      %2978 = vmatpush2.bf16.msra.mxu0 0
      %2979 = vmatprep.subr.bf16.mxu0 0
      %2980 = vmatpush2.bf16.msra.mxu0 0
      %2981 = vmatprep.subr.bf16.mxu0 0
      %2982 = vmatpush2.bf16.msra.mxu0 0
      %2983 = vmatprep.subr.bf16.mxu0 0
      %2984 = vmatpush2.bf16.msra.mxu0 0
      %2985 = vmatprep.mubr.bf16.mxu0 0
      %2986 = vmatmul.mubr.bf16.gmra.mxu0 %v779
      %v2987 = vpop.f32.mrf.mxu0
      %v2988 = vadd.f32 0.0, %v2987
      %v2989 = vpop.f32.mrf.mxu0
      %v2990 = vpop.f32.mrf.mxu0
      %v2991 = vadd.f32 0.0, %v2990
      %v2992 = vpop.f32.mrf.mxu0
      %2993 = vmatprep.mubr.bf16.mxu0 0
      %2994 = vmatmul.mubr.bf16.gmra.mxu0 %v780
      %v2995 = vpop.f32.mrf.mxu0
      %v2996 = vadd.f32 0.0, %v2995
      %v2997 = vpop.f32.mrf.mxu0
      %v2998 = vpop.f32.mrf.mxu0
      %v2999 = vadd.f32 0.0, %v2998
      %v3000 = vpop.f32.mrf.mxu0
      %3001 = vmatprep.mubr.bf16.mxu0 0
      %3002 = vmatmul.mubr.bf16.gmra.mxu0 %v781
      %v3003 = vpop.f32.mrf.mxu0
      %v3004 = vadd.f32 0.0, %v3003
      %v3005 = vpop.f32.mrf.mxu0
      %v3006 = vpop.f32.mrf.mxu0
      %v3007 = vadd.f32 0.0, %v3006
      %v3008 = vpop.f32.mrf.mxu0
      %3009 = vmatprep.mubr.bf16.mxu0 0
      %3010 = vmatmul.mubr.bf16.gmra.mxu0 %v782
      %v3011 = vpop.f32.mrf.mxu0
      %v3012 = vadd.f32 0.0, %v3011
      %v3013 = vpop.f32.mrf.mxu0
      %v3014 = vpop.f32.mrf.mxu0
      %v3015 = vadd.f32 0.0, %v3014
      %v3016 = vpop.f32.mrf.mxu0
      %3017 = vmatprep.mubr.bf16.mxu0 0
      %3018 = vmatmul.mubr.bf16.gmra.mxu0 %v783
      %v3019 = vpop.f32.mrf.mxu0
      %v3020 = vadd.f32 0.0, %v3019
      %v3021 = vpop.f32.mrf.mxu0
      %v3022 = vpop.f32.mrf.mxu0
      %v3023 = vadd.f32 0.0, %v3022
      %v3024 = vpop.f32.mrf.mxu0
      %3025 = vmatprep.mubr.bf16.mxu0 0
      %3026 = vmatmul.mubr.bf16.gmra.mxu0 %v784
      %v3027 = vpop.f32.mrf.mxu0
      %v3028 = vadd.f32 0.0, %v3027
      %v3029 = vpop.f32.mrf.mxu0
      %v3030 = vpop.f32.mrf.mxu0
      %v3031 = vadd.f32 0.0, %v3030
      %v3032 = vpop.f32.mrf.mxu0
      %3033 = vmatprep.mubr.bf16.mxu0 0
      %3034 = vmatmul.mubr.bf16.gmra.mxu0 %v785
      %v3035 = vpop.f32.mrf.mxu0
      %v3036 = vadd.f32 0.0, %v3035
      %v3037 = vpop.f32.mrf.mxu0
      %v3038 = vpop.f32.mrf.mxu0
      %v3039 = vadd.f32 0.0, %v3038
      %v3040 = vpop.f32.mrf.mxu0
      %3041 = vmatprep.mubr.bf16.mxu0 0
      %3042 = vmatmul.mubr.bf16.gmra.mxu0 %v786
      %v3043 = vpop.f32.mrf.mxu0
      %v3044 = vadd.f32 0.0, %v3043
      %v3045 = vpop.f32.mrf.mxu0
      %v3046 = vpop.f32.mrf.mxu0
      %v3047 = vadd.f32 0.0, %v3046
      %v3048 = vpop.f32.mrf.mxu0
      %3049 = vmatprep.mubr.bf16.mxu0 0
      %3050 = vmatmul.mubr.bf16.gmra.mxu0 %v787
      %v3051 = vpop.f32.mrf.mxu0
      %v3052 = vadd.f32 0.0, %v3051
      %v3053 = vpop.f32.mrf.mxu0
      %v3054 = vpop.f32.mrf.mxu0
      %v3055 = vadd.f32 0.0, %v3054
      %v3056 = vpop.f32.mrf.mxu0
      %3057 = vmatprep.mubr.bf16.mxu0 0
      %3058 = vmatmul.mubr.bf16.gmra.mxu0 %v788
      %v3059 = vpop.f32.mrf.mxu0
      %v3060 = vadd.f32 0.0, %v3059
      %v3061 = vpop.f32.mrf.mxu0
      %v3062 = vpop.f32.mrf.mxu0
      %v3063 = vadd.f32 0.0, %v3062
      %v3064 = vpop.f32.mrf.mxu0
      %3065 = vmatprep.mubr.bf16.mxu0 0
      %3066 = vmatmul.mubr.bf16.gmra.mxu0 %v789
      %v3067 = vpop.f32.mrf.mxu0
      %v3068 = vadd.f32 0.0, %v3067
      %v3069 = vpop.f32.mrf.mxu0
      %v3070 = vpop.f32.mrf.mxu0
      %v3071 = vadd.f32 0.0, %v3070
      %v3072 = vpop.f32.mrf.mxu0
      %3073 = vmatprep.mubr.bf16.mxu0 0
      %3074 = vmatmul.mubr.bf16.gmra.mxu0 %v790
      %v3075 = vpop.f32.mrf.mxu0
      %v3076 = vadd.f32 0.0, %v3075
      %v3077 = vpop.f32.mrf.mxu0
      %v3078 = vpop.f32.mrf.mxu0
      %v3079 = vadd.f32 0.0, %v3078
      %v3080 = vpop.f32.mrf.mxu0
      %3081 = vmatprep.mubr.bf16.mxu0 0
      %3082 = vmatmul.mubr.bf16.gmra.mxu0 %v791
      %v3083 = vpop.f32.mrf.mxu0
      %v3084 = vadd.f32 0.0, %v3083
      %v3085 = vpop.f32.mrf.mxu0
      %v3086 = vpop.f32.mrf.mxu0
      %v3087 = vadd.f32 0.0, %v3086
      %v3088 = vpop.f32.mrf.mxu0
      %3089 = vmatprep.mubr.bf16.mxu0 0
      %3090 = vmatmul.mubr.bf16.gmra.mxu0 %v792
      %v3091 = vpop.f32.mrf.mxu0
      %v3092 = vadd.f32 0.0, %v3091
      %v3093 = vpop.f32.mrf.mxu0
      %v3094 = vpop.f32.mrf.mxu0
      %v3095 = vadd.f32 0.0, %v3094
      %v3096 = vpop.f32.mrf.mxu0
      %3097 = vmatprep.mubr.bf16.mxu0 0
      %3098 = vmatmul.mubr.bf16.gmra.mxu0 %v2083
      %v3099 = vpop.f32.mrf.mxu0
      %v3100 = vadd.f32 0.0, %v3099
      %v3101 = vpop.f32.mrf.mxu0
      %v3102 = vpop.f32.mrf.mxu0
      %v3103 = vadd.f32 0.0, %v3102
      %v3104 = vpop.f32.mrf.mxu0
      %3105 = vmatprep.mubr.bf16.mxu0 0
      %3106 = vmatmul.mubr.bf16.gmra.mxu0 %v2903
      %v3107 = vpop.f32.mrf.mxu0
      %v3108 = vadd.f32 0.0, %v3107
      %v3109 = vpop.f32.mrf.mxu0
      %v3110 = vpop.f32.mrf.mxu0
      %v3111 = vadd.f32 0.0, %v3110
      %v3112 = vpop.f32.mrf.mxu0
      %3113 = vdwg.mxu0
      %v3114 = vadd.f32 %v2828, %v2988
      %v3115 = vadd.f32 %v2829, %v2991
      %v3116 = vadd.f32 %v2830, %v2996
      %v3117 = vadd.f32 %v2831, %v2999
      %v3118 = vadd.f32 %v2832, %v3004
      %v3119 = vadd.f32 %v2833, %v3007
      %v3120 = vadd.f32 %v2834, %v3012
      %v3121 = vadd.f32 %v2835, %v3015
      %v3122 = vadd.f32 %v2836, %v3020
      %v3123 = vadd.f32 %v2837, %v3023
      %v3124 = vadd.f32 %v2838, %v3028
      %v3125 = vadd.f32 %v2839, %v3031
      %v3126 = vadd.f32 %v2840, %v3036
      %v3127 = vadd.f32 %v2841, %v3039
      %v3128 = vadd.f32 %v2842, %v3044
      %v3129 = vadd.f32 %v2843, %v3047
      %v3130 = vadd.f32 %v2844, %v3052
      %v3131 = vadd.f32 %v2845, %v3055
      %v3132 = vadd.f32 %v2846, %v3060
      %v3133 = vadd.f32 %v2847, %v3063
      %v3134 = vadd.f32 %v2848, %v3068
      %v3135 = vadd.f32 %v2849, %v3071
      %v3136 = vadd.f32 %v2850, %v3076
      %v3137 = vadd.f32 %v2851, %v3079
      %v3138 = vadd.f32 %v2852, %v3084
      %v3139 = vadd.f32 %v2853, %v3087
      %v3140 = vadd.f32 %v2854, %v3092
      %v3141 = vadd.f32 %v2855, %v3095
      %v3142 = vadd.f32 %v2856, %v3100
      %v3143 = vadd.f32 %v2857, %v3103
      %v3144 = vadd.f32 %v2858, %v3108
      %v3145 = vadd.f32 %v2859, %v3111
      %v3147 = vrot.slane %v322, 5
      %v3148 = vrot.slane %v3147, 4
      %v3149 = vrot.slane %v323, 5
      %v3150 = vsel %vm1341, %v3148, %v3149
      %v3151 = vrot.slane %v3149, 4
      %v3152 = vrot.slane %v324, 5
      %v3153 = vsel %vm1341, %v3151, %v3152
      %s3154 = scalar_lea.vmem %s1, 512
      %v3155 = vld [vmem:[%s3154] sm:$0xf]
      %v3156 = vld [vmem:[%s3154 + $0x4] sm:$0xf]
      %v3157 = vld [vmem:[%s3154 + $0x8] sm:$0xf]
      %v3158 = vld [vmem:[%s3154 + $0xc] sm:$0xf]
      %v3159 = vld [vmem:[%s3154 + $0x10] sm:$0xf]
      %v3160 = vld [vmem:[%s3154 + $0x14] sm:$0xf]
      %v3161 = vld [vmem:[%s3154 + $0x18] sm:$0xf]
      %v3162 = vld [vmem:[%s3154 + $0x1c] sm:$0xf]
      %v3163 = vld [vmem:[%s3154 + $0x20] sm:$0xf]
      %v3164 = vld [vmem:[%s3154 + $0x24] sm:$0xf]
      %v3165 = vld [vmem:[%s3154 + $0x28] sm:$0xf]
      %v3166 = vld [vmem:[%s3154 + $0x2c] sm:$0xf]
      %v3167 = vld [vmem:[%s3154 + $0x30] sm:$0xf]
      %v3168 = vld [vmem:[%s3154 + $0x34] sm:$0xf]
      %v3169 = vld [vmem:[%s3154 + $0x38] sm:$0xf]
      %v3170 = vld [vmem:[%s3154 + $0x3c] sm:$0xf]
      %v3171 = vunpack.c.l.b16 %v3150
      %v3172 = vunpack.c.l.b16 %v3153
      %v3173 = vpack.c.b16 %v3172, %v3171
      %v3191 = vunpack.c.l.b16 %v3155
      %v3192 = vunpack.c.l.b16 %v3156
      %v3193 = vunpack.c.l.b16 %v3157
      %v3194 = vunpack.c.l.b16 %v3158
      %v3195 = vunpack.c.l.b16 %v3159
      %v3196 = vunpack.c.l.b16 %v3160
      %v3197 = vunpack.c.l.b16 %v3161
      %v3198 = vunpack.c.l.b16 %v3162
      %v3199 = vunpack.c.l.b16 %v3163
      %v3200 = vunpack.c.l.b16 %v3164
      %v3201 = vunpack.c.l.b16 %v3165
      %v3202 = vunpack.c.l.b16 %v3166
      %v3203 = vunpack.c.l.b16 %v3167
      %v3204 = vunpack.c.l.b16 %v3168
      %v3205 = vunpack.c.l.b16 %v3169
      %v3206 = vunpack.c.l.b16 %v3170
      %v3207 = vpack.c.b16 %v3192, %v3191
      %v3208 = vpack.c.b16 %v3194, %v3193
      %v3209 = vpack.c.b16 %v3196, %v3195
      %v3210 = vpack.c.b16 %v3198, %v3197
      %v3211 = vpack.c.b16 %v3200, %v3199
      %v3212 = vpack.c.b16 %v3202, %v3201
      %v3213 = vpack.c.b16 %v3204, %v3203
      %v3214 = vpack.c.b16 %v3206, %v3205
      %3223 = vmatprep.subr.bf16.mxu0 0
      %3224 = vmatpush1.bf16.msra.mxu0 %v3214
      %3225 = vmatprep.subr.bf16.mxu0 0
      %3226 = vmatpush1.bf16.msra.mxu0 %v3213
      %3227 = vmatprep.subr.bf16.mxu0 0
      %3228 = vmatpush1.bf16.msra.mxu0 %v3212
      %3229 = vmatprep.subr.bf16.mxu0 0
      %3230 = vmatpush1.bf16.msra.mxu0 %v3211
      %3231 = vmatprep.subr.bf16.mxu0 0
      %3232 = vmatpush1.bf16.msra.mxu0 %v3210
      %3233 = vmatprep.subr.bf16.mxu0 0
      %3234 = vmatpush1.bf16.msra.mxu0 %v3209
      %3235 = vmatprep.subr.bf16.mxu0 0
      %3236 = vmatpush1.bf16.msra.mxu0 %v3208
      %3237 = vmatprep.subr.bf16.mxu0 0
      %3238 = vmatpush1.bf16.msra.mxu0 %v3207
      %3239 = vmatprep.subr.bf16.mxu0 0
      %3240 = vmatpush2.bf16.msra.mxu0 0
      %3241 = vmatprep.subr.bf16.mxu0 0
      %3242 = vmatpush2.bf16.msra.mxu0 0
      %3243 = vmatprep.subr.bf16.mxu0 0
      %3244 = vmatpush2.bf16.msra.mxu0 0
      %3245 = vmatprep.subr.bf16.mxu0 0
      %3246 = vmatpush2.bf16.msra.mxu0 0
      %3247 = vmatprep.subr.bf16.mxu0 0
      %3248 = vmatpush2.bf16.msra.mxu0 0
      %3249 = vmatprep.subr.bf16.mxu0 0
      %3250 = vmatpush2.bf16.msra.mxu0 0
      %3251 = vmatprep.subr.bf16.mxu0 0
      %3252 = vmatpush2.bf16.msra.mxu0 0
      %3253 = vmatprep.subr.bf16.mxu0 0
      %3254 = vmatpush2.bf16.msra.mxu0 0
      %3255 = vmatprep.mubr.bf16.mxu0 0
      %3256 = vmatmul.mubr.bf16.gmra.mxu0 %v1505
      %v3257 = vpop.f32.mrf.mxu0
      %v3258 = vadd.f32 0.0, %v3257
      %v3259 = vpop.f32.mrf.mxu0
      %v3260 = vpop.f32.mrf.mxu0
      %v3261 = vadd.f32 0.0, %v3260
      %v3262 = vpop.f32.mrf.mxu0
      %3263 = vmatprep.mubr.bf16.mxu0 0
      %3264 = vmatmul.mubr.bf16.gmra.mxu0 %v1506
      %v3265 = vpop.f32.mrf.mxu0
      %v3266 = vadd.f32 0.0, %v3265
      %v3267 = vpop.f32.mrf.mxu0
      %v3268 = vpop.f32.mrf.mxu0
      %v3269 = vadd.f32 0.0, %v3268
      %v3270 = vpop.f32.mrf.mxu0
      %3271 = vmatprep.mubr.bf16.mxu0 0
      %3272 = vmatmul.mubr.bf16.gmra.mxu0 %v1507
      %v3273 = vpop.f32.mrf.mxu0
      %v3274 = vadd.f32 0.0, %v3273
      %v3275 = vpop.f32.mrf.mxu0
      %v3276 = vpop.f32.mrf.mxu0
      %v3277 = vadd.f32 0.0, %v3276
      %v3278 = vpop.f32.mrf.mxu0
      %3279 = vmatprep.mubr.bf16.mxu0 0
      %3280 = vmatmul.mubr.bf16.gmra.mxu0 %v1508
      %v3281 = vpop.f32.mrf.mxu0
      %v3282 = vadd.f32 0.0, %v3281
      %v3283 = vpop.f32.mrf.mxu0
      %v3284 = vpop.f32.mrf.mxu0
      %v3285 = vadd.f32 0.0, %v3284
      %v3286 = vpop.f32.mrf.mxu0
      %3287 = vmatprep.mubr.bf16.mxu0 0
      %3288 = vmatmul.mubr.bf16.gmra.mxu0 %v1509
      %v3289 = vpop.f32.mrf.mxu0
      %v3290 = vadd.f32 0.0, %v3289
      %v3291 = vpop.f32.mrf.mxu0
      %v3292 = vpop.f32.mrf.mxu0
      %v3293 = vadd.f32 0.0, %v3292
      %v3294 = vpop.f32.mrf.mxu0
      %3295 = vmatprep.mubr.bf16.mxu0 0
      %3296 = vmatmul.mubr.bf16.gmra.mxu0 %v1510
      %v3297 = vpop.f32.mrf.mxu0
      %v3298 = vadd.f32 0.0, %v3297
      %v3299 = vpop.f32.mrf.mxu0
      %v3300 = vpop.f32.mrf.mxu0
      %v3301 = vadd.f32 0.0, %v3300
      %v3302 = vpop.f32.mrf.mxu0
      %3303 = vmatprep.mubr.bf16.mxu0 0
      %3304 = vmatmul.mubr.bf16.gmra.mxu0 %v1511
      %v3305 = vpop.f32.mrf.mxu0
      %v3306 = vadd.f32 0.0, %v3305
      %v3307 = vpop.f32.mrf.mxu0
      %v3308 = vpop.f32.mrf.mxu0
      %v3309 = vadd.f32 0.0, %v3308
      %v3310 = vpop.f32.mrf.mxu0
      %3311 = vmatprep.mubr.bf16.mxu0 0
      %3312 = vmatmul.mubr.bf16.gmra.mxu0 %v1512
      %v3313 = vpop.f32.mrf.mxu0
      %v3314 = vadd.f32 0.0, %v3313
      %v3315 = vpop.f32.mrf.mxu0
      %v3316 = vpop.f32.mrf.mxu0
      %v3317 = vadd.f32 0.0, %v3316
      %v3318 = vpop.f32.mrf.mxu0
      %3319 = vmatprep.mubr.bf16.mxu0 0
      %3320 = vmatmul.mubr.bf16.gmra.mxu0 %v1513
      %v3321 = vpop.f32.mrf.mxu0
      %v3322 = vadd.f32 0.0, %v3321
      %v3323 = vpop.f32.mrf.mxu0
      %v3324 = vpop.f32.mrf.mxu0
      %v3325 = vadd.f32 0.0, %v3324
      %v3326 = vpop.f32.mrf.mxu0
      %3327 = vmatprep.mubr.bf16.mxu0 0
      %3328 = vmatmul.mubr.bf16.gmra.mxu0 %v1514
      %v3329 = vpop.f32.mrf.mxu0
      %v3330 = vadd.f32 0.0, %v3329
      %v3331 = vpop.f32.mrf.mxu0
      %v3332 = vpop.f32.mrf.mxu0
      %v3333 = vadd.f32 0.0, %v3332
      %v3334 = vpop.f32.mrf.mxu0
      %3335 = vmatprep.mubr.bf16.mxu0 0
      %3336 = vmatmul.mubr.bf16.gmra.mxu0 %v1515
      %v3337 = vpop.f32.mrf.mxu0
      %v3338 = vadd.f32 0.0, %v3337
      %v3339 = vpop.f32.mrf.mxu0
      %v3340 = vpop.f32.mrf.mxu0
      %v3341 = vadd.f32 0.0, %v3340
      %v3342 = vpop.f32.mrf.mxu0
      %3343 = vmatprep.mubr.bf16.mxu0 0
      %3344 = vmatmul.mubr.bf16.gmra.mxu0 %v1516
      %v3345 = vpop.f32.mrf.mxu0
      %v3346 = vadd.f32 0.0, %v3345
      %v3347 = vpop.f32.mrf.mxu0
      %v3348 = vpop.f32.mrf.mxu0
      %v3349 = vadd.f32 0.0, %v3348
      %v3350 = vpop.f32.mrf.mxu0
      %3351 = vmatprep.mubr.bf16.mxu0 0
      %3352 = vmatmul.mubr.bf16.gmra.mxu0 %v1517
      %v3353 = vpop.f32.mrf.mxu0
      %v3354 = vadd.f32 0.0, %v3353
      %v3355 = vpop.f32.mrf.mxu0
      %v3356 = vpop.f32.mrf.mxu0
      %v3357 = vadd.f32 0.0, %v3356
      %v3358 = vpop.f32.mrf.mxu0
      %3359 = vmatprep.mubr.bf16.mxu0 0
      %3360 = vmatmul.mubr.bf16.gmra.mxu0 %v1518
      %v3361 = vpop.f32.mrf.mxu0
      %v3362 = vadd.f32 0.0, %v3361
      %v3363 = vpop.f32.mrf.mxu0
      %v3364 = vpop.f32.mrf.mxu0
      %v3365 = vadd.f32 0.0, %v3364
      %v3366 = vpop.f32.mrf.mxu0
      %3367 = vmatprep.mubr.bf16.mxu0 0
      %3368 = vmatmul.mubr.bf16.gmra.mxu0 %v2353
      %v3369 = vpop.f32.mrf.mxu0
      %v3370 = vadd.f32 0.0, %v3369
      %v3371 = vpop.f32.mrf.mxu0
      %v3372 = vpop.f32.mrf.mxu0
      %v3373 = vadd.f32 0.0, %v3372
      %v3374 = vpop.f32.mrf.mxu0
      %3375 = vmatprep.mubr.bf16.mxu0 0
      %3376 = vmatmul.mubr.bf16.gmra.mxu0 %v3173
      %v3377 = vpop.f32.mrf.mxu0
      %v3378 = vadd.f32 0.0, %v3377
      %v3379 = vpop.f32.mrf.mxu0
      %v3380 = vpop.f32.mrf.mxu0
      %v3381 = vadd.f32 0.0, %v3380
      %v3382 = vpop.f32.mrf.mxu0
      %3383 = vdwg.mxu0
      %v3384 = vadd.f32 %v3114, %v3258
      %v3385 = vadd.f32 %v3115, %v3261
      %v3386 = vadd.f32 %v3116, %v3266
      %v3387 = vadd.f32 %v3117, %v3269
      %v3388 = vadd.f32 %v3118, %v3274
      %v3389 = vadd.f32 %v3119, %v3277
      %v3390 = vadd.f32 %v3120, %v3282
      %v3391 = vadd.f32 %v3121, %v3285
      %v3392 = vadd.f32 %v3122, %v3290
      %v3393 = vadd.f32 %v3123, %v3293
      %v3394 = vadd.f32 %v3124, %v3298
      %v3395 = vadd.f32 %v3125, %v3301
      %v3396 = vadd.f32 %v3126, %v3306
      %v3397 = vadd.f32 %v3127, %v3309
      %v3398 = vadd.f32 %v3128, %v3314
      %v3399 = vadd.f32 %v3129, %v3317
      %v3400 = vadd.f32 %v3130, %v3322
      %v3401 = vadd.f32 %v3131, %v3325
      %v3402 = vadd.f32 %v3132, %v3330
      %v3403 = vadd.f32 %v3133, %v3333
      %v3404 = vadd.f32 %v3134, %v3338
      %v3405 = vadd.f32 %v3135, %v3341
      %v3406 = vadd.f32 %v3136, %v3346
      %v3407 = vadd.f32 %v3137, %v3349
      %v3408 = vadd.f32 %v3138, %v3354
      %v3409 = vadd.f32 %v3139, %v3357
      %v3410 = vadd.f32 %v3140, %v3362
      %v3411 = vadd.f32 %v3141, %v3365
      %v3412 = vadd.f32 %v3142, %v3370
      %v3413 = vadd.f32 %v3143, %v3373
      %v3414 = vadd.f32 %v3144, %v3378
      %v3415 = vadd.f32 %v3145, %v3381
      %3416 = vst [vmem:[%s256] sm:$0xff] %v3384
      %3417 = vst [vmem:[%s256 + $0x8] sm:$0xff] %v3385
      %3418 = vst [vmem:[%s256 + $0x10] sm:$0xff] %v3386
      %3419 = vst [vmem:[%s256 + $0x18] sm:$0xff] %v3387
      %3420 = vst [vmem:[%s256 + $0x20] sm:$0xff] %v3388
      %3421 = vst [vmem:[%s256 + $0x28] sm:$0xff] %v3389
      %3422 = vst [vmem:[%s256 + $0x30] sm:$0xff] %v3390
      %3423 = vst [vmem:[%s256 + $0x38] sm:$0xff] %v3391
      %3424 = vst [vmem:[%s256 + $0x40] sm:$0xff] %v3392
      %3425 = vst [vmem:[%s256 + $0x48] sm:$0xff] %v3393
      %3426 = vst [vmem:[%s256 + $0x50] sm:$0xff] %v3394
      %3427 = vst [vmem:[%s256 + $0x58] sm:$0xff] %v3395
      %3428 = vst [vmem:[%s256 + $0x60] sm:$0xff] %v3396
      %3429 = vst [vmem:[%s256 + $0x68] sm:$0xff] %v3397
      %3430 = vst [vmem:[%s256 + $0x70] sm:$0xff] %v3398
      %3431 = vst [vmem:[%s256 + $0x78] sm:$0xff] %v3399
      %3432 = vst [vmem:[%s256 + $0x80] sm:$0xff] %v3400
      %3433 = vst [vmem:[%s256 + $0x88] sm:$0xff] %v3401
      %3434 = vst [vmem:[%s256 + $0x90] sm:$0xff] %v3402
      %3435 = vst [vmem:[%s256 + $0x98] sm:$0xff] %v3403
      %3436 = vst [vmem:[%s256 + $0xa0] sm:$0xff] %v3404
      %3437 = vst [vmem:[%s256 + $0xa8] sm:$0xff] %v3405
      %3438 = vst [vmem:[%s256 + $0xb0] sm:$0xff] %v3406
      %3439 = vst [vmem:[%s256 + $0xb8] sm:$0xff] %v3407
      %3440 = vst [vmem:[%s256 + $0xc0] sm:$0xff] %v3408
      %3441 = vst [vmem:[%s256 + $0xc8] sm:$0xff] %v3409
      %3442 = vst [vmem:[%s256 + $0xd0] sm:$0xff] %v3410
      %3443 = vst [vmem:[%s256 + $0xd8] sm:$0xff] %v3411
      %3444 = vst [vmem:[%s256 + $0xe0] sm:$0xff] %v3412
      %3445 = vst [vmem:[%s256 + $0xe8] sm:$0xff] %v3413
      %3446 = vst [vmem:[%s256 + $0xf0] sm:$0xff] %v3414
      %3447 = vst [vmem:[%s256 + $0xf8] sm:$0xff] %v3415
      %v3448 = vadd.f32 %v3384, %v3385
      %v3449 = vadd.f32 %v3448, %v3386
      %v3450 = vadd.f32 %v3449, %v3387
      %v3451 = vadd.f32 %v3450, %v3388
      %v3452 = vadd.f32 %v3451, %v3389
      %v3453 = vadd.f32 %v3452, %v3390
      %v3454 = vadd.f32 %v3453, %v3391
      %v3455 = vadd.f32 %v3454, %v3392
      %v3456 = vadd.f32 %v3455, %v3393
      %v3457 = vadd.f32 %v3456, %v3394
      %v3458 = vadd.f32 %v3457, %v3395
      %v3459 = vadd.f32 %v3458, %v3396
      %v3460 = vadd.f32 %v3459, %v3397
      %v3461 = vadd.f32 %v3460, %v3398
      %v3462 = vadd.f32 %v3461, %v3399
      %v3463 = vadd.f32 %v3462, %v3400
      %v3464 = vadd.f32 %v3463, %v3401
      %v3465 = vadd.f32 %v3464, %v3402
      %v3466 = vadd.f32 %v3465, %v3403
      %v3467 = vadd.f32 %v3466, %v3404
      %v3468 = vadd.f32 %v3467, %v3405
      %v3469 = vadd.f32 %v3468, %v3406
      %v3470 = vadd.f32 %v3469, %v3407
      %v3471 = vadd.f32 %v3470, %v3408
      %v3472 = vadd.f32 %v3471, %v3409
      %v3473 = vadd.f32 %v3472, %v3410
      %v3474 = vadd.f32 %v3473, %v3411
      %v3475 = vadd.f32 %v3474, %v3412
      %v3476 = vadd.f32 %v3475, %v3413
      %v3477 = vadd.f32 %v3476, %v3414
      %v3478 = vadd.f32 %v3477, %v3415
      %v3479 = vrot.slane %v3478, 4
      %v3480 = vadd.f32 %v3478, %v3479
      %v3481 = vrot.slane %v3480, 2
      %v3482 = vadd.f32 %v3480, %v3481
      %v3483 = vrot.slane %v3482, 1
      %v3484 = vadd.f32 %v3482, %v3483
      %3485 = vst [vmem:[%s263] sm:$0x1] %v3484
      %v3486 = vmul.f32 %v3384, %v3384
      %v3487 = vmul.f32 %v3385, %v3385
      %v3488 = vmul.f32 %v3386, %v3386
      %v3489 = vmul.f32 %v3387, %v3387
      %v3490 = vmul.f32 %v3388, %v3388
      %v3491 = vmul.f32 %v3389, %v3389
      %v3492 = vmul.f32 %v3390, %v3390
      %v3493 = vmul.f32 %v3391, %v3391
      %v3494 = vmul.f32 %v3392, %v3392
      %v3495 = vmul.f32 %v3393, %v3393
      %v3496 = vmul.f32 %v3394, %v3394
      %v3497 = vmul.f32 %v3395, %v3395
      %v3498 = vmul.f32 %v3396, %v3396
      %v3499 = vmul.f32 %v3397, %v3397
      %v3500 = vmul.f32 %v3398, %v3398
      %v3501 = vmul.f32 %v3399, %v3399
      %v3502 = vmul.f32 %v3400, %v3400
      %v3503 = vmul.f32 %v3401, %v3401
      %v3504 = vmul.f32 %v3402, %v3402
      %v3505 = vmul.f32 %v3403, %v3403
      %v3506 = vmul.f32 %v3404, %v3404
      %v3507 = vmul.f32 %v3405, %v3405
      %v3508 = vmul.f32 %v3406, %v3406
      %v3509 = vmul.f32 %v3407, %v3407
      %v3510 = vmul.f32 %v3408, %v3408
      %v3511 = vmul.f32 %v3409, %v3409
      %v3512 = vmul.f32 %v3410, %v3410
      %v3513 = vmul.f32 %v3411, %v3411
      %v3514 = vmul.f32 %v3412, %v3412
      %v3515 = vmul.f32 %v3413, %v3413
      %v3516 = vmul.f32 %v3414, %v3414
      %v3517 = vmul.f32 %v3415, %v3415
      %v3518 = vadd.f32 %v3486, %v3487
      %v3519 = vadd.f32 %v3518, %v3488
      %v3520 = vadd.f32 %v3519, %v3489
      %v3521 = vadd.f32 %v3520, %v3490
      %v3522 = vadd.f32 %v3521, %v3491
      %v3523 = vadd.f32 %v3522, %v3492
      %v3524 = vadd.f32 %v3523, %v3493
      %v3525 = vadd.f32 %v3524, %v3494
      %v3526 = vadd.f32 %v3525, %v3495
      %v3527 = vadd.f32 %v3526, %v3496
      %v3528 = vadd.f32 %v3527, %v3497
      %v3529 = vadd.f32 %v3528, %v3498
      %v3530 = vadd.f32 %v3529, %v3499
      %v3531 = vadd.f32 %v3530, %v3500
      %v3532 = vadd.f32 %v3531, %v3501
      %v3533 = vadd.f32 %v3532, %v3502
      %v3534 = vadd.f32 %v3533, %v3503
      %v3535 = vadd.f32 %v3534, %v3504
      %v3536 = vadd.f32 %v3535, %v3505
      %v3537 = vadd.f32 %v3536, %v3506
      %v3538 = vadd.f32 %v3537, %v3507
      %v3539 = vadd.f32 %v3538, %v3508
      %v3540 = vadd.f32 %v3539, %v3509
      %v3541 = vadd.f32 %v3540, %v3510
      %v3542 = vadd.f32 %v3541, %v3511
      %v3543 = vadd.f32 %v3542, %v3512
      %v3544 = vadd.f32 %v3543, %v3513
      %v3545 = vadd.f32 %v3544, %v3514
      %v3546 = vadd.f32 %v3545, %v3515
      %v3547 = vadd.f32 %v3546, %v3516
      %v3548 = vadd.f32 %v3547, %v3517
      %v3549 = vrot.slane %v3548, 4
      %v3550 = vadd.f32 %v3548, %v3549
      %v3551 = vrot.slane %v3550, 2
      %v3552 = vadd.f32 %v3550, %v3551
      %v3553 = vrot.slane %v3552, 1
      %v3554 = vadd.f32 %v3552, %v3553
      %3555 = vst [vmem:[%s269] sm:$0x1] %v3554
      %s3556 = smul.u32 16, %s21
      %p3557 = scmp.lt.s32.totalorder %s20, 1
      %s3558 = scalar_select %p3557, %s20, 1
      %p3559 = scmp.lt.s32.totalorder %s3556, 15
      %s3560 = scalar_select %p3559, %s3556, 15
      %s3561 = smul.addr %s3560, 2
      %s3562 = smul.addr %s3558, 32
      %s3563 = sadd.s32 %s3561, %s3562
      %s3564 = smul.addr %s3563, 8
      %s3565 = scalar_lea.vmem %s2, %s3564
      %p3566 = scmp.lt.s32.totalorder %s20, 1
      %s3567 = scalar_select %p3566, %s20, 1
      %p3568 = scmp.lt.s32.totalorder %s21, 0
      %s3569 = scalar_select %p3568, %s21, 0
      %s3570 = sadd.s32 %s3569, %s3567
      %s3571 = scalar_lea.vmem %s3, %s3570
      %p3572 = scmp.lt.s32.totalorder %s20, 1
      %s3573 = scalar_select %p3572, %s20, 1
      %p3574 = scmp.lt.s32.totalorder %s21, 0
      %s3575 = scalar_select %p3574, %s21, 0
      %s3576 = sadd.s32 %s3575, %s3573
      %s3577 = scalar_lea.vmem %s4, %s3576
      // Predicated region
      $region29: #{double_conv.4} parent=27 // pred_check
        %p3578 = pneg %p97
      $region30: #{double_conv.4} parent=27 // pred_check_branch
        %3580 = sbr.rel (%p3578) target = $region32
      $region31: #{double_conv.4} parent=27 // pred_region
        %s3581 = smul.u32 16, %s21
      $region32: #{double_conv.4} parent=27 // pred_fallthru
        _
      // Predicated region
      $region33: #{double_conv.4} parent=27 // pred_check
        %p3582 = pneg %p125
      $region34: #{double_conv.4} parent=27 // pred_check_branch
        %3584 = sbr.rel (%p3582) target = $region36
      $region35: #{double_conv.4} parent=27 // pred_region
        _
      $region36: #{double_conv.4} parent=27 // pred_fallthru
        _
      // Predicated region
      $region37: #{double_conv.4} parent=27 // pred_check
        %p3585 = pneg %p153
      $region38: #{double_conv.4} parent=27 // pred_check_branch
        %3587 = sbr.rel (%p3585) target = $region40
      $region39: #{double_conv.4} parent=27 // pred_region
        _
      $region40: #{double_conv.4} parent=27 // pred_fallthru
        _
    $region28: #{double_conv.4} parent=5 // pred_fallthru
      _
    %p3588 = scmp.le.s32.totalorder 2, %s11
    // Predicated region
    $region41: #{double_conv.4} parent=5 // pred_check
      %p3589 = pneg %p3588
    $region42: #{double_conv.4} parent=5 // pred_check_branch
      %3591 = sbr.rel (%p3589) target = $region44
    $region43: #{double_conv.4} parent=5 // pred_region
      %s3592 = ssub.s32 %s11, 2
      // Predicated region
      $region45: #{double_conv.4} parent=43 // pred_check
        %p3593 = pneg %p103
      $region46: #{double_conv.4} parent=43 // pred_check_branch
        %3595 = sbr.rel (%p3593) target = $region48
      $region47: #{double_conv.4} parent=43 // pred_region
        %s3596 = smul.u32 16, %s23
        %p3597 = scmp.lt.s32.totalorder %s22, 1
        %s3598 = scalar_select %p3597, %s22, 1
        %p3599 = scmp.lt.s32.totalorder %s3596, 15
        %s3600 = scalar_select %p3599, %s3596, 15
        %s3601 = smul.addr %s3600, 2
        %s3602 = smul.addr %s3598, 32
        %s3603 = sadd.s32 %s3601, %s3602
        %s3604 = smul.addr %s3603, 8
        %s3605 = scalar_lea.vmem %s2, %s3604
      $region48: #{double_conv.4} parent=43 // pred_fallthru
        _
      // Predicated region
      $region49: #{double_conv.4} parent=43 // pred_check
        %p3606 = pneg %p131
      $region50: #{double_conv.4} parent=43 // pred_check_branch
        %3608 = sbr.rel (%p3606) target = $region52
      $region51: #{double_conv.4} parent=43 // pred_region
        %p3609 = scmp.lt.s32.totalorder %s22, 1
        %s3610 = scalar_select %p3609, %s22, 1
        %p3611 = scmp.lt.s32.totalorder %s23, 0
        %s3612 = scalar_select %p3611, %s23, 0
        %s3613 = sadd.s32 %s3612, %s3610
        %s3614 = scalar_lea.vmem %s3, %s3613
      $region52: #{double_conv.4} parent=43 // pred_fallthru
        _
      // Predicated region
      $region53: #{double_conv.4} parent=43 // pred_check
        %p3615 = pneg %p159
      $region54: #{double_conv.4} parent=43 // pred_check_branch
        %3617 = sbr.rel (%p3615) target = $region56
      $region55: #{double_conv.4} parent=43 // pred_region
        %p3618 = scmp.lt.s32.totalorder %s22, 1
        %s3619 = scalar_select %p3618, %s22, 1
        %p3620 = scmp.lt.s32.totalorder %s23, 0
        %s3621 = scalar_select %p3620, %s23, 0
        %s3622 = sadd.s32 %s3621, %s3619
        %s3623 = scalar_lea.vmem %s4, %s3622
      $region56: #{double_conv.4} parent=43 // pred_fallthru
        _
    $region44: #{double_conv.4} parent=5 // pred_fallthru
      _
  $region6: #{double_conv.4} parent=0 // loop_footer
    %s15 = sadd.s32 1, %s11
  $region7: #{double_conv.4} parent=0 // loop_footer_branch
    %10 = sbr.rel target = $region3
  $region8: #{double_conv.4} parent=0 // loop_exit
    _

</llo_original>
